<compile_context>
chip_gen: v5e
topology: v5e:2x2
jax: 0.10.0
libtpu: 0.0.40
codegen_flags: <defaults>
</compile_context>

<pallas_src>
import functools

import jax
import jax.numpy as jnp
from jax.experimental import pallas as pl
from jax.experimental.pallas import tpu as pltpu


# ----------------------------------------------------------------------------
# Glue helpers (tiny, plain JAX): parameter activations + reflect-pad filter
# operators shared by the whole batch for one AugLayer.
# ----------------------------------------------------------------------------
def _activation(p):
    return (jnp.tanh(p) + 1.0) * 0.5


def _gaussian_taps(ksize, sigma):
    xs = jnp.arange(ksize, dtype=jnp.float32) - (ksize // 2)
    g = jnp.exp(-(xs * xs) / (2.0 * sigma * sigma))
    return g / jnp.sum(g)


def _reflect_index(idx, n):
    idx = jnp.abs(idx)
    return jnp.where(idx > n - 1, 2 * (n - 1) - idx, idx)


def _conv_matrix(taps, n):
    """M such that (M @ v)[i] = sum_t taps[t] * v[reflect(i + t - P)] (reflect pad)."""
    k = taps.shape[0]
    p = (k - 1) // 2
    rows = jnp.arange(n, dtype=jnp.int32)[:, None]
    offs = jnp.arange(k, dtype=jnp.int32)[None, :] - p
    src = _reflect_index(rows + offs, n)                       # (n, k)
    m = jnp.zeros((n, n), dtype=jnp.float32)
    m = m.at[jnp.broadcast_to(rows, (n, k)), src].add(
        jnp.broadcast_to(taps.astype(jnp.float32)[None, :], (n, k)))
    return m


# ----------------------------------------------------------------------------
# Fused AugLayer kernel: one batch element per grid step, all 10 ops + the
# softmax-weighted combine + nan_to_num + clamp in a single pass over VMEM.
# ----------------------------------------------------------------------------
def _aug_layer_kernel(scal_ref, x_ref, gh_ref, gwt_ref, sh_ref, swt_ref, o_ref,
                      *, H, W):
    f32 = jnp.float32
    r = x_ref[0, 0].astype(f32)
    g = x_ref[0, 1].astype(f32)
    b = x_ref[0, 2].astype(f32)

    w = [scal_ref[0, i] for i in range(10)]      # softmax(arch / T), op order as OPS
    bright = scal_ref[0, 10]
    contrast = scal_ref[0, 11]
    hue_n = scal_ref[0, 12]                      # tanh(p)*pi / (2*pi)
    sat = scal_ref[0, 13]
    sol_th = scal_ref[0, 14]
    sharp = scal_ref[0, 15]

    gh, gwt = gh_ref[...], gwt_ref[...]          # 23-tap Gaussian operators
    sh, swt = sh_ref[...], swt_ref[...]          # 3-tap box operators (sharpness)

    # Shared per-image quantities (hoisted out of the channel loop).
    gray_k = 0.299 * r + 0.587 * g + 0.114 * b   # kornia grayscale (contrast/saturation)
    gray_m = 0.299 * r + 0.587 * g + 0.11 * b    # module _gray() uses 0.11 for blue
    mean_gray = jnp.sum(gray_k) * (1.0 / (H * W))

    # ---- Hue op: rgb -> hsv, shift, hsv -> rgb (computed once for all 3 chans) ----
    eps = 1e-8
    maxc = jnp.maximum(jnp.maximum(r, g), b)
    minc = jnp.minimum(jnp.minimum(r, g), b)
    delta = maxc - minc
    v = maxc
    s = delta / (maxc + eps)
    delta_safe = jnp.where(delta == 0.0, 1.0, delta)
    r_is_max = jnp.logical_and(r >= g, r >= b)
    g_is_max = jnp.logical_and(jnp.logical_not(r_is_max), g >= b)
    h_num = jnp.where(r_is_max, g - b,
            jnp.where(g_is_max, (b - r) + 2.0 * delta,
                                (r - g) + 4.0 * delta))
    hn = (h_num / delta_safe) * (1.0 / 6.0)
    hn = hn - jnp.floor(hn)                      # wrap to [0, 1)
    hn = hn + hue_n
    hn = hn - jnp.floor(hn)                      # wrap again after the shift
    h6 = hn * 6.0
    hi = jnp.minimum(jnp.floor(h6), 5.0)
    f = h6 - jnp.floor(h6)
    p_ = v * (1.0 - s)
    q_ = v * (1.0 - f * s)
    t_ = v * (1.0 - (1.0 - f) * s)

    def _pick(c0, c1, c2, c3, c4, c5):
        return jnp.where(hi == 0.0, c0,
               jnp.where(hi == 1.0, c1,
               jnp.where(hi == 2.0, c2,
               jnp.where(hi == 3.0, c3,
               jnp.where(hi == 4.0, c4, c5)))))

    hue_rgb = (_pick(v, q_, p_, p_, t_, v),
               _pick(t_, v, v, q_, p_, p_),
               _pick(p_, p_, t_, v, v, q_))

    def clamp01(z):
        return jnp.clip(z, 0.0, 1.0)

    chans = (r, g, b)
    inv13 = 1.0 / 13.0
    fmax = float(jnp.finfo(jnp.float32).max)
    for c in range(3):
        xc = chans[c]
        y_id = xc                                                        # None
        y_br = clamp01(xc * bright)                                      # Brightness
        y_ct = clamp01(xc * contrast + mean_gray * (1.0 - contrast))     # Contrast
        y_hu = clamp01(hue_rgb[c])                                       # Hue
        y_sa = clamp01(xc * sat + gray_k * (1.0 - sat))                  # Saturation
        y_so = clamp01(jnp.where(xc < sol_th, xc, 1.0 - xc))             # Solarize
        # GaussianBlur: separable 23-tap reflect-pad blur as two small MXU matmuls.
        y_gb = clamp01(jnp.dot(gh, jnp.dot(xc, gwt, preferred_element_type=jnp.float32),
                               preferred_element_type=jnp.float32))
        # Posterize (literal reference semantics -> 8-bit quantization).
        y_po = clamp01(jnp.floor(xc * 255.0) * (1.0 / 255.0))
        y_gy = gray_m                                                    # Gray
        # Sharpness: 3x3 kernel [[1,1,1],[1,5,1],[1,1,1]]/13 == (box3x3 + 4*x)/13.
        box = jnp.dot(sh, jnp.dot(xc, swt, preferred_element_type=jnp.float32),
                      preferred_element_type=jnp.float32)
        blur_s = (box + 4.0 * xc) * inv13
        y_sp = clamp01(blur_s + (1.0 - sharp) * (xc - blur_s))

        acc = (w[0] * y_id + w[1] * y_br + w[2] * y_ct + w[3] * y_hu +
               w[4] * y_sa + w[5] * y_so + w[6] * y_gb + w[7] * y_po +
               w[8] * y_gy + w[9] * y_sp)
        # torch.nan_to_num(x, nan=0, posinf=0, neginf=0) followed by clamp(0, 1).
        finite = jnp.logical_and(acc == acc, jnp.abs(acc) <= fmax)
        acc = jnp.where(finite, acc, 0.0)
        o_ref[0, c] = jnp.clip(acc, 0.0, 1.0).astype(o_ref.dtype)


# ----------------------------------------------------------------------------
# Wrappers
# ----------------------------------------------------------------------------
def aug_layer_forward(x, params, temperature):
    """Training-mode forward of one AugLayer as a single fused Pallas kernel."""
    B, C, H, W = x.shape
    if C != 3:
        raise ValueError("AugLayer ops (Gray/Hue/Saturation) require 3 channels")

    # --- scalar glue (AugLayer softmax + per-op parameter activations) ---
    w = jax.nn.softmax(params["arch"].astype(jnp.float32) / temperature)   # (10,)
    bright = _activation(params["brightness"])[0]
    contrast = _activation(params["contrast"])[0]
    hue_n = jnp.tanh(params["hue"])[0] * 0.5            # tanh(p)*pi / (2*pi)
    sat = _activation(params["saturation"])[0] * 2.0
    sol_th = _activation(params["solarize"])[0]
    sharp = _activation(params["sharpness"])[0]
    scalars = jnp.concatenate(
        [w, jnp.stack([bright, contrast, hue_n, sat, sol_th, sharp])]
    ).astype(jnp.float32).reshape(1, 16)

    # --- layer-shared reflect-pad separable filter operators (built ONCE per layer,
    #     identical for every batch element; folded into small (H,H)/(W,W) matmuls) ---
    sigma = jax.nn.relu(params["gaussian_blur"].astype(jnp.float32))       # (2,)
    gh = _conv_matrix(_gaussian_taps(23, sigma[0]), H)
    gwt = _conv_matrix(_gaussian_taps(23, sigma[1]), W).T
    box = jnp.ones((3,), jnp.float32)
    sh = _conv_matrix(box, H)
    swt = _conv_matrix(box, W).T

    kernel = functools.partial(_aug_layer_kernel, H=H, W=W)
    return pl.pallas_call(
        kernel,
        out_shape=jax.ShapeDtypeStruct((B, C, H, W), x.dtype),
        grid=(B,),
        in_specs=[
            pl.BlockSpec((1, 16), lambda b: (0, 0), memory_space=pltpu.SMEM),
            pl.BlockSpec((1, C, H, W), lambda b: (b, 0, 0, 0)),
            pl.BlockSpec((H, H), lambda b: (0, 0)),
            pl.BlockSpec((W, W), lambda b: (0, 0)),
            pl.BlockSpec((H, H), lambda b: (0, 0)),
            pl.BlockSpec((W, W), lambda b: (0, 0)),
        ],
        out_specs=pl.BlockSpec((1, C, H, W), lambda b: (b, 0, 0, 0)),
        compiler_params=pltpu.CompilerParams(
            dimension_semantics=("parallel",)),
    )(scalars, x, gh, gwt, sh, swt)


def aug_policy_forward(x, layer_params, temperature=0.5):
    """AugPolicy.forward (training): sequential AugLayers."""
    for lp in layer_params:
        x = aug_layer_forward(x, lp, temperature)
    return x


def init_layer_params(key):
    """Mirrors the torch.rand parameter initialisation of one AugLayer."""
    ks = jax.random.split(key, 9)
    rand = lambda k, n: jax.random.uniform(k, (n,), dtype=jnp.float32)
    return {
        "arch": rand(ks[0], 10),          # AugLayer.p
        "brightness": rand(ks[1], 1),
        "contrast": rand(ks[2], 1),
        "hue": rand(ks[3], 1),
        "saturation": rand(ks[4], 1),
        "solarize": rand(ks[5], 1),
        "gaussian_blur": rand(ks[6], 2),
        "posterize": rand(ks[7], 1),      # unused in forward (identity round-trip)
        "sharpness": rand(ks[8], 1),
    }


if __name__ == "__main__":
    key = jax.random.PRNGKey(0)
    B, C, H, W = 2, 3, 16, 16        # module requires 3 (RGB) channels
    NUM_LAYERS = 2                   # AugPolicy(layers=N); kept small for the demo
    TEMPERATURE = 0.5

    k_x, k_p = jax.random.split(key)
    x = jax.random.uniform(k_x, (B, C, H, W), dtype=jnp.float32)
    layer_keys = jax.random.split(k_p, NUM_LAYERS)
    policy_params = [init_layer_params(k) for k in layer_keys]

    forward = jax.jit(functools.partial(aug_policy_forward, temperature=TEMPERATURE))
    out = forward(x, policy_params)
    out = jax.block_until_ready(out)

    assert out.shape == (B, C, H, W)
    assert bool(jnp.all((out >= 0.0) & (out <= 1.0)))

    # Sanity: a layer whose architecture weights collapse onto IdentityLayer
    # must return its (already in-[0,1]) input unchanged.
    id_params = dict(policy_params[0],
                     arch=jnp.array([50.0] + [0.0] * 9, dtype=jnp.float32))
    y_id = jax.block_until_ready(aug_layer_forward(x, id_params, TEMPERATURE))
    assert float(jnp.max(jnp.abs(y_id - x))) < 1e-5

    print("KERNEL_OK")
</pallas_src>

<mosaic_0001>
module attributes {stable_mosaic.version = 11 : i64} {
  func.func @_aug_layer_kernel(%arg0: i32, %arg1: memref<1x16xf32, #tpu.memory_space<smem>>, %arg2: memref<1x3x16x16xf32, #tpu.memory_space<vmem>>, %arg3: memref<16x16xf32, #tpu.memory_space<vmem>>, %arg4: memref<16x16xf32, #tpu.memory_space<vmem>>, %arg5: memref<16x16xf32, #tpu.memory_space<vmem>>, %arg6: memref<16x16xf32, #tpu.memory_space<vmem>>, %arg7: memref<1x3x16x16xf32, #tpu.memory_space<vmem>>) attributes {dimension_semantics = [#tpu.dimension_semantics<parallel>], iteration_bounds = array<i64: 2>, scalar_prefetch = 0 : i64, scratch_operands = 0 : i64, tpu.core_type = #tpu.core_type<tc>, window_params = [{transform_indices = @transform_0, window_bounds = array<i64: 1, 16>}, {transform_indices = @transform_1, window_bounds = array<i64: 1, 3, 16, 16>}, {pipeline_mode = #tpu.pipeline_mode<synchronous>, transform_indices = @transform_2, window_bounds = array<i64: 16, 16>}, {pipeline_mode = #tpu.pipeline_mode<synchronous>, transform_indices = @transform_3, window_bounds = array<i64: 16, 16>}, {pipeline_mode = #tpu.pipeline_mode<synchronous>, transform_indices = @transform_4, window_bounds = array<i64: 16, 16>}, {pipeline_mode = #tpu.pipeline_mode<synchronous>, transform_indices = @transform_5, window_bounds = array<i64: 16, 16>}, {transform_indices = @transform_6, window_bounds = array<i64: 1, 3, 16, 16>}]} {
    %c0 = arith.constant 0 : index
    %c0_0 = arith.constant 0 : index
    %c0_1 = arith.constant 0 : index
    %c0_2 = arith.constant 0 : index
    %0 = vector.load %arg2[%c0, %c0_0, %c0_1, %c0_2] : memref<1x3x16x16xf32, #tpu.memory_space<vmem>>, vector<1x1x16x16xf32>
    %1 = vector.shape_cast %0 : vector<1x1x16x16xf32> to vector<16x16xf32>
    %c0_3 = arith.constant 0 : index
    %c1 = arith.constant 1 : index
    %c0_4 = arith.constant 0 : index
    %c0_5 = arith.constant 0 : index
    %2 = vector.load %arg2[%c0_3, %c1, %c0_4, %c0_5] : memref<1x3x16x16xf32, #tpu.memory_space<vmem>>, vector<1x1x16x16xf32>
    %3 = vector.shape_cast %2 : vector<1x1x16x16xf32> to vector<16x16xf32>
    %c0_6 = arith.constant 0 : index
    %c2 = arith.constant 2 : index
    %c0_7 = arith.constant 0 : index
    %c0_8 = arith.constant 0 : index
    %4 = vector.load %arg2[%c0_6, %c2, %c0_7, %c0_8] : memref<1x3x16x16xf32, #tpu.memory_space<vmem>>, vector<1x1x16x16xf32>
    %5 = vector.shape_cast %4 : vector<1x1x16x16xf32> to vector<16x16xf32>
    %c0_9 = arith.constant 0 : index
    %c0_10 = arith.constant 0 : index
    %6 = memref.load %arg1[%c0_9, %c0_10] : memref<1x16xf32, #tpu.memory_space<smem>>
    %c0_11 = arith.constant 0 : index
    %c1_12 = arith.constant 1 : index
    %7 = memref.load %arg1[%c0_11, %c1_12] : memref<1x16xf32, #tpu.memory_space<smem>>
    %c0_13 = arith.constant 0 : index
    %c2_14 = arith.constant 2 : index
    %8 = memref.load %arg1[%c0_13, %c2_14] : memref<1x16xf32, #tpu.memory_space<smem>>
    %c0_15 = arith.constant 0 : index
    %c3 = arith.constant 3 : index
    %9 = memref.load %arg1[%c0_15, %c3] : memref<1x16xf32, #tpu.memory_space<smem>>
    %c0_16 = arith.constant 0 : index
    %c4 = arith.constant 4 : index
    %10 = memref.load %arg1[%c0_16, %c4] : memref<1x16xf32, #tpu.memory_space<smem>>
    %c0_17 = arith.constant 0 : index
    %c5 = arith.constant 5 : index
    %11 = memref.load %arg1[%c0_17, %c5] : memref<1x16xf32, #tpu.memory_space<smem>>
    %c0_18 = arith.constant 0 : index
    %c6 = arith.constant 6 : index
    %12 = memref.load %arg1[%c0_18, %c6] : memref<1x16xf32, #tpu.memory_space<smem>>
    %c0_19 = arith.constant 0 : index
    %c7 = arith.constant 7 : index
    %13 = memref.load %arg1[%c0_19, %c7] : memref<1x16xf32, #tpu.memory_space<smem>>
    %c0_20 = arith.constant 0 : index
    %c8 = arith.constant 8 : index
    %14 = memref.load %arg1[%c0_20, %c8] : memref<1x16xf32, #tpu.memory_space<smem>>
    %c0_21 = arith.constant 0 : index
    %c9 = arith.constant 9 : index
    %15 = memref.load %arg1[%c0_21, %c9] : memref<1x16xf32, #tpu.memory_space<smem>>
    %c0_22 = arith.constant 0 : index
    %c10 = arith.constant 10 : index
    %16 = memref.load %arg1[%c0_22, %c10] : memref<1x16xf32, #tpu.memory_space<smem>>
    %c0_23 = arith.constant 0 : index
    %c11 = arith.constant 11 : index
    %17 = memref.load %arg1[%c0_23, %c11] : memref<1x16xf32, #tpu.memory_space<smem>>
    %c0_24 = arith.constant 0 : index
    %c12 = arith.constant 12 : index
    %18 = memref.load %arg1[%c0_24, %c12] : memref<1x16xf32, #tpu.memory_space<smem>>
    %c0_25 = arith.constant 0 : index
    %c13 = arith.constant 13 : index
    %19 = memref.load %arg1[%c0_25, %c13] : memref<1x16xf32, #tpu.memory_space<smem>>
    %c0_26 = arith.constant 0 : index
    %c14 = arith.constant 14 : index
    %20 = memref.load %arg1[%c0_26, %c14] : memref<1x16xf32, #tpu.memory_space<smem>>
    %c0_27 = arith.constant 0 : index
    %c15 = arith.constant 15 : index
    %21 = memref.load %arg1[%c0_27, %c15] : memref<1x16xf32, #tpu.memory_space<smem>>
    %c0_28 = arith.constant 0 : index
    %c0_29 = arith.constant 0 : index
    %22 = vector.load %arg3[%c0_28, %c0_29] : memref<16x16xf32, #tpu.memory_space<vmem>>, vector<16x16xf32>
    %c0_30 = arith.constant 0 : index
    %c0_31 = arith.constant 0 : index
    %23 = vector.load %arg4[%c0_30, %c0_31] : memref<16x16xf32, #tpu.memory_space<vmem>>, vector<16x16xf32>
    %c0_32 = arith.constant 0 : index
    %c0_33 = arith.constant 0 : index
    %24 = vector.load %arg5[%c0_32, %c0_33] : memref<16x16xf32, #tpu.memory_space<vmem>>, vector<16x16xf32>
    %c0_34 = arith.constant 0 : index
    %c0_35 = arith.constant 0 : index
    %25 = vector.load %arg6[%c0_34, %c0_35] : memref<16x16xf32, #tpu.memory_space<vmem>>, vector<16x16xf32>
    %cst = arith.constant 2.990000e-01 : f32
    %26 = vector.broadcast %cst : f32 to vector<16x16xf32>
    %27 = arith.mulf %26, %1 : vector<16x16xf32>
    %cst_36 = arith.constant 5.870000e-01 : f32
    %28 = vector.broadcast %cst_36 : f32 to vector<16x16xf32>
    %29 = arith.mulf %28, %3 : vector<16x16xf32>
    %30 = arith.addf %27, %29 : vector<16x16xf32>
    %cst_37 = arith.constant 1.140000e-01 : f32
    %31 = vector.broadcast %cst_37 : f32 to vector<16x16xf32>
    %32 = arith.mulf %31, %5 : vector<16x16xf32>
    %33 = arith.addf %30, %32 : vector<16x16xf32>
    %cst_38 = arith.constant 2.990000e-01 : f32
    %34 = vector.broadcast %cst_38 : f32 to vector<16x16xf32>
    %35 = arith.mulf %34, %1 : vector<16x16xf32>
    %cst_39 = arith.constant 5.870000e-01 : f32
    %36 = vector.broadcast %cst_39 : f32 to vector<16x16xf32>
    %37 = arith.mulf %36, %3 : vector<16x16xf32>
    %38 = arith.addf %35, %37 : vector<16x16xf32>
    %cst_40 = arith.constant 1.100000e-01 : f32
    %39 = vector.broadcast %cst_40 : f32 to vector<16x16xf32>
    %40 = arith.mulf %39, %5 : vector<16x16xf32>
    %41 = arith.addf %38, %40 : vector<16x16xf32>
    %42 = vector.shape_cast %33 : vector<16x16xf32> to vector<1x16x16xf32>
    %cst_41 = arith.constant dense<0.000000e+00> : vector<1xf32>
    %43 = vector.multi_reduction <add>, %42, %cst_41 [1, 2] : vector<1x16x16xf32> to vector<1xf32>
    %44 = vector.shape_cast %43 : vector<1xf32> to vector<1x1x1xf32>
    %45 = vector.extract %44[0, 0, 0] : f32 from vector<1x1x1xf32>
    %cst_42 = arith.constant 3.906250e-03 : f32
    %46 = arith.mulf %45, %cst_42 : f32
    %47 = arith.maximumf %1, %3 : vector<16x16xf32>
    %48 = arith.maximumf %47, %5 : vector<16x16xf32>
    %49 = arith.minimumf %1, %3 : vector<16x16xf32>
    %50 = arith.minimumf %49, %5 : vector<16x16xf32>
    %51 = arith.subf %48, %50 : vector<16x16xf32>
    %cst_43 = arith.constant 9.99999993E-9 : f32
    %52 = vector.broadcast %cst_43 : f32 to vector<16x16xf32>
    %53 = arith.addf %48, %52 : vector<16x16xf32>
    %54 = arith.divf %51, %53 : vector<16x16xf32>
    %cst_44 = arith.constant 0.000000e+00 : f32
    %55 = vector.broadcast %cst_44 : f32 to vector<16x16xf32>
    %56 = arith.cmpf oeq, %51, %55 : vector<16x16xf32>
    %cst_45 = arith.constant 1.000000e+00 : f32
    %57 = vector.broadcast %cst_45 : f32 to vector<16x16xf32>
    %58 = arith.select %56, %57, %51 : vector<16x16xi1>, vector<16x16xf32>
    %59 = arith.cmpf oge, %1, %3 : vector<16x16xf32>
    %60 = arith.cmpf oge, %1, %5 : vector<16x16xf32>
    %61 = arith.andi %59, %60 : vector<16x16xi1>
    %cst_46 = arith.constant dense<true> : vector<16x16xi1>
    %62 = arith.xori %61, %cst_46 : vector<16x16xi1>
    %63 = arith.cmpf oge, %3, %5 : vector<16x16xf32>
    %64 = arith.andi %62, %63 : vector<16x16xi1>
    %65 = arith.subf %3, %5 : vector<16x16xf32>
    %66 = arith.subf %5, %1 : vector<16x16xf32>
    %cst_47 = arith.constant 2.000000e+00 : f32
    %67 = vector.broadcast %cst_47 : f32 to vector<16x16xf32>
    %68 = arith.mulf %67, %51 : vector<16x16xf32>
    %69 = arith.addf %66, %68 : vector<16x16xf32>
    %70 = arith.subf %1, %3 : vector<16x16xf32>
    %cst_48 = arith.constant 4.000000e+00 : f32
    %71 = vector.broadcast %cst_48 : f32 to vector<16x16xf32>
    %72 = arith.mulf %71, %51 : vector<16x16xf32>
    %73 = arith.addf %70, %72 : vector<16x16xf32>
    %74 = arith.select %64, %69, %73 : vector<16x16xi1>, vector<16x16xf32>
    %75 = arith.select %61, %65, %74 : vector<16x16xi1>, vector<16x16xf32>
    %76 = arith.divf %75, %58 : vector<16x16xf32>
    %cst_49 = arith.constant 0.166666672 : f32
    %77 = vector.broadcast %cst_49 : f32 to vector<16x16xf32>
    %78 = arith.mulf %76, %77 : vector<16x16xf32>
    %79 = math.floor %78 : vector<16x16xf32>
    %80 = arith.subf %78, %79 : vector<16x16xf32>
    %81 = vector.broadcast %18 : f32 to vector<16x16xf32>
    %82 = arith.addf %80, %81 : vector<16x16xf32>
    %83 = math.floor %82 : vector<16x16xf32>
    %84 = arith.subf %82, %83 : vector<16x16xf32>
    %cst_50 = arith.constant 6.000000e+00 : f32
    %85 = vector.broadcast %cst_50 : f32 to vector<16x16xf32>
    %86 = arith.mulf %84, %85 : vector<16x16xf32>
    %87 = math.floor %86 : vector<16x16xf32>
    %cst_51 = arith.constant 5.000000e+00 : f32
    %88 = vector.broadcast %cst_51 : f32 to vector<16x16xf32>
    %89 = arith.minimumf %87, %88 : vector<16x16xf32>
    %90 = math.floor %86 : vector<16x16xf32>
    %91 = arith.subf %86, %90 : vector<16x16xf32>
    %cst_52 = arith.constant 1.000000e+00 : f32
    %92 = vector.broadcast %cst_52 : f32 to vector<16x16xf32>
    %93 = arith.subf %92, %54 : vector<16x16xf32>
    %94 = arith.mulf %48, %93 : vector<16x16xf32>
    %95 = arith.mulf %91, %54 : vector<16x16xf32>
    %cst_53 = arith.constant 1.000000e+00 : f32
    %96 = vector.broadcast %cst_53 : f32 to vector<16x16xf32>
    %97 = arith.subf %96, %95 : vector<16x16xf32>
    %98 = arith.mulf %48, %97 : vector<16x16xf32>
    %cst_54 = arith.constant 1.000000e+00 : f32
    %99 = vector.broadcast %cst_54 : f32 to vector<16x16xf32>
    %100 = arith.subf %99, %91 : vector<16x16xf32>
    %101 = arith.mulf %100, %54 : vector<16x16xf32>
    %cst_55 = arith.constant 1.000000e+00 : f32
    %102 = vector.broadcast %cst_55 : f32 to vector<16x16xf32>
    %103 = arith.subf %102, %101 : vector<16x16xf32>
    %104 = arith.mulf %48, %103 : vector<16x16xf32>
    %cst_56 = arith.constant 0.000000e+00 : f32
    %105 = vector.broadcast %cst_56 : f32 to vector<16x16xf32>
    %106 = arith.cmpf oeq, %89, %105 : vector<16x16xf32>
    %cst_57 = arith.constant 1.000000e+00 : f32
    %107 = vector.broadcast %cst_57 : f32 to vector<16x16xf32>
    %108 = arith.cmpf oeq, %89, %107 : vector<16x16xf32>
    %cst_58 = arith.constant 2.000000e+00 : f32
    %109 = vector.broadcast %cst_58 : f32 to vector<16x16xf32>
    %110 = arith.cmpf oeq, %89, %109 : vector<16x16xf32>
    %cst_59 = arith.constant 3.000000e+00 : f32
    %111 = vector.broadcast %cst_59 : f32 to vector<16x16xf32>
    %112 = arith.cmpf oeq, %89, %111 : vector<16x16xf32>
    %cst_60 = arith.constant 4.000000e+00 : f32
    %113 = vector.broadcast %cst_60 : f32 to vector<16x16xf32>
    %114 = arith.cmpf oeq, %89, %113 : vector<16x16xf32>
    %115 = arith.select %114, %104, %48 : vector<16x16xi1>, vector<16x16xf32>
    %116 = arith.select %112, %94, %115 : vector<16x16xi1>, vector<16x16xf32>
    %117 = arith.select %110, %94, %116 : vector<16x16xi1>, vector<16x16xf32>
    %118 = arith.select %108, %98, %117 : vector<16x16xi1>, vector<16x16xf32>
    %119 = arith.select %106, %48, %118 : vector<16x16xi1>, vector<16x16xf32>
    %cst_61 = arith.constant 0.000000e+00 : f32
    %120 = vector.broadcast %cst_61 : f32 to vector<16x16xf32>
    %121 = arith.cmpf oeq, %89, %120 : vector<16x16xf32>
    %cst_62 = arith.constant 1.000000e+00 : f32
    %122 = vector.broadcast %cst_62 : f32 to vector<16x16xf32>
    %123 = arith.cmpf oeq, %89, %122 : vector<16x16xf32>
    %cst_63 = arith.constant 2.000000e+00 : f32
    %124 = vector.broadcast %cst_63 : f32 to vector<16x16xf32>
    %125 = arith.cmpf oeq, %89, %124 : vector<16x16xf32>
    %cst_64 = arith.constant 3.000000e+00 : f32
    %126 = vector.broadcast %cst_64 : f32 to vector<16x16xf32>
    %127 = arith.cmpf oeq, %89, %126 : vector<16x16xf32>
    %cst_65 = arith.constant 4.000000e+00 : f32
    %128 = vector.broadcast %cst_65 : f32 to vector<16x16xf32>
    %129 = arith.cmpf oeq, %89, %128 : vector<16x16xf32>
    %130 = arith.select %129, %94, %94 : vector<16x16xi1>, vector<16x16xf32>
    %131 = arith.select %127, %98, %130 : vector<16x16xi1>, vector<16x16xf32>
    %132 = arith.select %125, %48, %131 : vector<16x16xi1>, vector<16x16xf32>
    %133 = arith.select %123, %48, %132 : vector<16x16xi1>, vector<16x16xf32>
    %134 = arith.select %121, %104, %133 : vector<16x16xi1>, vector<16x16xf32>
    %cst_66 = arith.constant 0.000000e+00 : f32
    %135 = vector.broadcast %cst_66 : f32 to vector<16x16xf32>
    %136 = arith.cmpf oeq, %89, %135 : vector<16x16xf32>
    %cst_67 = arith.constant 1.000000e+00 : f32
    %137 = vector.broadcast %cst_67 : f32 to vector<16x16xf32>
    %138 = arith.cmpf oeq, %89, %137 : vector<16x16xf32>
    %cst_68 = arith.constant 2.000000e+00 : f32
    %139 = vector.broadcast %cst_68 : f32 to vector<16x16xf32>
    %140 = arith.cmpf oeq, %89, %139 : vector<16x16xf32>
    %cst_69 = arith.constant 3.000000e+00 : f32
    %141 = vector.broadcast %cst_69 : f32 to vector<16x16xf32>
    %142 = arith.cmpf oeq, %89, %141 : vector<16x16xf32>
    %cst_70 = arith.constant 4.000000e+00 : f32
    %143 = vector.broadcast %cst_70 : f32 to vector<16x16xf32>
    %144 = arith.cmpf oeq, %89, %143 : vector<16x16xf32>
    %145 = arith.select %144, %48, %98 : vector<16x16xi1>, vector<16x16xf32>
    %146 = arith.select %142, %48, %145 : vector<16x16xi1>, vector<16x16xf32>
    %147 = arith.select %140, %104, %146 : vector<16x16xi1>, vector<16x16xf32>
    %148 = arith.select %138, %94, %147 : vector<16x16xi1>, vector<16x16xf32>
    %149 = arith.select %136, %94, %148 : vector<16x16xi1>, vector<16x16xf32>
    %150 = vector.broadcast %16 : f32 to vector<16x16xf32>
    %151 = arith.mulf %1, %150 : vector<16x16xf32>
    %cst_71 = arith.constant 0.000000e+00 : f32
    %cst_72 = arith.constant 1.000000e+00 : f32
    %152 = vector.broadcast %cst_71 : f32 to vector<16x16xf32>
    %153 = arith.maximumf %152, %151 : vector<16x16xf32>
    %154 = vector.broadcast %cst_72 : f32 to vector<16x16xf32>
    %155 = arith.minimumf %154, %153 : vector<16x16xf32>
    %156 = vector.broadcast %17 : f32 to vector<16x16xf32>
    %157 = arith.mulf %1, %156 : vector<16x16xf32>
    %cst_73 = arith.constant 1.000000e+00 : f32
    %158 = arith.subf %cst_73, %17 : f32
    %159 = arith.mulf %46, %158 : f32
    %160 = vector.broadcast %159 : f32 to vector<16x16xf32>
    %161 = arith.addf %157, %160 : vector<16x16xf32>
    %cst_74 = arith.constant 0.000000e+00 : f32
    %cst_75 = arith.constant 1.000000e+00 : f32
    %162 = vector.broadcast %cst_74 : f32 to vector<16x16xf32>
    %163 = arith.maximumf %162, %161 : vector<16x16xf32>
    %164 = vector.broadcast %cst_75 : f32 to vector<16x16xf32>
    %165 = arith.minimumf %164, %163 : vector<16x16xf32>
    %cst_76 = arith.constant 0.000000e+00 : f32
    %cst_77 = arith.constant 1.000000e+00 : f32
    %166 = vector.broadcast %cst_76 : f32 to vector<16x16xf32>
    %167 = arith.maximumf %166, %119 : vector<16x16xf32>
    %168 = vector.broadcast %cst_77 : f32 to vector<16x16xf32>
    %169 = arith.minimumf %168, %167 : vector<16x16xf32>
    %170 = vector.broadcast %19 : f32 to vector<16x16xf32>
    %171 = arith.mulf %1, %170 : vector<16x16xf32>
    %cst_78 = arith.constant 1.000000e+00 : f32
    %172 = arith.subf %cst_78, %19 : f32
    %173 = vector.broadcast %172 : f32 to vector<16x16xf32>
    %174 = arith.mulf %33, %173 : vector<16x16xf32>
    %175 = arith.addf %171, %174 : vector<16x16xf32>
    %cst_79 = arith.constant 0.000000e+00 : f32
    %cst_80 = arith.constant 1.000000e+00 : f32
    %176 = vector.broadcast %cst_79 : f32 to vector<16x16xf32>
    %177 = arith.maximumf %176, %175 : vector<16x16xf32>
    %178 = vector.broadcast %cst_80 : f32 to vector<16x16xf32>
    %179 = arith.minimumf %178, %177 : vector<16x16xf32>
    %180 = vector.broadcast %20 : f32 to vector<16x16xf32>
    %181 = arith.cmpf olt, %1, %180 : vector<16x16xf32>
    %cst_81 = arith.constant 1.000000e+00 : f32
    %182 = vector.broadcast %cst_81 : f32 to vector<16x16xf32>
    %183 = arith.subf %182, %1 : vector<16x16xf32>
    %184 = arith.select %181, %1, %183 : vector<16x16xi1>, vector<16x16xf32>
    %cst_82 = arith.constant 0.000000e+00 : f32
    %cst_83 = arith.constant 1.000000e+00 : f32
    %185 = vector.broadcast %cst_82 : f32 to vector<16x16xf32>
    %186 = arith.maximumf %185, %184 : vector<16x16xf32>
    %187 = vector.broadcast %cst_83 : f32 to vector<16x16xf32>
    %188 = arith.minimumf %187, %186 : vector<16x16xf32>
    %cst_84 = arith.constant dense<0.000000e+00> : vector<16x16xf32>
    %189 = tpu.matmul %1, %23, %cst_84 {dimension_numbers = #tpu.dot_dimension_numbers<[1], [0], [0], [1], [0, 0, 1, 1], [], []>} : vector<16x16xf32>, vector<16x16xf32>, vector<16x16xf32> -> vector<16x16xf32>
    %cst_85 = arith.constant dense<0.000000e+00> : vector<16x16xf32>
    %190 = tpu.matmul %22, %189, %cst_85 {dimension_numbers = #tpu.dot_dimension_numbers<[1], [0], [0], [1], [0, 0, 1, 1], [], []>} : vector<16x16xf32>, vector<16x16xf32>, vector<16x16xf32> -> vector<16x16xf32>
    %cst_86 = arith.constant 0.000000e+00 : f32
    %cst_87 = arith.constant 1.000000e+00 : f32
    %191 = vector.broadcast %cst_86 : f32 to vector<16x16xf32>
    %192 = arith.maximumf %191, %190 : vector<16x16xf32>
    %193 = vector.broadcast %cst_87 : f32 to vector<16x16xf32>
    %194 = arith.minimumf %193, %192 : vector<16x16xf32>
    %cst_88 = arith.constant 2.550000e+02 : f32
    %195 = vector.broadcast %cst_88 : f32 to vector<16x16xf32>
    %196 = arith.mulf %1, %195 : vector<16x16xf32>
    %197 = math.floor %196 : vector<16x16xf32>
    %cst_89 = arith.constant 0.00392156886 : f32
    %198 = vector.broadcast %cst_89 : f32 to vector<16x16xf32>
    %199 = arith.mulf %197, %198 : vector<16x16xf32>
    %cst_90 = arith.constant 0.000000e+00 : f32
    %cst_91 = arith.constant 1.000000e+00 : f32
    %200 = vector.broadcast %cst_90 : f32 to vector<16x16xf32>
    %201 = arith.maximumf %200, %199 : vector<16x16xf32>
    %202 = vector.broadcast %cst_91 : f32 to vector<16x16xf32>
    %203 = arith.minimumf %202, %201 : vector<16x16xf32>
    %cst_92 = arith.constant dense<0.000000e+00> : vector<16x16xf32>
    %204 = tpu.matmul %1, %25, %cst_92 {dimension_numbers = #tpu.dot_dimension_numbers<[1], [0], [0], [1], [0, 0, 1, 1], [], []>} : vector<16x16xf32>, vector<16x16xf32>, vector<16x16xf32> -> vector<16x16xf32>
    %cst_93 = arith.constant dense<0.000000e+00> : vector<16x16xf32>
    %205 = tpu.matmul %24, %204, %cst_93 {dimension_numbers = #tpu.dot_dimension_numbers<[1], [0], [0], [1], [0, 0, 1, 1], [], []>} : vector<16x16xf32>, vector<16x16xf32>, vector<16x16xf32> -> vector<16x16xf32>
    %cst_94 = arith.constant 4.000000e+00 : f32
    %206 = vector.broadcast %cst_94 : f32 to vector<16x16xf32>
    %207 = arith.mulf %206, %1 : vector<16x16xf32>
    %208 = arith.addf %205, %207 : vector<16x16xf32>
    %cst_95 = arith.constant 0.0769230798 : f32
    %209 = vector.broadcast %cst_95 : f32 to vector<16x16xf32>
    %210 = arith.mulf %208, %209 : vector<16x16xf32>
    %cst_96 = arith.constant 1.000000e+00 : f32
    %211 = arith.subf %cst_96, %21 : f32
    %212 = arith.subf %1, %210 : vector<16x16xf32>
    %213 = vector.broadcast %211 : f32 to vector<16x16xf32>
    %214 = arith.mulf %213, %212 : vector<16x16xf32>
    %215 = arith.addf %210, %214 : vector<16x16xf32>
    %cst_97 = arith.constant 0.000000e+00 : f32
    %cst_98 = arith.constant 1.000000e+00 : f32
    %216 = vector.broadcast %cst_97 : f32 to vector<16x16xf32>
    %217 = arith.maximumf %216, %215 : vector<16x16xf32>
    %218 = vector.broadcast %cst_98 : f32 to vector<16x16xf32>
    %219 = arith.minimumf %218, %217 : vector<16x16xf32>
    %220 = vector.broadcast %6 : f32 to vector<16x16xf32>
    %221 = arith.mulf %220, %1 : vector<16x16xf32>
    %222 = vector.broadcast %7 : f32 to vector<16x16xf32>
    %223 = arith.mulf %222, %155 : vector<16x16xf32>
    %224 = arith.addf %221, %223 : vector<16x16xf32>
    %225 = vector.broadcast %8 : f32 to vector<16x16xf32>
    %226 = arith.mulf %225, %165 : vector<16x16xf32>
    %227 = arith.addf %224, %226 : vector<16x16xf32>
    %228 = vector.broadcast %9 : f32 to vector<16x16xf32>
    %229 = arith.mulf %228, %169 : vector<16x16xf32>
    %230 = arith.addf %227, %229 : vector<16x16xf32>
    %231 = vector.broadcast %10 : f32 to vector<16x16xf32>
    %232 = arith.mulf %231, %179 : vector<16x16xf32>
    %233 = arith.addf %230, %232 : vector<16x16xf32>
    %234 = vector.broadcast %11 : f32 to vector<16x16xf32>
    %235 = arith.mulf %234, %188 : vector<16x16xf32>
    %236 = arith.addf %233, %235 : vector<16x16xf32>
    %237 = vector.broadcast %12 : f32 to vector<16x16xf32>
    %238 = arith.mulf %237, %194 : vector<16x16xf32>
    %239 = arith.addf %236, %238 : vector<16x16xf32>
    %240 = vector.broadcast %13 : f32 to vector<16x16xf32>
    %241 = arith.mulf %240, %203 : vector<16x16xf32>
    %242 = arith.addf %239, %241 : vector<16x16xf32>
    %243 = vector.broadcast %14 : f32 to vector<16x16xf32>
    %244 = arith.mulf %243, %41 : vector<16x16xf32>
    %245 = arith.addf %242, %244 : vector<16x16xf32>
    %246 = vector.broadcast %15 : f32 to vector<16x16xf32>
    %247 = arith.mulf %246, %219 : vector<16x16xf32>
    %248 = arith.addf %245, %247 : vector<16x16xf32>
    %249 = arith.cmpf oeq, %248, %248 : vector<16x16xf32>
    %250 = math.absf %248 : vector<16x16xf32>
    %cst_99 = arith.constant 3.40282347E+38 : f32
    %251 = vector.broadcast %cst_99 : f32 to vector<16x16xf32>
    %252 = arith.cmpf ole, %250, %251 : vector<16x16xf32>
    %253 = arith.andi %249, %252 : vector<16x16xi1>
    %cst_100 = arith.constant 0.000000e+00 : f32
    %254 = vector.broadcast %cst_100 : f32 to vector<16x16xf32>
    %255 = arith.select %253, %248, %254 : vector<16x16xi1>, vector<16x16xf32>
    %cst_101 = arith.constant 0.000000e+00 : f32
    %cst_102 = arith.constant 1.000000e+00 : f32
    %256 = vector.broadcast %cst_101 : f32 to vector<16x16xf32>
    %257 = arith.maximumf %256, %255 : vector<16x16xf32>
    %258 = vector.broadcast %cst_102 : f32 to vector<16x16xf32>
    %259 = arith.minimumf %258, %257 : vector<16x16xf32>
    %c0_103 = arith.constant 0 : index
    %c0_104 = arith.constant 0 : index
    %c0_105 = arith.constant 0 : index
    %c0_106 = arith.constant 0 : index
    %260 = vector.load %arg7[%c0_103, %c0_104, %c0_105, %c0_106] : memref<1x3x16x16xf32, #tpu.memory_space<vmem>>, vector<1x1x16x16xf32>
    %261 = vector.shape_cast %260 : vector<1x1x16x16xf32> to vector<16x16xf32>
    %262 = vector.shape_cast %259 : vector<16x16xf32> to vector<1x1x16x16xf32>
    tpu.vector_store %arg7[%c0_103, %c0_104, %c0_105, %c0_106], %262 {strides = array<i32>} : memref<1x3x16x16xf32, #tpu.memory_space<vmem>>, vector<1x1x16x16xf32>,
    %263 = vector.broadcast %16 : f32 to vector<16x16xf32>
    %264 = arith.mulf %3, %263 : vector<16x16xf32>
    %cst_107 = arith.constant 0.000000e+00 : f32
    %cst_108 = arith.constant 1.000000e+00 : f32
    %265 = vector.broadcast %cst_107 : f32 to vector<16x16xf32>
    %266 = arith.maximumf %265, %264 : vector<16x16xf32>
    %267 = vector.broadcast %cst_108 : f32 to vector<16x16xf32>
    %268 = arith.minimumf %267, %266 : vector<16x16xf32>
    %269 = vector.broadcast %17 : f32 to vector<16x16xf32>
    %270 = arith.mulf %3, %269 : vector<16x16xf32>
    %cst_109 = arith.constant 1.000000e+00 : f32
    %271 = arith.subf %cst_109, %17 : f32
    %272 = arith.mulf %46, %271 : f32
    %273 = vector.broadcast %272 : f32 to vector<16x16xf32>
    %274 = arith.addf %270, %273 : vector<16x16xf32>
    %cst_110 = arith.constant 0.000000e+00 : f32
    %cst_111 = arith.constant 1.000000e+00 : f32
    %275 = vector.broadcast %cst_110 : f32 to vector<16x16xf32>
    %276 = arith.maximumf %275, %274 : vector<16x16xf32>
    %277 = vector.broadcast %cst_111 : f32 to vector<16x16xf32>
    %278 = arith.minimumf %277, %276 : vector<16x16xf32>
    %cst_112 = arith.constant 0.000000e+00 : f32
    %cst_113 = arith.constant 1.000000e+00 : f32
    %279 = vector.broadcast %cst_112 : f32 to vector<16x16xf32>
    %280 = arith.maximumf %279, %134 : vector<16x16xf32>
    %281 = vector.broadcast %cst_113 : f32 to vector<16x16xf32>
    %282 = arith.minimumf %281, %280 : vector<16x16xf32>
    %283 = vector.broadcast %19 : f32 to vector<16x16xf32>
    %284 = arith.mulf %3, %283 : vector<16x16xf32>
    %cst_114 = arith.constant 1.000000e+00 : f32
    %285 = arith.subf %cst_114, %19 : f32
    %286 = vector.broadcast %285 : f32 to vector<16x16xf32>
    %287 = arith.mulf %33, %286 : vector<16x16xf32>
    %288 = arith.addf %284, %287 : vector<16x16xf32>
    %cst_115 = arith.constant 0.000000e+00 : f32
    %cst_116 = arith.constant 1.000000e+00 : f32
    %289 = vector.broadcast %cst_115 : f32 to vector<16x16xf32>
    %290 = arith.maximumf %289, %288 : vector<16x16xf32>
    %291 = vector.broadcast %cst_116 : f32 to vector<16x16xf32>
    %292 = arith.minimumf %291, %290 : vector<16x16xf32>
    %293 = vector.broadcast %20 : f32 to vector<16x16xf32>
    %294 = arith.cmpf olt, %3, %293 : vector<16x16xf32>
    %cst_117 = arith.constant 1.000000e+00 : f32
    %295 = vector.broadcast %cst_117 : f32 to vector<16x16xf32>
    %296 = arith.subf %295, %3 : vector<16x16xf32>
    %297 = arith.select %294, %3, %296 : vector<16x16xi1>, vector<16x16xf32>
    %cst_118 = arith.constant 0.000000e+00 : f32
    %cst_119 = arith.constant 1.000000e+00 : f32
    %298 = vector.broadcast %cst_118 : f32 to vector<16x16xf32>
    %299 = arith.maximumf %298, %297 : vector<16x16xf32>
    %300 = vector.broadcast %cst_119 : f32 to vector<16x16xf32>
    %301 = arith.minimumf %300, %299 : vector<16x16xf32>
    %cst_120 = arith.constant dense<0.000000e+00> : vector<16x16xf32>
    %302 = tpu.matmul %3, %23, %cst_120 {dimension_numbers = #tpu.dot_dimension_numbers<[1], [0], [0], [1], [0, 0, 1, 1], [], []>} : vector<16x16xf32>, vector<16x16xf32>, vector<16x16xf32> -> vector<16x16xf32>
    %cst_121 = arith.constant dense<0.000000e+00> : vector<16x16xf32>
    %303 = tpu.matmul %22, %302, %cst_121 {dimension_numbers = #tpu.dot_dimension_numbers<[1], [0], [0], [1], [0, 0, 1, 1], [], []>} : vector<16x16xf32>, vector<16x16xf32>, vector<16x16xf32> -> vector<16x16xf32>
    %cst_122 = arith.constant 0.000000e+00 : f32
    %cst_123 = arith.constant 1.000000e+00 : f32
    %304 = vector.broadcast %cst_122 : f32 to vector<16x16xf32>
    %305 = arith.maximumf %304, %303 : vector<16x16xf32>
    %306 = vector.broadcast %cst_123 : f32 to vector<16x16xf32>
    %307 = arith.minimumf %306, %305 : vector<16x16xf32>
    %cst_124 = arith.constant 2.550000e+02 : f32
    %308 = vector.broadcast %cst_124 : f32 to vector<16x16xf32>
    %309 = arith.mulf %3, %308 : vector<16x16xf32>
    %310 = math.floor %309 : vector<16x16xf32>
    %cst_125 = arith.constant 0.00392156886 : f32
    %311 = vector.broadcast %cst_125 : f32 to vector<16x16xf32>
    %312 = arith.mulf %310, %311 : vector<16x16xf32>
    %cst_126 = arith.constant 0.000000e+00 : f32
    %cst_127 = arith.constant 1.000000e+00 : f32
    %313 = vector.broadcast %cst_126 : f32 to vector<16x16xf32>
    %314 = arith.maximumf %313, %312 : vector<16x16xf32>
    %315 = vector.broadcast %cst_127 : f32 to vector<16x16xf32>
    %316 = arith.minimumf %315, %314 : vector<16x16xf32>
    %cst_128 = arith.constant dense<0.000000e+00> : vector<16x16xf32>
    %317 = tpu.matmul %3, %25, %cst_128 {dimension_numbers = #tpu.dot_dimension_numbers<[1], [0], [0], [1], [0, 0, 1, 1], [], []>} : vector<16x16xf32>, vector<16x16xf32>, vector<16x16xf32> -> vector<16x16xf32>
    %cst_129 = arith.constant dense<0.000000e+00> : vector<16x16xf32>
    %318 = tpu.matmul %24, %317, %cst_129 {dimension_numbers = #tpu.dot_dimension_numbers<[1], [0], [0], [1], [0, 0, 1, 1], [], []>} : vector<16x16xf32>, vector<16x16xf32>, vector<16x16xf32> -> vector<16x16xf32>
    %cst_130 = arith.constant 4.000000e+00 : f32
    %319 = vector.broadcast %cst_130 : f32 to vector<16x16xf32>
    %320 = arith.mulf %319, %3 : vector<16x16xf32>
    %321 = arith.addf %318, %320 : vector<16x16xf32>
    %cst_131 = arith.constant 0.0769230798 : f32
    %322 = vector.broadcast %cst_131 : f32 to vector<16x16xf32>
    %323 = arith.mulf %321, %322 : vector<16x16xf32>
    %cst_132 = arith.constant 1.000000e+00 : f32
    %324 = arith.subf %cst_132, %21 : f32
    %325 = arith.subf %3, %323 : vector<16x16xf32>
    %326 = vector.broadcast %324 : f32 to vector<16x16xf32>
    %327 = arith.mulf %326, %325 : vector<16x16xf32>
    %328 = arith.addf %323, %327 : vector<16x16xf32>
    %cst_133 = arith.constant 0.000000e+00 : f32
    %cst_134 = arith.constant 1.000000e+00 : f32
    %329 = vector.broadcast %cst_133 : f32 to vector<16x16xf32>
    %330 = arith.maximumf %329, %328 : vector<16x16xf32>
    %331 = vector.broadcast %cst_134 : f32 to vector<16x16xf32>
    %332 = arith.minimumf %331, %330 : vector<16x16xf32>
    %333 = vector.broadcast %6 : f32 to vector<16x16xf32>
    %334 = arith.mulf %333, %3 : vector<16x16xf32>
    %335 = vector.broadcast %7 : f32 to vector<16x16xf32>
    %336 = arith.mulf %335, %268 : vector<16x16xf32>
    %337 = arith.addf %334, %336 : vector<16x16xf32>
    %338 = vector.broadcast %8 : f32 to vector<16x16xf32>
    %339 = arith.mulf %338, %278 : vector<16x16xf32>
    %340 = arith.addf %337, %339 : vector<16x16xf32>
    %341 = vector.broadcast %9 : f32 to vector<16x16xf32>
    %342 = arith.mulf %341, %282 : vector<16x16xf32>
    %343 = arith.addf %340, %342 : vector<16x16xf32>
    %344 = vector.broadcast %10 : f32 to vector<16x16xf32>
    %345 = arith.mulf %344, %292 : vector<16x16xf32>
    %346 = arith.addf %343, %345 : vector<16x16xf32>
    %347 = vector.broadcast %11 : f32 to vector<16x16xf32>
    %348 = arith.mulf %347, %301 : vector<16x16xf32>
    %349 = arith.addf %346, %348 : vector<16x16xf32>
    %350 = vector.broadcast %12 : f32 to vector<16x16xf32>
    %351 = arith.mulf %350, %307 : vector<16x16xf32>
    %352 = arith.addf %349, %351 : vector<16x16xf32>
    %353 = vector.broadcast %13 : f32 to vector<16x16xf32>
    %354 = arith.mulf %353, %316 : vector<16x16xf32>
    %355 = arith.addf %352, %354 : vector<16x16xf32>
    %356 = vector.broadcast %14 : f32 to vector<16x16xf32>
    %357 = arith.mulf %356, %41 : vector<16x16xf32>
    %358 = arith.addf %355, %357 : vector<16x16xf32>
    %359 = vector.broadcast %15 : f32 to vector<16x16xf32>
    %360 = arith.mulf %359, %332 : vector<16x16xf32>
    %361 = arith.addf %358, %360 : vector<16x16xf32>
    %362 = arith.cmpf oeq, %361, %361 : vector<16x16xf32>
    %363 = math.absf %361 : vector<16x16xf32>
    %cst_135 = arith.constant 3.40282347E+38 : f32
    %364 = vector.broadcast %cst_135 : f32 to vector<16x16xf32>
    %365 = arith.cmpf ole, %363, %364 : vector<16x16xf32>
    %366 = arith.andi %362, %365 : vector<16x16xi1>
    %cst_136 = arith.constant 0.000000e+00 : f32
    %367 = vector.broadcast %cst_136 : f32 to vector<16x16xf32>
    %368 = arith.select %366, %361, %367 : vector<16x16xi1>, vector<16x16xf32>
    %cst_137 = arith.constant 0.000000e+00 : f32
    %cst_138 = arith.constant 1.000000e+00 : f32
    %369 = vector.broadcast %cst_137 : f32 to vector<16x16xf32>
    %370 = arith.maximumf %369, %368 : vector<16x16xf32>
    %371 = vector.broadcast %cst_138 : f32 to vector<16x16xf32>
    %372 = arith.minimumf %371, %370 : vector<16x16xf32>
    %c0_139 = arith.constant 0 : index
    %c1_140 = arith.constant 1 : index
    %c0_141 = arith.constant 0 : index
    %c0_142 = arith.constant 0 : index
    %373 = vector.load %arg7[%c0_139, %c1_140, %c0_141, %c0_142] : memref<1x3x16x16xf32, #tpu.memory_space<vmem>>, vector<1x1x16x16xf32>
    %374 = vector.shape_cast %373 : vector<1x1x16x16xf32> to vector<16x16xf32>
    %375 = vector.shape_cast %372 : vector<16x16xf32> to vector<1x1x16x16xf32>
    tpu.vector_store %arg7[%c0_139, %c1_140, %c0_141, %c0_142], %375 {strides = array<i32>} : memref<1x3x16x16xf32, #tpu.memory_space<vmem>>, vector<1x1x16x16xf32>,
    %376 = vector.broadcast %16 : f32 to vector<16x16xf32>
    %377 = arith.mulf %5, %376 : vector<16x16xf32>
    %cst_143 = arith.constant 0.000000e+00 : f32
    %cst_144 = arith.constant 1.000000e+00 : f32
    %378 = vector.broadcast %cst_143 : f32 to vector<16x16xf32>
    %379 = arith.maximumf %378, %377 : vector<16x16xf32>
    %380 = vector.broadcast %cst_144 : f32 to vector<16x16xf32>
    %381 = arith.minimumf %380, %379 : vector<16x16xf32>
    %382 = vector.broadcast %17 : f32 to vector<16x16xf32>
    %383 = arith.mulf %5, %382 : vector<16x16xf32>
    %cst_145 = arith.constant 1.000000e+00 : f32
    %384 = arith.subf %cst_145, %17 : f32
    %385 = arith.mulf %46, %384 : f32
    %386 = vector.broadcast %385 : f32 to vector<16x16xf32>
    %387 = arith.addf %383, %386 : vector<16x16xf32>
    %cst_146 = arith.constant 0.000000e+00 : f32
    %cst_147 = arith.constant 1.000000e+00 : f32
    %388 = vector.broadcast %cst_146 : f32 to vector<16x16xf32>
    %389 = arith.maximumf %388, %387 : vector<16x16xf32>
    %390 = vector.broadcast %cst_147 : f32 to vector<16x16xf32>
    %391 = arith.minimumf %390, %389 : vector<16x16xf32>
    %cst_148 = arith.constant 0.000000e+00 : f32
    %cst_149 = arith.constant 1.000000e+00 : f32
    %392 = vector.broadcast %cst_148 : f32 to vector<16x16xf32>
    %393 = arith.maximumf %392, %149 : vector<16x16xf32>
    %394 = vector.broadcast %cst_149 : f32 to vector<16x16xf32>
    %395 = arith.minimumf %394, %393 : vector<16x16xf32>
    %396 = vector.broadcast %19 : f32 to vector<16x16xf32>
    %397 = arith.mulf %5, %396 : vector<16x16xf32>
    %cst_150 = arith.constant 1.000000e+00 : f32
    %398 = arith.subf %cst_150, %19 : f32
    %399 = vector.broadcast %398 : f32 to vector<16x16xf32>
    %400 = arith.mulf %33, %399 : vector<16x16xf32>
    %401 = arith.addf %397, %400 : vector<16x16xf32>
    %cst_151 = arith.constant 0.000000e+00 : f32
    %cst_152 = arith.constant 1.000000e+00 : f32
    %402 = vector.broadcast %cst_151 : f32 to vector<16x16xf32>
    %403 = arith.maximumf %402, %401 : vector<16x16xf32>
    %404 = vector.broadcast %cst_152 : f32 to vector<16x16xf32>
    %405 = arith.minimumf %404, %403 : vector<16x16xf32>
    %406 = vector.broadcast %20 : f32 to vector<16x16xf32>
    %407 = arith.cmpf olt, %5, %406 : vector<16x16xf32>
    %cst_153 = arith.constant 1.000000e+00 : f32
    %408 = vector.broadcast %cst_153 : f32 to vector<16x16xf32>
    %409 = arith.subf %408, %5 : vector<16x16xf32>
    %410 = arith.select %407, %5, %409 : vector<16x16xi1>, vector<16x16xf32>
    %cst_154 = arith.constant 0.000000e+00 : f32
    %cst_155 = arith.constant 1.000000e+00 : f32
    %411 = vector.broadcast %cst_154 : f32 to vector<16x16xf32>
    %412 = arith.maximumf %411, %410 : vector<16x16xf32>
    %413 = vector.broadcast %cst_155 : f32 to vector<16x16xf32>
    %414 = arith.minimumf %413, %412 : vector<16x16xf32>
    %cst_156 = arith.constant dense<0.000000e+00> : vector<16x16xf32>
    %415 = tpu.matmul %5, %23, %cst_156 {dimension_numbers = #tpu.dot_dimension_numbers<[1], [0], [0], [1], [0, 0, 1, 1], [], []>} : vector<16x16xf32>, vector<16x16xf32>, vector<16x16xf32> -> vector<16x16xf32>
    %cst_157 = arith.constant dense<0.000000e+00> : vector<16x16xf32>
    %416 = tpu.matmul %22, %415, %cst_157 {dimension_numbers = #tpu.dot_dimension_numbers<[1], [0], [0], [1], [0, 0, 1, 1], [], []>} : vector<16x16xf32>, vector<16x16xf32>, vector<16x16xf32> -> vector<16x16xf32>
    %cst_158 = arith.constant 0.000000e+00 : f32
    %cst_159 = arith.constant 1.000000e+00 : f32
    %417 = vector.broadcast %cst_158 : f32 to vector<16x16xf32>
    %418 = arith.maximumf %417, %416 : vector<16x16xf32>
    %419 = vector.broadcast %cst_159 : f32 to vector<16x16xf32>
    %420 = arith.minimumf %419, %418 : vector<16x16xf32>
    %cst_160 = arith.constant 2.550000e+02 : f32
    %421 = vector.broadcast %cst_160 : f32 to vector<16x16xf32>
    %422 = arith.mulf %5, %421 : vector<16x16xf32>
    %423 = math.floor %422 : vector<16x16xf32>
    %cst_161 = arith.constant 0.00392156886 : f32
    %424 = vector.broadcast %cst_161 : f32 to vector<16x16xf32>
    %425 = arith.mulf %423, %424 : vector<16x16xf32>
    %cst_162 = arith.constant 0.000000e+00 : f32
    %cst_163 = arith.constant 1.000000e+00 : f32
    %426 = vector.broadcast %cst_162 : f32 to vector<16x16xf32>
    %427 = arith.maximumf %426, %425 : vector<16x16xf32>
    %428 = vector.broadcast %cst_163 : f32 to vector<16x16xf32>
    %429 = arith.minimumf %428, %427 : vector<16x16xf32>
    %cst_164 = arith.constant dense<0.000000e+00> : vector<16x16xf32>
    %430 = tpu.matmul %5, %25, %cst_164 {dimension_numbers = #tpu.dot_dimension_numbers<[1], [0], [0], [1], [0, 0, 1, 1], [], []>} : vector<16x16xf32>, vector<16x16xf32>, vector<16x16xf32> -> vector<16x16xf32>
    %cst_165 = arith.constant dense<0.000000e+00> : vector<16x16xf32>
    %431 = tpu.matmul %24, %430, %cst_165 {dimension_numbers = #tpu.dot_dimension_numbers<[1], [0], [0], [1], [0, 0, 1, 1], [], []>} : vector<16x16xf32>, vector<16x16xf32>, vector<16x16xf32> -> vector<16x16xf32>
    %cst_166 = arith.constant 4.000000e+00 : f32
    %432 = vector.broadcast %cst_166 : f32 to vector<16x16xf32>
    %433 = arith.mulf %432, %5 : vector<16x16xf32>
    %434 = arith.addf %431, %433 : vector<16x16xf32>
    %cst_167 = arith.constant 0.0769230798 : f32
    %435 = vector.broadcast %cst_167 : f32 to vector<16x16xf32>
    %436 = arith.mulf %434, %435 : vector<16x16xf32>
    %cst_168 = arith.constant 1.000000e+00 : f32
    %437 = arith.subf %cst_168, %21 : f32
    %438 = arith.subf %5, %436 : vector<16x16xf32>
    %439 = vector.broadcast %437 : f32 to vector<16x16xf32>
    %440 = arith.mulf %439, %438 : vector<16x16xf32>
    %441 = arith.addf %436, %440 : vector<16x16xf32>
    %cst_169 = arith.constant 0.000000e+00 : f32
    %cst_170 = arith.constant 1.000000e+00 : f32
    %442 = vector.broadcast %cst_169 : f32 to vector<16x16xf32>
    %443 = arith.maximumf %442, %441 : vector<16x16xf32>
    %444 = vector.broadcast %cst_170 : f32 to vector<16x16xf32>
    %445 = arith.minimumf %444, %443 : vector<16x16xf32>
    %446 = vector.broadcast %6 : f32 to vector<16x16xf32>
    %447 = arith.mulf %446, %5 : vector<16x16xf32>
    %448 = vector.broadcast %7 : f32 to vector<16x16xf32>
    %449 = arith.mulf %448, %381 : vector<16x16xf32>
    %450 = arith.addf %447, %449 : vector<16x16xf32>
    %451 = vector.broadcast %8 : f32 to vector<16x16xf32>
    %452 = arith.mulf %451, %391 : vector<16x16xf32>
    %453 = arith.addf %450, %452 : vector<16x16xf32>
    %454 = vector.broadcast %9 : f32 to vector<16x16xf32>
    %455 = arith.mulf %454, %395 : vector<16x16xf32>
    %456 = arith.addf %453, %455 : vector<16x16xf32>
    %457 = vector.broadcast %10 : f32 to vector<16x16xf32>
    %458 = arith.mulf %457, %405 : vector<16x16xf32>
    %459 = arith.addf %456, %458 : vector<16x16xf32>
    %460 = vector.broadcast %11 : f32 to vector<16x16xf32>
    %461 = arith.mulf %460, %414 : vector<16x16xf32>
    %462 = arith.addf %459, %461 : vector<16x16xf32>
    %463 = vector.broadcast %12 : f32 to vector<16x16xf32>
    %464 = arith.mulf %463, %420 : vector<16x16xf32>
    %465 = arith.addf %462, %464 : vector<16x16xf32>
    %466 = vector.broadcast %13 : f32 to vector<16x16xf32>
    %467 = arith.mulf %466, %429 : vector<16x16xf32>
    %468 = arith.addf %465, %467 : vector<16x16xf32>
    %469 = vector.broadcast %14 : f32 to vector<16x16xf32>
    %470 = arith.mulf %469, %41 : vector<16x16xf32>
    %471 = arith.addf %468, %470 : vector<16x16xf32>
    %472 = vector.broadcast %15 : f32 to vector<16x16xf32>
    %473 = arith.mulf %472, %445 : vector<16x16xf32>
    %474 = arith.addf %471, %473 : vector<16x16xf32>
    %475 = arith.cmpf oeq, %474, %474 : vector<16x16xf32>
    %476 = math.absf %474 : vector<16x16xf32>
    %cst_171 = arith.constant 3.40282347E+38 : f32
    %477 = vector.broadcast %cst_171 : f32 to vector<16x16xf32>
    %478 = arith.cmpf ole, %476, %477 : vector<16x16xf32>
    %479 = arith.andi %475, %478 : vector<16x16xi1>
    %cst_172 = arith.constant 0.000000e+00 : f32
    %480 = vector.broadcast %cst_172 : f32 to vector<16x16xf32>
    %481 = arith.select %479, %474, %480 : vector<16x16xi1>, vector<16x16xf32>
    %cst_173 = arith.constant 0.000000e+00 : f32
    %cst_174 = arith.constant 1.000000e+00 : f32
    %482 = vector.broadcast %cst_173 : f32 to vector<16x16xf32>
    %483 = arith.maximumf %482, %481 : vector<16x16xf32>
    %484 = vector.broadcast %cst_174 : f32 to vector<16x16xf32>
    %485 = arith.minimumf %484, %483 : vector<16x16xf32>
    %c0_175 = arith.constant 0 : index
    %c2_176 = arith.constant 2 : index
    %c0_177 = arith.constant 0 : index
    %c0_178 = arith.constant 0 : index
    %486 = vector.load %arg7[%c0_175, %c2_176, %c0_177, %c0_178] : memref<1x3x16x16xf32, #tpu.memory_space<vmem>>, vector<1x1x16x16xf32>
    %487 = vector.shape_cast %486 : vector<1x1x16x16xf32> to vector<16x16xf32>
    %488 = vector.shape_cast %485 : vector<16x16xf32> to vector<1x1x16x16xf32>
    tpu.vector_store %arg7[%c0_175, %c2_176, %c0_177, %c0_178], %488 {strides = array<i32>} : memref<1x3x16x16xf32, #tpu.memory_space<vmem>>, vector<1x1x16x16xf32>,
    return
  }
  func.func @transform_0(%arg0: i32) -> (i32, i32) {
    %c0_i32 = arith.constant 0 : i32
    %c0_i32_0 = arith.constant 0 : i32
    %c0_i32_1 = arith.constant 0 : i32
    return %c0_i32, %c0_i32_0 : i32, i32
  }
  func.func @transform_1(%arg0: i32) -> (i32, i32, i32, i32) {
    %c0_i32 = arith.constant 0 : i32
    %c0_i32_0 = arith.constant 0 : i32
    %c0_i32_1 = arith.constant 0 : i32
    %c0_i32_2 = arith.constant 0 : i32
    return %arg0, %c0_i32, %c0_i32_0, %c0_i32_1 : i32, i32, i32, i32
  }
  func.func @transform_2(%arg0: i32) -> (i32, i32) {
    %c0_i32 = arith.constant 0 : i32
    %c0_i32_0 = arith.constant 0 : i32
    %c0_i32_1 = arith.constant 0 : i32
    return %c0_i32, %c0_i32_0 : i32, i32
  }
  func.func @transform_3(%arg0: i32) -> (i32, i32) {
    %c0_i32 = arith.constant 0 : i32
    %c0_i32_0 = arith.constant 0 : i32
    %c0_i32_1 = arith.constant 0 : i32
    return %c0_i32, %c0_i32_0 : i32, i32
  }
  func.func @transform_4(%arg0: i32) -> (i32, i32) {
    %c0_i32 = arith.constant 0 : i32
    %c0_i32_0 = arith.constant 0 : i32
    %c0_i32_1 = arith.constant 0 : i32
    return %c0_i32, %c0_i32_0 : i32, i32
  }
  func.func @transform_5(%arg0: i32) -> (i32, i32) {
    %c0_i32 = arith.constant 0 : i32
    %c0_i32_0 = arith.constant 0 : i32
    %c0_i32_1 = arith.constant 0 : i32
    return %c0_i32, %c0_i32_0 : i32, i32
  }
  func.func @transform_6(%arg0: i32) -> (i32, i32, i32, i32) {
    %c0_i32 = arith.constant 0 : i32
    %c0_i32_0 = arith.constant 0 : i32
    %c0_i32_1 = arith.constant 0 : i32
    %c0_i32_2 = arith.constant 0 : i32
    return %arg0, %c0_i32, %c0_i32_0, %c0_i32_1 : i32, i32, i32, i32
  }
}

module attributes {stable_mosaic.version = 11 : i64} {
  func.func @_aug_layer_kernel(%arg0: i32, %arg1: memref<1x16xf32, #tpu.memory_space<smem>>, %arg2: memref<1x3x16x16xf32, #tpu.memory_space<vmem>>, %arg3: memref<16x16xf32, #tpu.memory_space<vmem>>, %arg4: memref<16x16xf32, #tpu.memory_space<vmem>>, %arg5: memref<16x16xf32, #tpu.memory_space<vmem>>, %arg6: memref<16x16xf32, #tpu.memory_space<vmem>>, %arg7: memref<1x3x16x16xf32, #tpu.memory_space<vmem>>) attributes {dimension_semantics = [#tpu.dimension_semantics<parallel>], iteration_bounds = array<i64: 2>, scalar_prefetch = 0 : i64, scratch_operands = 0 : i64, tpu.core_type = #tpu.core_type<tc>, window_params = [{transform_indices = @transform_0, window_bounds = array<i64: 1, 16>}, {transform_indices = @transform_1, window_bounds = array<i64: 1, 3, 16, 16>}, {pipeline_mode = #tpu.pipeline_mode<synchronous>, transform_indices = @transform_2, window_bounds = array<i64: 16, 16>}, {pipeline_mode = #tpu.pipeline_mode<synchronous>, transform_indices = @transform_3, window_bounds = array<i64: 16, 16>}, {pipeline_mode = #tpu.pipeline_mode<synchronous>, transform_indices = @transform_4, window_bounds = array<i64: 16, 16>}, {pipeline_mode = #tpu.pipeline_mode<synchronous>, transform_indices = @transform_5, window_bounds = array<i64: 16, 16>}, {transform_indices = @transform_6, window_bounds = array<i64: 1, 3, 16, 16>}]} {
    %c0 = arith.constant 0 : index
    %c0_0 = arith.constant 0 : index
    %c0_1 = arith.constant 0 : index
    %c0_2 = arith.constant 0 : index
    %0 = vector.load %arg2[%c0, %c0_0, %c0_1, %c0_2] : memref<1x3x16x16xf32, #tpu.memory_space<vmem>>, vector<1x1x16x16xf32>
    %1 = vector.shape_cast %0 : vector<1x1x16x16xf32> to vector<16x16xf32>
    %c0_3 = arith.constant 0 : index
    %c1 = arith.constant 1 : index
    %c0_4 = arith.constant 0 : index
    %c0_5 = arith.constant 0 : index
    %2 = vector.load %arg2[%c0_3, %c1, %c0_4, %c0_5] : memref<1x3x16x16xf32, #tpu.memory_space<vmem>>, vector<1x1x16x16xf32>
    %3 = vector.shape_cast %2 : vector<1x1x16x16xf32> to vector<16x16xf32>
    %c0_6 = arith.constant 0 : index
    %c2 = arith.constant 2 : index
    %c0_7 = arith.constant 0 : index
    %c0_8 = arith.constant 0 : index
    %4 = vector.load %arg2[%c0_6, %c2, %c0_7, %c0_8] : memref<1x3x16x16xf32, #tpu.memory_space<vmem>>, vector<1x1x16x16xf32>
    %5 = vector.shape_cast %4 : vector<1x1x16x16xf32> to vector<16x16xf32>
    %c0_9 = arith.constant 0 : index
    %c0_10 = arith.constant 0 : index
    %6 = memref.load %arg1[%c0_9, %c0_10] : memref<1x16xf32, #tpu.memory_space<smem>>
    %c0_11 = arith.constant 0 : index
    %c1_12 = arith.constant 1 : index
    %7 = memref.load %arg1[%c0_11, %c1_12] : memref<1x16xf32, #tpu.memory_space<smem>>
    %c0_13 = arith.constant 0 : index
    %c2_14 = arith.constant 2 : index
    %8 = memref.load %arg1[%c0_13, %c2_14] : memref<1x16xf32, #tpu.memory_space<smem>>
    %c0_15 = arith.constant 0 : index
    %c3 = arith.constant 3 : index
    %9 = memref.load %arg1[%c0_15, %c3] : memref<1x16xf32, #tpu.memory_space<smem>>
    %c0_16 = arith.constant 0 : index
    %c4 = arith.constant 4 : index
    %10 = memref.load %arg1[%c0_16, %c4] : memref<1x16xf32, #tpu.memory_space<smem>>
    %c0_17 = arith.constant 0 : index
    %c5 = arith.constant 5 : index
    %11 = memref.load %arg1[%c0_17, %c5] : memref<1x16xf32, #tpu.memory_space<smem>>
    %c0_18 = arith.constant 0 : index
    %c6 = arith.constant 6 : index
    %12 = memref.load %arg1[%c0_18, %c6] : memref<1x16xf32, #tpu.memory_space<smem>>
    %c0_19 = arith.constant 0 : index
    %c7 = arith.constant 7 : index
    %13 = memref.load %arg1[%c0_19, %c7] : memref<1x16xf32, #tpu.memory_space<smem>>
    %c0_20 = arith.constant 0 : index
    %c8 = arith.constant 8 : index
    %14 = memref.load %arg1[%c0_20, %c8] : memref<1x16xf32, #tpu.memory_space<smem>>
    %c0_21 = arith.constant 0 : index
    %c9 = arith.constant 9 : index
    %15 = memref.load %arg1[%c0_21, %c9] : memref<1x16xf32, #tpu.memory_space<smem>>
    %c0_22 = arith.constant 0 : index
    %c10 = arith.constant 10 : index
    %16 = memref.load %arg1[%c0_22, %c10] : memref<1x16xf32, #tpu.memory_space<smem>>
    %c0_23 = arith.constant 0 : index
    %c11 = arith.constant 11 : index
    %17 = memref.load %arg1[%c0_23, %c11] : memref<1x16xf32, #tpu.memory_space<smem>>
    %c0_24 = arith.constant 0 : index
    %c12 = arith.constant 12 : index
    %18 = memref.load %arg1[%c0_24, %c12] : memref<1x16xf32, #tpu.memory_space<smem>>
    %c0_25 = arith.constant 0 : index
    %c13 = arith.constant 13 : index
    %19 = memref.load %arg1[%c0_25, %c13] : memref<1x16xf32, #tpu.memory_space<smem>>
    %c0_26 = arith.constant 0 : index
    %c14 = arith.constant 14 : index
    %20 = memref.load %arg1[%c0_26, %c14] : memref<1x16xf32, #tpu.memory_space<smem>>
    %c0_27 = arith.constant 0 : index
    %c15 = arith.constant 15 : index
    %21 = memref.load %arg1[%c0_27, %c15] : memref<1x16xf32, #tpu.memory_space<smem>>
    %c0_28 = arith.constant 0 : index
    %c0_29 = arith.constant 0 : index
    %22 = vector.load %arg3[%c0_28, %c0_29] : memref<16x16xf32, #tpu.memory_space<vmem>>, vector<16x16xf32>
    %c0_30 = arith.constant 0 : index
    %c0_31 = arith.constant 0 : index
    %23 = vector.load %arg4[%c0_30, %c0_31] : memref<16x16xf32, #tpu.memory_space<vmem>>, vector<16x16xf32>
    %c0_32 = arith.constant 0 : index
    %c0_33 = arith.constant 0 : index
    %24 = vector.load %arg5[%c0_32, %c0_33] : memref<16x16xf32, #tpu.memory_space<vmem>>, vector<16x16xf32>
    %c0_34 = arith.constant 0 : index
    %c0_35 = arith.constant 0 : index
    %25 = vector.load %arg6[%c0_34, %c0_35] : memref<16x16xf32, #tpu.memory_space<vmem>>, vector<16x16xf32>
    %cst = arith.constant 2.990000e-01 : f32
    %26 = vector.broadcast %cst : f32 to vector<16x16xf32>
    %27 = arith.mulf %26, %1 : vector<16x16xf32>
    %cst_36 = arith.constant 5.870000e-01 : f32
    %28 = vector.broadcast %cst_36 : f32 to vector<16x16xf32>
    %29 = arith.mulf %28, %3 : vector<16x16xf32>
    %30 = arith.addf %27, %29 : vector<16x16xf32>
    %cst_37 = arith.constant 1.140000e-01 : f32
    %31 = vector.broadcast %cst_37 : f32 to vector<16x16xf32>
    %32 = arith.mulf %31, %5 : vector<16x16xf32>
    %33 = arith.addf %30, %32 : vector<16x16xf32>
    %cst_38 = arith.constant 2.990000e-01 : f32
    %34 = vector.broadcast %cst_38 : f32 to vector<16x16xf32>
    %35 = arith.mulf %34, %1 : vector<16x16xf32>
    %cst_39 = arith.constant 5.870000e-01 : f32
    %36 = vector.broadcast %cst_39 : f32 to vector<16x16xf32>
    %37 = arith.mulf %36, %3 : vector<16x16xf32>
    %38 = arith.addf %35, %37 : vector<16x16xf32>
    %cst_40 = arith.constant 1.100000e-01 : f32
    %39 = vector.broadcast %cst_40 : f32 to vector<16x16xf32>
    %40 = arith.mulf %39, %5 : vector<16x16xf32>
    %41 = arith.addf %38, %40 : vector<16x16xf32>
    %42 = vector.shape_cast %33 : vector<16x16xf32> to vector<1x16x16xf32>
    %cst_41 = arith.constant dense<0.000000e+00> : vector<1xf32>
    %43 = vector.multi_reduction <add>, %42, %cst_41 [1, 2] : vector<1x16x16xf32> to vector<1xf32>
    %44 = vector.shape_cast %43 : vector<1xf32> to vector<1x1x1xf32>
    %45 = vector.extract %44[0, 0, 0] : f32 from vector<1x1x1xf32>
    %cst_42 = arith.constant 3.906250e-03 : f32
    %46 = arith.mulf %45, %cst_42 : f32
    %47 = arith.maximumf %1, %3 : vector<16x16xf32>
    %48 = arith.maximumf %47, %5 : vector<16x16xf32>
    %49 = arith.minimumf %1, %3 : vector<16x16xf32>
    %50 = arith.minimumf %49, %5 : vector<16x16xf32>
    %51 = arith.subf %48, %50 : vector<16x16xf32>
    %cst_43 = arith.constant 9.99999993E-9 : f32
    %52 = vector.broadcast %cst_43 : f32 to vector<16x16xf32>
    %53 = arith.addf %48, %52 : vector<16x16xf32>
    %54 = arith.divf %51, %53 : vector<16x16xf32>
    %cst_44 = arith.constant 0.000000e+00 : f32
    %55 = vector.broadcast %cst_44 : f32 to vector<16x16xf32>
    %56 = arith.cmpf oeq, %51, %55 : vector<16x16xf32>
    %cst_45 = arith.constant 1.000000e+00 : f32
    %57 = vector.broadcast %cst_45 : f32 to vector<16x16xf32>
    %58 = arith.select %56, %57, %51 : vector<16x16xi1>, vector<16x16xf32>
    %59 = arith.cmpf oge, %1, %3 : vector<16x16xf32>
    %60 = arith.cmpf oge, %1, %5 : vector<16x16xf32>
    %61 = arith.andi %59, %60 : vector<16x16xi1>
    %cst_46 = arith.constant dense<true> : vector<16x16xi1>
    %62 = arith.xori %61, %cst_46 : vector<16x16xi1>
    %63 = arith.cmpf oge, %3, %5 : vector<16x16xf32>
    %64 = arith.andi %62, %63 : vector<16x16xi1>
    %65 = arith.subf %3, %5 : vector<16x16xf32>
    %66 = arith.subf %5, %1 : vector<16x16xf32>
    %cst_47 = arith.constant 2.000000e+00 : f32
    %67 = vector.broadcast %cst_47 : f32 to vector<16x16xf32>
    %68 = arith.mulf %67, %51 : vector<16x16xf32>
    %69 = arith.addf %66, %68 : vector<16x16xf32>
    %70 = arith.subf %1, %3 : vector<16x16xf32>
    %cst_48 = arith.constant 4.000000e+00 : f32
    %71 = vector.broadcast %cst_48 : f32 to vector<16x16xf32>
    %72 = arith.mulf %71, %51 : vector<16x16xf32>
    %73 = arith.addf %70, %72 : vector<16x16xf32>
    %74 = arith.select %64, %69, %73 : vector<16x16xi1>, vector<16x16xf32>
    %75 = arith.select %61, %65, %74 : vector<16x16xi1>, vector<16x16xf32>
    %76 = arith.divf %75, %58 : vector<16x16xf32>
    %cst_49 = arith.constant 0.166666672 : f32
    %77 = vector.broadcast %cst_49 : f32 to vector<16x16xf32>
    %78 = arith.mulf %76, %77 : vector<16x16xf32>
    %79 = math.floor %78 : vector<16x16xf32>
    %80 = arith.subf %78, %79 : vector<16x16xf32>
    %81 = vector.broadcast %18 : f32 to vector<16x16xf32>
    %82 = arith.addf %80, %81 : vector<16x16xf32>
    %83 = math.floor %82 : vector<16x16xf32>
    %84 = arith.subf %82, %83 : vector<16x16xf32>
    %cst_50 = arith.constant 6.000000e+00 : f32
    %85 = vector.broadcast %cst_50 : f32 to vector<16x16xf32>
    %86 = arith.mulf %84, %85 : vector<16x16xf32>
    %87 = math.floor %86 : vector<16x16xf32>
    %cst_51 = arith.constant 5.000000e+00 : f32
    %88 = vector.broadcast %cst_51 : f32 to vector<16x16xf32>
    %89 = arith.minimumf %87, %88 : vector<16x16xf32>
    %90 = math.floor %86 : vector<16x16xf32>
    %91 = arith.subf %86, %90 : vector<16x16xf32>
    %cst_52 = arith.constant 1.000000e+00 : f32
    %92 = vector.broadcast %cst_52 : f32 to vector<16x16xf32>
    %93 = arith.subf %92, %54 : vector<16x16xf32>
    %94 = arith.mulf %48, %93 : vector<16x16xf32>
    %95 = arith.mulf %91, %54 : vector<16x16xf32>
    %cst_53 = arith.constant 1.000000e+00 : f32
    %96 = vector.broadcast %cst_53 : f32 to vector<16x16xf32>
    %97 = arith.subf %96, %95 : vector<16x16xf32>
    %98 = arith.mulf %48, %97 : vector<16x16xf32>
    %cst_54 = arith.constant 1.000000e+00 : f32
    %99 = vector.broadcast %cst_54 : f32 to vector<16x16xf32>
    %100 = arith.subf %99, %91 : vector<16x16xf32>
    %101 = arith.mulf %100, %54 : vector<16x16xf32>
    %cst_55 = arith.constant 1.000000e+00 : f32
    %102 = vector.broadcast %cst_55 : f32 to vector<16x16xf32>
    %103 = arith.subf %102, %101 : vector<16x16xf32>
    %104 = arith.mulf %48, %103 : vector<16x16xf32>
    %cst_56 = arith.constant 0.000000e+00 : f32
    %105 = vector.broadcast %cst_56 : f32 to vector<16x16xf32>
    %106 = arith.cmpf oeq, %89, %105 : vector<16x16xf32>
    %cst_57 = arith.constant 1.000000e+00 : f32
    %107 = vector.broadcast %cst_57 : f32 to vector<16x16xf32>
    %108 = arith.cmpf oeq, %89, %107 : vector<16x16xf32>
    %cst_58 = arith.constant 2.000000e+00 : f32
    %109 = vector.broadcast %cst_58 : f32 to vector<16x16xf32>
    %110 = arith.cmpf oeq, %89, %109 : vector<16x16xf32>
    %cst_59 = arith.constant 3.000000e+00 : f32
    %111 = vector.broadcast %cst_59 : f32 to vector<16x16xf32>
    %112 = arith.cmpf oeq, %89, %111 : vector<16x16xf32>
    %cst_60 = arith.constant 4.000000e+00 : f32
    %113 = vector.broadcast %cst_60 : f32 to vector<16x16xf32>
    %114 = arith.cmpf oeq, %89, %113 : vector<16x16xf32>
    %115 = arith.select %114, %104, %48 : vector<16x16xi1>, vector<16x16xf32>
    %116 = arith.select %112, %94, %115 : vector<16x16xi1>, vector<16x16xf32>
    %117 = arith.select %110, %94, %116 : vector<16x16xi1>, vector<16x16xf32>
    %118 = arith.select %108, %98, %117 : vector<16x16xi1>, vector<16x16xf32>
    %119 = arith.select %106, %48, %118 : vector<16x16xi1>, vector<16x16xf32>
    %cst_61 = arith.constant 0.000000e+00 : f32
    %120 = vector.broadcast %cst_61 : f32 to vector<16x16xf32>
    %121 = arith.cmpf oeq, %89, %120 : vector<16x16xf32>
    %cst_62 = arith.constant 1.000000e+00 : f32
    %122 = vector.broadcast %cst_62 : f32 to vector<16x16xf32>
    %123 = arith.cmpf oeq, %89, %122 : vector<16x16xf32>
    %cst_63 = arith.constant 2.000000e+00 : f32
    %124 = vector.broadcast %cst_63 : f32 to vector<16x16xf32>
    %125 = arith.cmpf oeq, %89, %124 : vector<16x16xf32>
    %cst_64 = arith.constant 3.000000e+00 : f32
    %126 = vector.broadcast %cst_64 : f32 to vector<16x16xf32>
    %127 = arith.cmpf oeq, %89, %126 : vector<16x16xf32>
    %cst_65 = arith.constant 4.000000e+00 : f32
    %128 = vector.broadcast %cst_65 : f32 to vector<16x16xf32>
    %129 = arith.cmpf oeq, %89, %128 : vector<16x16xf32>
    %130 = arith.select %129, %94, %94 : vector<16x16xi1>, vector<16x16xf32>
    %131 = arith.select %127, %98, %130 : vector<16x16xi1>, vector<16x16xf32>
    %132 = arith.select %125, %48, %131 : vector<16x16xi1>, vector<16x16xf32>
    %133 = arith.select %123, %48, %132 : vector<16x16xi1>, vector<16x16xf32>
    %134 = arith.select %121, %104, %133 : vector<16x16xi1>, vector<16x16xf32>
    %cst_66 = arith.constant 0.000000e+00 : f32
    %135 = vector.broadcast %cst_66 : f32 to vector<16x16xf32>
    %136 = arith.cmpf oeq, %89, %135 : vector<16x16xf32>
    %cst_67 = arith.constant 1.000000e+00 : f32
    %137 = vector.broadcast %cst_67 : f32 to vector<16x16xf32>
    %138 = arith.cmpf oeq, %89, %137 : vector<16x16xf32>
    %cst_68 = arith.constant 2.000000e+00 : f32
    %139 = vector.broadcast %cst_68 : f32 to vector<16x16xf32>
    %140 = arith.cmpf oeq, %89, %139 : vector<16x16xf32>
    %cst_69 = arith.constant 3.000000e+00 : f32
    %141 = vector.broadcast %cst_69 : f32 to vector<16x16xf32>
    %142 = arith.cmpf oeq, %89, %141 : vector<16x16xf32>
    %cst_70 = arith.constant 4.000000e+00 : f32
    %143 = vector.broadcast %cst_70 : f32 to vector<16x16xf32>
    %144 = arith.cmpf oeq, %89, %143 : vector<16x16xf32>
    %145 = arith.select %144, %48, %98 : vector<16x16xi1>, vector<16x16xf32>
    %146 = arith.select %142, %48, %145 : vector<16x16xi1>, vector<16x16xf32>
    %147 = arith.select %140, %104, %146 : vector<16x16xi1>, vector<16x16xf32>
    %148 = arith.select %138, %94, %147 : vector<16x16xi1>, vector<16x16xf32>
    %149 = arith.select %136, %94, %148 : vector<16x16xi1>, vector<16x16xf32>
    %150 = vector.broadcast %16 : f32 to vector<16x16xf32>
    %151 = arith.mulf %1, %150 : vector<16x16xf32>
    %cst_71 = arith.constant 0.000000e+00 : f32
    %cst_72 = arith.constant 1.000000e+00 : f32
    %152 = vector.broadcast %cst_71 : f32 to vector<16x16xf32>
    %153 = arith.maximumf %152, %151 : vector<16x16xf32>
    %154 = vector.broadcast %cst_72 : f32 to vector<16x16xf32>
    %155 = arith.minimumf %154, %153 : vector<16x16xf32>
    %156 = vector.broadcast %17 : f32 to vector<16x16xf32>
    %157 = arith.mulf %1, %156 : vector<16x16xf32>
    %cst_73 = arith.constant 1.000000e+00 : f32
    %158 = arith.subf %cst_73, %17 : f32
    %159 = arith.mulf %46, %158 : f32
    %160 = vector.broadcast %159 : f32 to vector<16x16xf32>
    %161 = arith.addf %157, %160 : vector<16x16xf32>
    %cst_74 = arith.constant 0.000000e+00 : f32
    %cst_75 = arith.constant 1.000000e+00 : f32
    %162 = vector.broadcast %cst_74 : f32 to vector<16x16xf32>
    %163 = arith.maximumf %162, %161 : vector<16x16xf32>
    %164 = vector.broadcast %cst_75 : f32 to vector<16x16xf32>
    %165 = arith.minimumf %164, %163 : vector<16x16xf32>
    %cst_76 = arith.constant 0.000000e+00 : f32
    %cst_77 = arith.constant 1.000000e+00 : f32
    %166 = vector.broadcast %cst_76 : f32 to vector<16x16xf32>
    %167 = arith.maximumf %166, %119 : vector<16x16xf32>
    %168 = vector.broadcast %cst_77 : f32 to vector<16x16xf32>
    %169 = arith.minimumf %168, %167 : vector<16x16xf32>
    %170 = vector.broadcast %19 : f32 to vector<16x16xf32>
    %171 = arith.mulf %1, %170 : vector<16x16xf32>
    %cst_78 = arith.constant 1.000000e+00 : f32
    %172 = arith.subf %cst_78, %19 : f32
    %173 = vector.broadcast %172 : f32 to vector<16x16xf32>
    %174 = arith.mulf %33, %173 : vector<16x16xf32>
    %175 = arith.addf %171, %174 : vector<16x16xf32>
    %cst_79 = arith.constant 0.000000e+00 : f32
    %cst_80 = arith.constant 1.000000e+00 : f32
    %176 = vector.broadcast %cst_79 : f32 to vector<16x16xf32>
    %177 = arith.maximumf %176, %175 : vector<16x16xf32>
    %178 = vector.broadcast %cst_80 : f32 to vector<16x16xf32>
    %179 = arith.minimumf %178, %177 : vector<16x16xf32>
    %180 = vector.broadcast %20 : f32 to vector<16x16xf32>
    %181 = arith.cmpf olt, %1, %180 : vector<16x16xf32>
    %cst_81 = arith.constant 1.000000e+00 : f32
    %182 = vector.broadcast %cst_81 : f32 to vector<16x16xf32>
    %183 = arith.subf %182, %1 : vector<16x16xf32>
    %184 = arith.select %181, %1, %183 : vector<16x16xi1>, vector<16x16xf32>
    %cst_82 = arith.constant 0.000000e+00 : f32
    %cst_83 = arith.constant 1.000000e+00 : f32
    %185 = vector.broadcast %cst_82 : f32 to vector<16x16xf32>
    %186 = arith.maximumf %185, %184 : vector<16x16xf32>
    %187 = vector.broadcast %cst_83 : f32 to vector<16x16xf32>
    %188 = arith.minimumf %187, %186 : vector<16x16xf32>
    %cst_84 = arith.constant dense<0.000000e+00> : vector<16x16xf32>
    %189 = tpu.matmul %1, %23, %cst_84 {dimension_numbers = #tpu.dot_dimension_numbers<[1], [0], [0], [1], [0, 0, 1, 1], [], []>} : vector<16x16xf32>, vector<16x16xf32>, vector<16x16xf32> -> vector<16x16xf32>
    %cst_85 = arith.constant dense<0.000000e+00> : vector<16x16xf32>
    %190 = tpu.matmul %22, %189, %cst_85 {dimension_numbers = #tpu.dot_dimension_numbers<[1], [0], [0], [1], [0, 0, 1, 1], [], []>} : vector<16x16xf32>, vector<16x16xf32>, vector<16x16xf32> -> vector<16x16xf32>
    %cst_86 = arith.constant 0.000000e+00 : f32
    %cst_87 = arith.constant 1.000000e+00 : f32
    %191 = vector.broadcast %cst_86 : f32 to vector<16x16xf32>
    %192 = arith.maximumf %191, %190 : vector<16x16xf32>
    %193 = vector.broadcast %cst_87 : f32 to vector<16x16xf32>
    %194 = arith.minimumf %193, %192 : vector<16x16xf32>
    %cst_88 = arith.constant 2.550000e+02 : f32
    %195 = vector.broadcast %cst_88 : f32 to vector<16x16xf32>
    %196 = arith.mulf %1, %195 : vector<16x16xf32>
    %197 = math.floor %196 : vector<16x16xf32>
    %cst_89 = arith.constant 0.00392156886 : f32
    %198 = vector.broadcast %cst_89 : f32 to vector<16x16xf32>
    %199 = arith.mulf %197, %198 : vector<16x16xf32>
    %cst_90 = arith.constant 0.000000e+00 : f32
    %cst_91 = arith.constant 1.000000e+00 : f32
    %200 = vector.broadcast %cst_90 : f32 to vector<16x16xf32>
    %201 = arith.maximumf %200, %199 : vector<16x16xf32>
    %202 = vector.broadcast %cst_91 : f32 to vector<16x16xf32>
    %203 = arith.minimumf %202, %201 : vector<16x16xf32>
    %cst_92 = arith.constant dense<0.000000e+00> : vector<16x16xf32>
    %204 = tpu.matmul %1, %25, %cst_92 {dimension_numbers = #tpu.dot_dimension_numbers<[1], [0], [0], [1], [0, 0, 1, 1], [], []>} : vector<16x16xf32>, vector<16x16xf32>, vector<16x16xf32> -> vector<16x16xf32>
    %cst_93 = arith.constant dense<0.000000e+00> : vector<16x16xf32>
    %205 = tpu.matmul %24, %204, %cst_93 {dimension_numbers = #tpu.dot_dimension_numbers<[1], [0], [0], [1], [0, 0, 1, 1], [], []>} : vector<16x16xf32>, vector<16x16xf32>, vector<16x16xf32> -> vector<16x16xf32>
    %cst_94 = arith.constant 4.000000e+00 : f32
    %206 = vector.broadcast %cst_94 : f32 to vector<16x16xf32>
    %207 = arith.mulf %206, %1 : vector<16x16xf32>
    %208 = arith.addf %205, %207 : vector<16x16xf32>
    %cst_95 = arith.constant 0.0769230798 : f32
    %209 = vector.broadcast %cst_95 : f32 to vector<16x16xf32>
    %210 = arith.mulf %208, %209 : vector<16x16xf32>
    %cst_96 = arith.constant 1.000000e+00 : f32
    %211 = arith.subf %cst_96, %21 : f32
    %212 = arith.subf %1, %210 : vector<16x16xf32>
    %213 = vector.broadcast %211 : f32 to vector<16x16xf32>
    %214 = arith.mulf %213, %212 : vector<16x16xf32>
    %215 = arith.addf %210, %214 : vector<16x16xf32>
    %cst_97 = arith.constant 0.000000e+00 : f32
    %cst_98 = arith.constant 1.000000e+00 : f32
    %216 = vector.broadcast %cst_97 : f32 to vector<16x16xf32>
    %217 = arith.maximumf %216, %215 : vector<16x16xf32>
    %218 = vector.broadcast %cst_98 : f32 to vector<16x16xf32>
    %219 = arith.minimumf %218, %217 : vector<16x16xf32>
    %220 = vector.broadcast %6 : f32 to vector<16x16xf32>
    %221 = arith.mulf %220, %1 : vector<16x16xf32>
    %222 = vector.broadcast %7 : f32 to vector<16x16xf32>
    %223 = arith.mulf %222, %155 : vector<16x16xf32>
    %224 = arith.addf %221, %223 : vector<16x16xf32>
    %225 = vector.broadcast %8 : f32 to vector<16x16xf32>
    %226 = arith.mulf %225, %165 : vector<16x16xf32>
    %227 = arith.addf %224, %226 : vector<16x16xf32>
    %228 = vector.broadcast %9 : f32 to vector<16x16xf32>
    %229 = arith.mulf %228, %169 : vector<16x16xf32>
    %230 = arith.addf %227, %229 : vector<16x16xf32>
    %231 = vector.broadcast %10 : f32 to vector<16x16xf32>
    %232 = arith.mulf %231, %179 : vector<16x16xf32>
    %233 = arith.addf %230, %232 : vector<16x16xf32>
    %234 = vector.broadcast %11 : f32 to vector<16x16xf32>
    %235 = arith.mulf %234, %188 : vector<16x16xf32>
    %236 = arith.addf %233, %235 : vector<16x16xf32>
    %237 = vector.broadcast %12 : f32 to vector<16x16xf32>
    %238 = arith.mulf %237, %194 : vector<16x16xf32>
    %239 = arith.addf %236, %238 : vector<16x16xf32>
    %240 = vector.broadcast %13 : f32 to vector<16x16xf32>
    %241 = arith.mulf %240, %203 : vector<16x16xf32>
    %242 = arith.addf %239, %241 : vector<16x16xf32>
    %243 = vector.broadcast %14 : f32 to vector<16x16xf32>
    %244 = arith.mulf %243, %41 : vector<16x16xf32>
    %245 = arith.addf %242, %244 : vector<16x16xf32>
    %246 = vector.broadcast %15 : f32 to vector<16x16xf32>
    %247 = arith.mulf %246, %219 : vector<16x16xf32>
    %248 = arith.addf %245, %247 : vector<16x16xf32>
    %249 = arith.cmpf oeq, %248, %248 : vector<16x16xf32>
    %250 = math.absf %248 : vector<16x16xf32>
    %cst_99 = arith.constant 3.40282347E+38 : f32
    %251 = vector.broadcast %cst_99 : f32 to vector<16x16xf32>
    %252 = arith.cmpf ole, %250, %251 : vector<16x16xf32>
    %253 = arith.andi %249, %252 : vector<16x16xi1>
    %cst_100 = arith.constant 0.000000e+00 : f32
    %254 = vector.broadcast %cst_100 : f32 to vector<16x16xf32>
    %255 = arith.select %253, %248, %254 : vector<16x16xi1>, vector<16x16xf32>
    %cst_101 = arith.constant 0.000000e+00 : f32
    %cst_102 = arith.constant 1.000000e+00 : f32
    %256 = vector.broadcast %cst_101 : f32 to vector<16x16xf32>
    %257 = arith.maximumf %256, %255 : vector<16x16xf32>
    %258 = vector.broadcast %cst_102 : f32 to vector<16x16xf32>
    %259 = arith.minimumf %258, %257 : vector<16x16xf32>
    %c0_103 = arith.constant 0 : index
    %c0_104 = arith.constant 0 : index
    %c0_105 = arith.constant 0 : index
    %c0_106 = arith.constant 0 : index
    %260 = vector.load %arg7[%c0_103, %c0_104, %c0_105, %c0_106] : memref<1x3x16x16xf32, #tpu.memory_space<vmem>>, vector<1x1x16x16xf32>
    %261 = vector.shape_cast %260 : vector<1x1x16x16xf32> to vector<16x16xf32>
    %262 = vector.shape_cast %259 : vector<16x16xf32> to vector<1x1x16x16xf32>
    tpu.vector_store %arg7[%c0_103, %c0_104, %c0_105, %c0_106], %262 {strides = array<i32>} : memref<1x3x16x16xf32, #tpu.memory_space<vmem>>, vector<1x1x16x16xf32>,
    %263 = vector.broadcast %16 : f32 to vector<16x16xf32>
    %264 = arith.mulf %3, %263 : vector<16x16xf32>
    %cst_107 = arith.constant 0.000000e+00 : f32
    %cst_108 = arith.constant 1.000000e+00 : f32
    %265 = vector.broadcast %cst_107 : f32 to vector<16x16xf32>
    %266 = arith.maximumf %265, %264 : vector<16x16xf32>
    %267 = vector.broadcast %cst_108 : f32 to vector<16x16xf32>
    %268 = arith.minimumf %267, %266 : vector<16x16xf32>
    %269 = vector.broadcast %17 : f32 to vector<16x16xf32>
    %270 = arith.mulf %3, %269 : vector<16x16xf32>
    %cst_109 = arith.constant 1.000000e+00 : f32
    %271 = arith.subf %cst_109, %17 : f32
    %272 = arith.mulf %46, %271 : f32
    %273 = vector.broadcast %272 : f32 to vector<16x16xf32>
    %274 = arith.addf %270, %273 : vector<16x16xf32>
    %cst_110 = arith.constant 0.000000e+00 : f32
    %cst_111 = arith.constant 1.000000e+00 : f32
    %275 = vector.broadcast %cst_110 : f32 to vector<16x16xf32>
    %276 = arith.maximumf %275, %274 : vector<16x16xf32>
    %277 = vector.broadcast %cst_111 : f32 to vector<16x16xf32>
    %278 = arith.minimumf %277, %276 : vector<16x16xf32>
    %cst_112 = arith.constant 0.000000e+00 : f32
    %cst_113 = arith.constant 1.000000e+00 : f32
    %279 = vector.broadcast %cst_112 : f32 to vector<16x16xf32>
    %280 = arith.maximumf %279, %134 : vector<16x16xf32>
    %281 = vector.broadcast %cst_113 : f32 to vector<16x16xf32>
    %282 = arith.minimumf %281, %280 : vector<16x16xf32>
    %283 = vector.broadcast %19 : f32 to vector<16x16xf32>
    %284 = arith.mulf %3, %283 : vector<16x16xf32>
    %cst_114 = arith.constant 1.000000e+00 : f32
    %285 = arith.subf %cst_114, %19 : f32
    %286 = vector.broadcast %285 : f32 to vector<16x16xf32>
    %287 = arith.mulf %33, %286 : vector<16x16xf32>
    %288 = arith.addf %284, %287 : vector<16x16xf32>
    %cst_115 = arith.constant 0.000000e+00 : f32
    %cst_116 = arith.constant 1.000000e+00 : f32
    %289 = vector.broadcast %cst_115 : f32 to vector<16x16xf32>
    %290 = arith.maximumf %289, %288 : vector<16x16xf32>
    %291 = vector.broadcast %cst_116 : f32 to vector<16x16xf32>
    %292 = arith.minimumf %291, %290 : vector<16x16xf32>
    %293 = vector.broadcast %20 : f32 to vector<16x16xf32>
    %294 = arith.cmpf olt, %3, %293 : vector<16x16xf32>
    %cst_117 = arith.constant 1.000000e+00 : f32
    %295 = vector.broadcast %cst_117 : f32 to vector<16x16xf32>
    %296 = arith.subf %295, %3 : vector<16x16xf32>
    %297 = arith.select %294, %3, %296 : vector<16x16xi1>, vector<16x16xf32>
    %cst_118 = arith.constant 0.000000e+00 : f32
    %cst_119 = arith.constant 1.000000e+00 : f32
    %298 = vector.broadcast %cst_118 : f32 to vector<16x16xf32>
    %299 = arith.maximumf %298, %297 : vector<16x16xf32>
    %300 = vector.broadcast %cst_119 : f32 to vector<16x16xf32>
    %301 = arith.minimumf %300, %299 : vector<16x16xf32>
    %cst_120 = arith.constant dense<0.000000e+00> : vector<16x16xf32>
    %302 = tpu.matmul %3, %23, %cst_120 {dimension_numbers = #tpu.dot_dimension_numbers<[1], [0], [0], [1], [0, 0, 1, 1], [], []>} : vector<16x16xf32>, vector<16x16xf32>, vector<16x16xf32> -> vector<16x16xf32>
    %cst_121 = arith.constant dense<0.000000e+00> : vector<16x16xf32>
    %303 = tpu.matmul %22, %302, %cst_121 {dimension_numbers = #tpu.dot_dimension_numbers<[1], [0], [0], [1], [0, 0, 1, 1], [], []>} : vector<16x16xf32>, vector<16x16xf32>, vector<16x16xf32> -> vector<16x16xf32>
    %cst_122 = arith.constant 0.000000e+00 : f32
    %cst_123 = arith.constant 1.000000e+00 : f32
    %304 = vector.broadcast %cst_122 : f32 to vector<16x16xf32>
    %305 = arith.maximumf %304, %303 : vector<16x16xf32>
    %306 = vector.broadcast %cst_123 : f32 to vector<16x16xf32>
    %307 = arith.minimumf %306, %305 : vector<16x16xf32>
    %cst_124 = arith.constant 2.550000e+02 : f32
    %308 = vector.broadcast %cst_124 : f32 to vector<16x16xf32>
    %309 = arith.mulf %3, %308 : vector<16x16xf32>
    %310 = math.floor %309 : vector<16x16xf32>
    %cst_125 = arith.constant 0.00392156886 : f32
    %311 = vector.broadcast %cst_125 : f32 to vector<16x16xf32>
    %312 = arith.mulf %310, %311 : vector<16x16xf32>
    %cst_126 = arith.constant 0.000000e+00 : f32
    %cst_127 = arith.constant 1.000000e+00 : f32
    %313 = vector.broadcast %cst_126 : f32 to vector<16x16xf32>
    %314 = arith.maximumf %313, %312 : vector<16x16xf32>
    %315 = vector.broadcast %cst_127 : f32 to vector<16x16xf32>
    %316 = arith.minimumf %315, %314 : vector<16x16xf32>
    %cst_128 = arith.constant dense<0.000000e+00> : vector<16x16xf32>
    %317 = tpu.matmul %3, %25, %cst_128 {dimension_numbers = #tpu.dot_dimension_numbers<[1], [0], [0], [1], [0, 0, 1, 1], [], []>} : vector<16x16xf32>, vector<16x16xf32>, vector<16x16xf32> -> vector<16x16xf32>
    %cst_129 = arith.constant dense<0.000000e+00> : vector<16x16xf32>
    %318 = tpu.matmul %24, %317, %cst_129 {dimension_numbers = #tpu.dot_dimension_numbers<[1], [0], [0], [1], [0, 0, 1, 1], [], []>} : vector<16x16xf32>, vector<16x16xf32>, vector<16x16xf32> -> vector<16x16xf32>
    %cst_130 = arith.constant 4.000000e+00 : f32
    %319 = vector.broadcast %cst_130 : f32 to vector<16x16xf32>
    %320 = arith.mulf %319, %3 : vector<16x16xf32>
    %321 = arith.addf %318, %320 : vector<16x16xf32>
    %cst_131 = arith.constant 0.0769230798 : f32
    %322 = vector.broadcast %cst_131 : f32 to vector<16x16xf32>
    %323 = arith.mulf %321, %322 : vector<16x16xf32>
    %cst_132 = arith.constant 1.000000e+00 : f32
    %324 = arith.subf %cst_132, %21 : f32
    %325 = arith.subf %3, %323 : vector<16x16xf32>
    %326 = vector.broadcast %324 : f32 to vector<16x16xf32>
    %327 = arith.mulf %326, %325 : vector<16x16xf32>
    %328 = arith.addf %323, %327 : vector<16x16xf32>
    %cst_133 = arith.constant 0.000000e+00 : f32
    %cst_134 = arith.constant 1.000000e+00 : f32
    %329 = vector.broadcast %cst_133 : f32 to vector<16x16xf32>
    %330 = arith.maximumf %329, %328 : vector<16x16xf32>
    %331 = vector.broadcast %cst_134 : f32 to vector<16x16xf32>
    %332 = arith.minimumf %331, %330 : vector<16x16xf32>
    %333 = vector.broadcast %6 : f32 to vector<16x16xf32>
    %334 = arith.mulf %333, %3 : vector<16x16xf32>
    %335 = vector.broadcast %7 : f32 to vector<16x16xf32>
    %336 = arith.mulf %335, %268 : vector<16x16xf32>
    %337 = arith.addf %334, %336 : vector<16x16xf32>
    %338 = vector.broadcast %8 : f32 to vector<16x16xf32>
    %339 = arith.mulf %338, %278 : vector<16x16xf32>
    %340 = arith.addf %337, %339 : vector<16x16xf32>
    %341 = vector.broadcast %9 : f32 to vector<16x16xf32>
    %342 = arith.mulf %341, %282 : vector<16x16xf32>
    %343 = arith.addf %340, %342 : vector<16x16xf32>
    %344 = vector.broadcast %10 : f32 to vector<16x16xf32>
    %345 = arith.mulf %344, %292 : vector<16x16xf32>
    %346 = arith.addf %343, %345 : vector<16x16xf32>
    %347 = vector.broadcast %11 : f32 to vector<16x16xf32>
    %348 = arith.mulf %347, %301 : vector<16x16xf32>
    %349 = arith.addf %346, %348 : vector<16x16xf32>
    %350 = vector.broadcast %12 : f32 to vector<16x16xf32>
    %351 = arith.mulf %350, %307 : vector<16x16xf32>
    %352 = arith.addf %349, %351 : vector<16x16xf32>
    %353 = vector.broadcast %13 : f32 to vector<16x16xf32>
    %354 = arith.mulf %353, %316 : vector<16x16xf32>
    %355 = arith.addf %352, %354 : vector<16x16xf32>
    %356 = vector.broadcast %14 : f32 to vector<16x16xf32>
    %357 = arith.mulf %356, %41 : vector<16x16xf32>
    %358 = arith.addf %355, %357 : vector<16x16xf32>
    %359 = vector.broadcast %15 : f32 to vector<16x16xf32>
    %360 = arith.mulf %359, %332 : vector<16x16xf32>
    %361 = arith.addf %358, %360 : vector<16x16xf32>
    %362 = arith.cmpf oeq, %361, %361 : vector<16x16xf32>
    %363 = math.absf %361 : vector<16x16xf32>
    %cst_135 = arith.constant 3.40282347E+38 : f32
    %364 = vector.broadcast %cst_135 : f32 to vector<16x16xf32>
    %365 = arith.cmpf ole, %363, %364 : vector<16x16xf32>
    %366 = arith.andi %362, %365 : vector<16x16xi1>
    %cst_136 = arith.constant 0.000000e+00 : f32
    %367 = vector.broadcast %cst_136 : f32 to vector<16x16xf32>
    %368 = arith.select %366, %361, %367 : vector<16x16xi1>, vector<16x16xf32>
    %cst_137 = arith.constant 0.000000e+00 : f32
    %cst_138 = arith.constant 1.000000e+00 : f32
    %369 = vector.broadcast %cst_137 : f32 to vector<16x16xf32>
    %370 = arith.maximumf %369, %368 : vector<16x16xf32>
    %371 = vector.broadcast %cst_138 : f32 to vector<16x16xf32>
    %372 = arith.minimumf %371, %370 : vector<16x16xf32>
    %c0_139 = arith.constant 0 : index
    %c1_140 = arith.constant 1 : index
    %c0_141 = arith.constant 0 : index
    %c0_142 = arith.constant 0 : index
    %373 = vector.load %arg7[%c0_139, %c1_140, %c0_141, %c0_142] : memref<1x3x16x16xf32, #tpu.memory_space<vmem>>, vector<1x1x16x16xf32>
    %374 = vector.shape_cast %373 : vector<1x1x16x16xf32> to vector<16x16xf32>
    %375 = vector.shape_cast %372 : vector<16x16xf32> to vector<1x1x16x16xf32>
    tpu.vector_store %arg7[%c0_139, %c1_140, %c0_141, %c0_142], %375 {strides = array<i32>} : memref<1x3x16x16xf32, #tpu.memory_space<vmem>>, vector<1x1x16x16xf32>,
    %376 = vector.broadcast %16 : f32 to vector<16x16xf32>
    %377 = arith.mulf %5, %376 : vector<16x16xf32>
    %cst_143 = arith.constant 0.000000e+00 : f32
    %cst_144 = arith.constant 1.000000e+00 : f32
    %378 = vector.broadcast %cst_143 : f32 to vector<16x16xf32>
    %379 = arith.maximumf %378, %377 : vector<16x16xf32>
    %380 = vector.broadcast %cst_144 : f32 to vector<16x16xf32>
    %381 = arith.minimumf %380, %379 : vector<16x16xf32>
    %382 = vector.broadcast %17 : f32 to vector<16x16xf32>
    %383 = arith.mulf %5, %382 : vector<16x16xf32>
    %cst_145 = arith.constant 1.000000e+00 : f32
    %384 = arith.subf %cst_145, %17 : f32
    %385 = arith.mulf %46, %384 : f32
    %386 = vector.broadcast %385 : f32 to vector<16x16xf32>
    %387 = arith.addf %383, %386 : vector<16x16xf32>
    %cst_146 = arith.constant 0.000000e+00 : f32
    %cst_147 = arith.constant 1.000000e+00 : f32
    %388 = vector.broadcast %cst_146 : f32 to vector<16x16xf32>
    %389 = arith.maximumf %388, %387 : vector<16x16xf32>
    %390 = vector.broadcast %cst_147 : f32 to vector<16x16xf32>
    %391 = arith.minimumf %390, %389 : vector<16x16xf32>
    %cst_148 = arith.constant 0.000000e+00 : f32
    %cst_149 = arith.constant 1.000000e+00 : f32
    %392 = vector.broadcast %cst_148 : f32 to vector<16x16xf32>
    %393 = arith.maximumf %392, %149 : vector<16x16xf32>
    %394 = vector.broadcast %cst_149 : f32 to vector<16x16xf32>
    %395 = arith.minimumf %394, %393 : vector<16x16xf32>
    %396 = vector.broadcast %19 : f32 to vector<16x16xf32>
    %397 = arith.mulf %5, %396 : vector<16x16xf32>
    %cst_150 = arith.constant 1.000000e+00 : f32
    %398 = arith.subf %cst_150, %19 : f32
    %399 = vector.broadcast %398 : f32 to vector<16x16xf32>
    %400 = arith.mulf %33, %399 : vector<16x16xf32>
    %401 = arith.addf %397, %400 : vector<16x16xf32>
    %cst_151 = arith.constant 0.000000e+00 : f32
    %cst_152 = arith.constant 1.000000e+00 : f32
    %402 = vector.broadcast %cst_151 : f32 to vector<16x16xf32>
    %403 = arith.maximumf %402, %401 : vector<16x16xf32>
    %404 = vector.broadcast %cst_152 : f32 to vector<16x16xf32>
    %405 = arith.minimumf %404, %403 : vector<16x16xf32>
    %406 = vector.broadcast %20 : f32 to vector<16x16xf32>
    %407 = arith.cmpf olt, %5, %406 : vector<16x16xf32>
    %cst_153 = arith.constant 1.000000e+00 : f32
    %408 = vector.broadcast %cst_153 : f32 to vector<16x16xf32>
    %409 = arith.subf %408, %5 : vector<16x16xf32>
    %410 = arith.select %407, %5, %409 : vector<16x16xi1>, vector<16x16xf32>
    %cst_154 = arith.constant 0.000000e+00 : f32
    %cst_155 = arith.constant 1.000000e+00 : f32
    %411 = vector.broadcast %cst_154 : f32 to vector<16x16xf32>
    %412 = arith.maximumf %411, %410 : vector<16x16xf32>
    %413 = vector.broadcast %cst_155 : f32 to vector<16x16xf32>
    %414 = arith.minimumf %413, %412 : vector<16x16xf32>
    %cst_156 = arith.constant dense<0.000000e+00> : vector<16x16xf32>
    %415 = tpu.matmul %5, %23, %cst_156 {dimension_numbers = #tpu.dot_dimension_numbers<[1], [0], [0], [1], [0, 0, 1, 1], [], []>} : vector<16x16xf32>, vector<16x16xf32>, vector<16x16xf32> -> vector<16x16xf32>
    %cst_157 = arith.constant dense<0.000000e+00> : vector<16x16xf32>
    %416 = tpu.matmul %22, %415, %cst_157 {dimension_numbers = #tpu.dot_dimension_numbers<[1], [0], [0], [1], [0, 0, 1, 1], [], []>} : vector<16x16xf32>, vector<16x16xf32>, vector<16x16xf32> -> vector<16x16xf32>
    %cst_158 = arith.constant 0.000000e+00 : f32
    %cst_159 = arith.constant 1.000000e+00 : f32
    %417 = vector.broadcast %cst_158 : f32 to vector<16x16xf32>
    %418 = arith.maximumf %417, %416 : vector<16x16xf32>
    %419 = vector.broadcast %cst_159 : f32 to vector<16x16xf32>
    %420 = arith.minimumf %419, %418 : vector<16x16xf32>
    %cst_160 = arith.constant 2.550000e+02 : f32
    %421 = vector.broadcast %cst_160 : f32 to vector<16x16xf32>
    %422 = arith.mulf %5, %421 : vector<16x16xf32>
    %423 = math.floor %422 : vector<16x16xf32>
    %cst_161 = arith.constant 0.00392156886 : f32
    %424 = vector.broadcast %cst_161 : f32 to vector<16x16xf32>
    %425 = arith.mulf %423, %424 : vector<16x16xf32>
    %cst_162 = arith.constant 0.000000e+00 : f32
    %cst_163 = arith.constant 1.000000e+00 : f32
    %426 = vector.broadcast %cst_162 : f32 to vector<16x16xf32>
    %427 = arith.maximumf %426, %425 : vector<16x16xf32>
    %428 = vector.broadcast %cst_163 : f32 to vector<16x16xf32>
    %429 = arith.minimumf %428, %427 : vector<16x16xf32>
    %cst_164 = arith.constant dense<0.000000e+00> : vector<16x16xf32>
    %430 = tpu.matmul %5, %25, %cst_164 {dimension_numbers = #tpu.dot_dimension_numbers<[1], [0], [0], [1], [0, 0, 1, 1], [], []>} : vector<16x16xf32>, vector<16x16xf32>, vector<16x16xf32> -> vector<16x16xf32>
    %cst_165 = arith.constant dense<0.000000e+00> : vector<16x16xf32>
    %431 = tpu.matmul %24, %430, %cst_165 {dimension_numbers = #tpu.dot_dimension_numbers<[1], [0], [0], [1], [0, 0, 1, 1], [], []>} : vector<16x16xf32>, vector<16x16xf32>, vector<16x16xf32> -> vector<16x16xf32>
    %cst_166 = arith.constant 4.000000e+00 : f32
    %432 = vector.broadcast %cst_166 : f32 to vector<16x16xf32>
    %433 = arith.mulf %432, %5 : vector<16x16xf32>
    %434 = arith.addf %431, %433 : vector<16x16xf32>
    %cst_167 = arith.constant 0.0769230798 : f32
    %435 = vector.broadcast %cst_167 : f32 to vector<16x16xf32>
    %436 = arith.mulf %434, %435 : vector<16x16xf32>
    %cst_168 = arith.constant 1.000000e+00 : f32
    %437 = arith.subf %cst_168, %21 : f32
    %438 = arith.subf %5, %436 : vector<16x16xf32>
    %439 = vector.broadcast %437 : f32 to vector<16x16xf32>
    %440 = arith.mulf %439, %438 : vector<16x16xf32>
    %441 = arith.addf %436, %440 : vector<16x16xf32>
    %cst_169 = arith.constant 0.000000e+00 : f32
    %cst_170 = arith.constant 1.000000e+00 : f32
    %442 = vector.broadcast %cst_169 : f32 to vector<16x16xf32>
    %443 = arith.maximumf %442, %441 : vector<16x16xf32>
    %444 = vector.broadcast %cst_170 : f32 to vector<16x16xf32>
    %445 = arith.minimumf %444, %443 : vector<16x16xf32>
    %446 = vector.broadcast %6 : f32 to vector<16x16xf32>
    %447 = arith.mulf %446, %5 : vector<16x16xf32>
    %448 = vector.broadcast %7 : f32 to vector<16x16xf32>
    %449 = arith.mulf %448, %381 : vector<16x16xf32>
    %450 = arith.addf %447, %449 : vector<16x16xf32>
    %451 = vector.broadcast %8 : f32 to vector<16x16xf32>
    %452 = arith.mulf %451, %391 : vector<16x16xf32>
    %453 = arith.addf %450, %452 : vector<16x16xf32>
    %454 = vector.broadcast %9 : f32 to vector<16x16xf32>
    %455 = arith.mulf %454, %395 : vector<16x16xf32>
    %456 = arith.addf %453, %455 : vector<16x16xf32>
    %457 = vector.broadcast %10 : f32 to vector<16x16xf32>
    %458 = arith.mulf %457, %405 : vector<16x16xf32>
    %459 = arith.addf %456, %458 : vector<16x16xf32>
    %460 = vector.broadcast %11 : f32 to vector<16x16xf32>
    %461 = arith.mulf %460, %414 : vector<16x16xf32>
    %462 = arith.addf %459, %461 : vector<16x16xf32>
    %463 = vector.broadcast %12 : f32 to vector<16x16xf32>
    %464 = arith.mulf %463, %420 : vector<16x16xf32>
    %465 = arith.addf %462, %464 : vector<16x16xf32>
    %466 = vector.broadcast %13 : f32 to vector<16x16xf32>
    %467 = arith.mulf %466, %429 : vector<16x16xf32>
    %468 = arith.addf %465, %467 : vector<16x16xf32>
    %469 = vector.broadcast %14 : f32 to vector<16x16xf32>
    %470 = arith.mulf %469, %41 : vector<16x16xf32>
    %471 = arith.addf %468, %470 : vector<16x16xf32>
    %472 = vector.broadcast %15 : f32 to vector<16x16xf32>
    %473 = arith.mulf %472, %445 : vector<16x16xf32>
    %474 = arith.addf %471, %473 : vector<16x16xf32>
    %475 = arith.cmpf oeq, %474, %474 : vector<16x16xf32>
    %476 = math.absf %474 : vector<16x16xf32>
    %cst_171 = arith.constant 3.40282347E+38 : f32
    %477 = vector.broadcast %cst_171 : f32 to vector<16x16xf32>
    %478 = arith.cmpf ole, %476, %477 : vector<16x16xf32>
    %479 = arith.andi %475, %478 : vector<16x16xi1>
    %cst_172 = arith.constant 0.000000e+00 : f32
    %480 = vector.broadcast %cst_172 : f32 to vector<16x16xf32>
    %481 = arith.select %479, %474, %480 : vector<16x16xi1>, vector<16x16xf32>
    %cst_173 = arith.constant 0.000000e+00 : f32
    %cst_174 = arith.constant 1.000000e+00 : f32
    %482 = vector.broadcast %cst_173 : f32 to vector<16x16xf32>
    %483 = arith.maximumf %482, %481 : vector<16x16xf32>
    %484 = vector.broadcast %cst_174 : f32 to vector<16x16xf32>
    %485 = arith.minimumf %484, %483 : vector<16x16xf32>
    %c0_175 = arith.constant 0 : index
    %c2_176 = arith.constant 2 : index
    %c0_177 = arith.constant 0 : index
    %c0_178 = arith.constant 0 : index
    %486 = vector.load %arg7[%c0_175, %c2_176, %c0_177, %c0_178] : memref<1x3x16x16xf32, #tpu.memory_space<vmem>>, vector<1x1x16x16xf32>
    %487 = vector.shape_cast %486 : vector<1x1x16x16xf32> to vector<16x16xf32>
    %488 = vector.shape_cast %485 : vector<16x16xf32> to vector<1x1x16x16xf32>
    tpu.vector_store %arg7[%c0_175, %c2_176, %c0_177, %c0_178], %488 {strides = array<i32>} : memref<1x3x16x16xf32, #tpu.memory_space<vmem>>, vector<1x1x16x16xf32>,
    return
  }
  func.func @transform_0(%arg0: i32) -> (i32, i32) {
    %c0_i32 = arith.constant 0 : i32
    %c0_i32_0 = arith.constant 0 : i32
    %c0_i32_1 = arith.constant 0 : i32
    return %c0_i32, %c0_i32_0 : i32, i32
  }
  func.func @transform_1(%arg0: i32) -> (i32, i32, i32, i32) {
    %c0_i32 = arith.constant 0 : i32
    %c0_i32_0 = arith.constant 0 : i32
    %c0_i32_1 = arith.constant 0 : i32
    %c0_i32_2 = arith.constant 0 : i32
    return %arg0, %c0_i32, %c0_i32_0, %c0_i32_1 : i32, i32, i32, i32
  }
  func.func @transform_2(%arg0: i32) -> (i32, i32) {
    %c0_i32 = arith.constant 0 : i32
    %c0_i32_0 = arith.constant 0 : i32
    %c0_i32_1 = arith.constant 0 : i32
    return %c0_i32, %c0_i32_0 : i32, i32
  }
  func.func @transform_3(%arg0: i32) -> (i32, i32) {
    %c0_i32 = arith.constant 0 : i32
    %c0_i32_0 = arith.constant 0 : i32
    %c0_i32_1 = arith.constant 0 : i32
    return %c0_i32, %c0_i32_0 : i32, i32
  }
  func.func @transform_4(%arg0: i32) -> (i32, i32) {
    %c0_i32 = arith.constant 0 : i32
    %c0_i32_0 = arith.constant 0 : i32
    %c0_i32_1 = arith.constant 0 : i32
    return %c0_i32, %c0_i32_0 : i32, i32
  }
  func.func @transform_5(%arg0: i32) -> (i32, i32) {
    %c0_i32 = arith.constant 0 : i32
    %c0_i32_0 = arith.constant 0 : i32
    %c0_i32_1 = arith.constant 0 : i32
    return %c0_i32, %c0_i32_0 : i32, i32
  }
  func.func @transform_6(%arg0: i32) -> (i32, i32, i32, i32) {
    %c0_i32 = arith.constant 0 : i32
    %c0_i32_0 = arith.constant 0 : i32
    %c0_i32_1 = arith.constant 0 : i32
    %c0_i32_2 = arith.constant 0 : i32
    return %arg0, %c0_i32, %c0_i32_0, %c0_i32_1 : i32, i32, i32, i32
  }
}

</mosaic_0001>

<llo_original>
// kernel: aug_policy_forward.2
$region0: #{aug_policy_forward.2}
  #allocation0 [shape = 'u32[]', space=smem, size = 0x4, offset = 0x4, fixed_abs, tag = 'smem constant byte address 0x4 - core index']
  #allocation1 [shape = 'u32[72,128]{1,0:T(1,128)}', space=vmem, size = 0x9000, scoped, tag = 'internal scratch']
  %s0 = inlined_call_operand.vmem [shape: f32[1,16], index: 0, kind: input, shape index: {}]
  %s1 = inlined_call_operand.vmem [shape: f32[2,3,16,16], index: 1, kind: input, shape index: {}]
  %s2 = inlined_call_operand.vmem [shape: f32[16,16], index: 2, kind: input, shape index: {}]
  %s3 = inlined_call_operand.vmem [shape: f32[16,16], index: 3, kind: input, shape index: {}]
  %s4 = inlined_call_operand.vmem [shape: f32[16,16], index: 4, kind: input, shape index: {}]
  %s5 = inlined_call_operand.vmem [shape: f32[16,16], index: 5, kind: input, shape index: {}]
  %s6 = inlined_call_operand.vmem [shape: f32[2,3,16,16], index: 6, kind: output, shape index: {}]
  %s7 = sld [smem:[#allocation0]]
  $region61: #{aug_policy_forward.2} parent=0
    _
  %s9 = ssub.s32 1, %s7
  %s10 = scalar_select 0, %s9, %s7
  $region1: #{aug_policy_forward.2} parent=0
    #allocation2 [shape = 'u8[512]{0}', space=smem, size = 0x200, scoped, tag = 'input window, operand 0, single buffered']
    #allocation3 [shape = 's32[2]{0}', space=sflag, size = 0x8, scoped, tag = 'scoped memory for aug_policy_forward.2']
    %11 = vsyncpa [#allocation3], 0
    loop: start=0, step=1, limit=4
    $region2: #{aug_policy_forward.2} parent=1 // loop_pre_header
      _
    $region3: #{aug_policy_forward.2} parent=1 // loop_header
      %s13 = sphi 0, %s17
      %p14 = scmp.ge.s32.totalorder %s13, 4
      %s21 = sphi 0, %s21
      %s23 = sphi 0, %s21
      %s24 = sphi 0, %s23
      %s38 = sphi 0, %s24
      %s44 = sphi 0, %s46
      %s47 = sphi 0, %s44
      %s48 = sphi 0, %s47
      %s64 = sphi 0, %s48
      %s68 = sphi 0, %s68
      %s70 = sphi 0, %s68
      %s71 = sphi 0, %s70
      %s85 = sphi 0, %s71
      %s89 = sphi 0, %s89
      %s91 = sphi 0, %s89
      %s92 = sphi 0, %s91
      %s106 = sphi 0, %s92
      %s110 = sphi 0, %s110
      %s112 = sphi 0, %s110
      %s113 = sphi 0, %s112
      %s127 = sphi 0, %s113
      %s131 = sphi 0, %s131
      %s133 = sphi 0, %s131
      %s134 = sphi 0, %s133
      %s148 = sphi 0, %s134
      %s154 = sphi 0, %s156
      %s157 = sphi 0, %s154
      %s158 = sphi 0, %s157
      %s174 = sphi 0, %s158
    $region4: #{aug_policy_forward.2} parent=1 // loop_header_branch
      %16 = sbr.rel (%p14) target = $region8
    $region5: #{aug_policy_forward.2} parent=1 // loop_body
      %s18 = ssub.s32 %s13, 1
      %s19 = ssub.s32 %s13, 2
      %s20 = sadd.s32 %s13, 1
      %s22 = sadd.s32 %s21, 1
      %p25 = scmp.eq.s32.totalorder %s13, 1
      %p26 = scmp.ne.s32.totalorder %s21, %s23
      %p27 = scmp.eq.s32.totalorder %s13, 0
      %p28 = por %p26, %p27
      %p29 = scmp.ne.s32.totalorder %s21, %s23
      %p30 = scmp.eq.s32.totalorder %s18, 1
      %p31 = por %p29, %p30
      %p32 = scmp.ne.s32.totalorder %s23, %s24
      %p33 = scmp.eq.s32.totalorder %s18, 0
      %p34 = por %p32, %p33
      %p35 = scmp.ne.s32.totalorder %s23, %s24
      %p36 = scmp.eq.s32.totalorder %s19, 1
      %p37 = por %p35, %p36
      %p39 = scmp.ne.s32.totalorder %s24, %s38
      %p40 = scmp.eq.s32.totalorder %s19, 0
      %p41 = por %p39, %p40
      %s42 = ssub.s32 %s13, %s20
      %p43 = scmp.eq.s32.totalorder %s42, 0
      %s45 = sadd.s32 %s44, 1
      %s46 = scalar_select %p43, %s44, %s45
      %p49 = pneg %p43
      %p50 = scmp.eq.s32.totalorder %s13, 1
      %p51 = por %p49, %p50
      %p52 = scmp.ne.s32.totalorder %s44, %s47
      %p53 = scmp.eq.s32.totalorder %s13, 0
      %p54 = por %p52, %p53
      %p55 = scmp.ne.s32.totalorder %s44, %s47
      %p56 = scmp.eq.s32.totalorder %s18, 1
      %p57 = por %p55, %p56
      %p58 = scmp.ne.s32.totalorder %s47, %s48
      %p59 = scmp.eq.s32.totalorder %s18, 0
      %p60 = por %p58, %p59
      %p61 = scmp.ne.s32.totalorder %s47, %s48
      %p62 = scmp.eq.s32.totalorder %s19, 1
      %p63 = por %p61, %p62
      %p65 = scmp.ne.s32.totalorder %s48, %s64
      %p66 = scmp.eq.s32.totalorder %s19, 0
      %p67 = por %p65, %p66
      %s69 = sadd.s32 %s68, 1
      %p72 = scmp.eq.s32.totalorder %s13, 1
      %p73 = scmp.ne.s32.totalorder %s68, %s70
      %p74 = scmp.eq.s32.totalorder %s13, 0
      %p75 = por %p73, %p74
      %p76 = scmp.ne.s32.totalorder %s68, %s70
      %p77 = scmp.eq.s32.totalorder %s18, 1
      %p78 = por %p76, %p77
      %p79 = scmp.ne.s32.totalorder %s70, %s71
      %p80 = scmp.eq.s32.totalorder %s18, 0
      %p81 = por %p79, %p80
      %p82 = scmp.ne.s32.totalorder %s70, %s71
      %p83 = scmp.eq.s32.totalorder %s19, 1
      %p84 = por %p82, %p83
      %p86 = scmp.ne.s32.totalorder %s71, %s85
      %p87 = scmp.eq.s32.totalorder %s19, 0
      %p88 = por %p86, %p87
      %s90 = sadd.s32 %s89, 1
      %p93 = scmp.eq.s32.totalorder %s13, 1
      %p94 = scmp.ne.s32.totalorder %s89, %s91
      %p95 = scmp.eq.s32.totalorder %s13, 0
      %p96 = por %p94, %p95
      %p97 = scmp.ne.s32.totalorder %s89, %s91
      %p98 = scmp.eq.s32.totalorder %s18, 1
      %p99 = por %p97, %p98
      %p100 = scmp.ne.s32.totalorder %s91, %s92
      %p101 = scmp.eq.s32.totalorder %s18, 0
      %p102 = por %p100, %p101
      %p103 = scmp.ne.s32.totalorder %s91, %s92
      %p104 = scmp.eq.s32.totalorder %s19, 1
      %p105 = por %p103, %p104
      %p107 = scmp.ne.s32.totalorder %s92, %s106
      %p108 = scmp.eq.s32.totalorder %s19, 0
      %p109 = por %p107, %p108
      %s111 = sadd.s32 %s110, 1
      %p114 = scmp.eq.s32.totalorder %s13, 1
      %p115 = scmp.ne.s32.totalorder %s110, %s112
      %p116 = scmp.eq.s32.totalorder %s13, 0
      %p117 = por %p115, %p116
      %p118 = scmp.ne.s32.totalorder %s110, %s112
      %p119 = scmp.eq.s32.totalorder %s18, 1
      %p120 = por %p118, %p119
      %p121 = scmp.ne.s32.totalorder %s112, %s113
      %p122 = scmp.eq.s32.totalorder %s18, 0
      %p123 = por %p121, %p122
      %p124 = scmp.ne.s32.totalorder %s112, %s113
      %p125 = scmp.eq.s32.totalorder %s19, 1
      %p126 = por %p124, %p125
      %p128 = scmp.ne.s32.totalorder %s113, %s127
      %p129 = scmp.eq.s32.totalorder %s19, 0
      %p130 = por %p128, %p129
      %s132 = sadd.s32 %s131, 1
      %p135 = scmp.eq.s32.totalorder %s13, 1
      %p136 = scmp.ne.s32.totalorder %s131, %s133
      %p137 = scmp.eq.s32.totalorder %s13, 0
      %p138 = por %p136, %p137
      %p139 = scmp.ne.s32.totalorder %s131, %s133
      %p140 = scmp.eq.s32.totalorder %s18, 1
      %p141 = por %p139, %p140
      %p142 = scmp.ne.s32.totalorder %s133, %s134
      %p143 = scmp.eq.s32.totalorder %s18, 0
      %p144 = por %p142, %p143
      %p145 = scmp.ne.s32.totalorder %s133, %s134
      %p146 = scmp.eq.s32.totalorder %s19, 1
      %p147 = por %p145, %p146
      %p149 = scmp.ne.s32.totalorder %s134, %s148
      %p150 = scmp.eq.s32.totalorder %s19, 0
      %p151 = por %p149, %p150
      %s152 = ssub.s32 %s13, %s20
      %p153 = scmp.eq.s32.totalorder %s152, 0
      %s155 = sadd.s32 %s154, 1
      %s156 = scalar_select %p153, %s154, %s155
      %p159 = pneg %p153
      %p160 = scmp.eq.s32.totalorder %s13, 1
      %p161 = por %p159, %p160
      %p162 = scmp.ne.s32.totalorder %s154, %s157
      %p163 = scmp.eq.s32.totalorder %s13, 0
      %p164 = por %p162, %p163
      %p165 = scmp.ne.s32.totalorder %s154, %s157
      %p166 = scmp.eq.s32.totalorder %s18, 1
      %p167 = por %p165, %p166
      %p168 = scmp.ne.s32.totalorder %s157, %s158
      %p169 = scmp.eq.s32.totalorder %s18, 0
      %p170 = por %p168, %p169
      %p171 = scmp.ne.s32.totalorder %s157, %s158
      %p172 = scmp.eq.s32.totalorder %s19, 1
      %p173 = por %p171, %p172
      %p175 = scmp.ne.s32.totalorder %s158, %s174
      %p176 = scmp.eq.s32.totalorder %s19, 0
      %p177 = por %p175, %p176
      %p178 = scmp.le.s32.totalorder 1, %s13
      %p179 = scmp.lt.s32.totalorder %s13, 3
      %p180 = pnand %p178, %p179
      %p181 = pneg %p180
      // Predicated region
      $region9: #{aug_policy_forward.2} parent=5 // pred_check
        _
      $region10: #{aug_policy_forward.2} parent=5 // pred_check_branch
        %183 = sbr.rel (%p180) target = $region12
      $region11: #{aug_policy_forward.2} parent=5 // pred_region
        %s184 = ssub.s32 %s13, 1
        // Predicated region
        $region13: #{aug_policy_forward.2} parent=11 // pred_check
          %p185 = pneg %p34
        $region14: #{aug_policy_forward.2} parent=11 // pred_check_branch
          %187 = sbr.rel (%p185) target = $region16
        $region15: #{aug_policy_forward.2} parent=11 // pred_region
          %189 = vsyncadd [#allocation3], 0
          %s191 = sshll.u32 %s0, 4
          %s192 = int_to_ptr.vmem [resolvable:$true] %s191
          %194 = dma.vmem_to_smem %s192, 16, [#allocation2], [#allocation3]
        $region16: #{aug_policy_forward.2} parent=11 // pred_fallthru
          _
        // Predicated region
        $region17: #{aug_policy_forward.2} parent=11 // pred_check
          %p195 = pneg %p81
        $region18: #{aug_policy_forward.2} parent=11 // pred_check_branch
          %197 = sbr.rel (%p195) target = $region20
        $region19: #{aug_policy_forward.2} parent=11 // pred_region
          _
        $region20: #{aug_policy_forward.2} parent=11 // pred_fallthru
          _
        // Predicated region
        $region21: #{aug_policy_forward.2} parent=11 // pred_check
          %p198 = pneg %p102
        $region22: #{aug_policy_forward.2} parent=11 // pred_check_branch
          %200 = sbr.rel (%p198) target = $region24
        $region23: #{aug_policy_forward.2} parent=11 // pred_region
          _
        $region24: #{aug_policy_forward.2} parent=11 // pred_fallthru
          _
        // Predicated region
        $region25: #{aug_policy_forward.2} parent=11 // pred_check
          %p201 = pneg %p123
        $region26: #{aug_policy_forward.2} parent=11 // pred_check_branch
          %203 = sbr.rel (%p201) target = $region28
        $region27: #{aug_policy_forward.2} parent=11 // pred_region
          _
        $region28: #{aug_policy_forward.2} parent=11 // pred_fallthru
          _
        // Predicated region
        $region29: #{aug_policy_forward.2} parent=11 // pred_check
          %p204 = pneg %p144
        $region30: #{aug_policy_forward.2} parent=11 // pred_check_branch
          %206 = sbr.rel (%p204) target = $region32
        $region31: #{aug_policy_forward.2} parent=11 // pred_region
          _
        $region32: #{aug_policy_forward.2} parent=11 // pred_fallthru
          _
      $region12: #{aug_policy_forward.2} parent=5 // pred_fallthru
        _
      %p207 = scmp.lt.s32.totalorder %s13, 2
      // Predicated region
      $region33: #{aug_policy_forward.2} parent=5 // pred_check
        %p208 = pneg %p207
      $region34: #{aug_policy_forward.2} parent=5 // pred_check_branch
        %210 = sbr.rel (%p208) target = $region36
      $region35: #{aug_policy_forward.2} parent=5 // pred_region
        // Predicated region
        $region37: #{aug_policy_forward.2} parent=35 // pred_check
          %p211 = pneg %p54
        $region38: #{aug_policy_forward.2} parent=35 // pred_check_branch
          %213 = sbr.rel (%p211) target = $region40
        $region39: #{aug_policy_forward.2} parent=35 // pred_region
          %p214 = scmp.lt.s32.totalorder %s13, 1
          %s215 = scalar_select %p214, %s13, 1
          %s216 = smul.addr %s215, 6
          %s217 = smul.addr %s216, 8
          %s218 = scalar_lea.vmem %s1, %s217
        $region40: #{aug_policy_forward.2} parent=35 // pred_fallthru
          _
      $region36: #{aug_policy_forward.2} parent=5 // pred_fallthru
        _
      %p219 = scmp.le.s32.totalorder 1, %s13
      %p220 = scmp.lt.s32.totalorder %s13, 3
      %p221 = pnand %p219, %p220
      %p222 = pneg %p221
      // Predicated region
      $region41: #{aug_policy_forward.2} parent=5 // pred_check
        _
      $region42: #{aug_policy_forward.2} parent=5 // pred_check_branch
        %224 = sbr.rel (%p221) target = $region44
      $region43: #{aug_policy_forward.2} parent=5 // pred_region
        %s225 = ssub.s32 %s13, 1
        // Predicated region
        $region45: #{aug_policy_forward.2} parent=43 // pred_check
          %p226 = pneg %p34
        $region46: #{aug_policy_forward.2} parent=43 // pred_check_branch
          %228 = sbr.rel (%p226) target = $region48
        $region47: #{aug_policy_forward.2} parent=43 // pred_region
          %230 = dma.done [#allocation3], 16
        $region48: #{aug_policy_forward.2} parent=43 // pred_fallthru
          _
        %231 = sfence
        %p232 = pneg %p34
        %p233 = pneg %p31
        %p234 = scmp.lt.s32.totalorder %s18, 1
        %s235 = scalar_select %p234, %s18, 1
        %s236 = smul.addr %s235, 6
        %s237 = smul.addr %s236, 8
        %s238 = scalar_lea.vmem %s1, %s237
        %p239 = pneg %p60
        %p240 = pneg %p57
        %p241 = pneg %p81
        %p242 = pneg %p78
        %p243 = pneg %p102
        %p244 = pneg %p99
        %p245 = pneg %p123
        %p246 = pneg %p120
        %p247 = pneg %p144
        %p248 = pneg %p141
        %p249 = pneg %p170
        %p250 = pneg %p167
        %p251 = scmp.lt.s32.totalorder %s18, 1
        %s252 = scalar_select %p251, %s18, 1
        %s253 = smul.addr %s252, 6
        %s254 = smul.addr %s253, 8
        %s255 = scalar_lea.vmem %s6, %s254
        %p256 = scmp.lt.s32.totalorder %s18, 1
        %s257 = scalar_select %p256, %s18, 1
        %s258 = smul.addr %s257, 6
        %s259 = smul.addr %s258, 8
        %s260 = scalar_lea.vmem %s1, %s259
        %p261 = scmp.lt.s32.totalorder %s18, 1
        %s262 = scalar_select %p261, %s18, 1
        %s263 = smul.addr %s262, 6
        %s264 = smul.addr %s263, 8
        %s265 = scalar_lea.vmem %s6, %s264
        %v266 = vld [vmem:[%s260] sm:$0xff]
        %v267 = vld [vmem:[%s260 + $0x8] sm:$0xff]
        %s268 = scalar_lea.vmem %s260, 16
        %v269 = vld [vmem:[%s268] sm:$0xff]
        %v270 = vld [vmem:[%s268 + $0x8] sm:$0xff]
        %s271 = scalar_lea.vmem %s260, 32
        %v272 = vld [vmem:[%s271] sm:$0xff]
        %v273 = vld [vmem:[%s271 + $0x8] sm:$0xff]
        %s274 = sld [smem:[#allocation2]]
        %s275 = sld [smem:[#allocation2 + $0x1]]
        %s276 = sld [smem:[#allocation2 + $0x2]]
        %s277 = sld [smem:[#allocation2 + $0x3]]
        %s278 = sld [smem:[#allocation2 + $0x4]]
        %s279 = sld [smem:[#allocation2 + $0x5]]
        %s280 = sld [smem:[#allocation2 + $0x6]]
        %s281 = sld [smem:[#allocation2 + $0x7]]
        %s282 = sld [smem:[#allocation2 + $0x8]]
        %s283 = sld [smem:[#allocation2 + $0x9]]
        %s284 = sld [smem:[#allocation2 + $0xa]]
        %s285 = sld [smem:[#allocation2 + $0xb]]
        %s286 = sld [smem:[#allocation2 + $0xc]]
        %s287 = sld [smem:[#allocation2 + $0xd]]
        %s288 = sld [smem:[#allocation2 + $0xe]]
        %s289 = sld [smem:[#allocation2 + $0xf]]
        %v290 = vld [vmem:[%s2] sm:$0xff]
        %v291 = vld [vmem:[%s2 + $0x8] sm:$0xff]
        %v292 = vld [vmem:[%s3] sm:$0xff]
        %v293 = vld [vmem:[%s3 + $0x8] sm:$0xff]
        %v294 = vld [vmem:[%s4] sm:$0xff]
        %v295 = vld [vmem:[%s4 + $0x8] sm:$0xff]
        %v296 = vld [vmem:[%s5] sm:$0xff]
        %v297 = vld [vmem:[%s5 + $0x8] sm:$0xff]
        %v298 = vmul.f32 %v266, 0.299
        %v299 = vmul.f32 %v267, 0.299
        %v300 = vmul.f32 %v269, 0.587
        %v301 = vmul.f32 %v270, 0.587
        %v302 = vadd.f32 %v298, %v300
        %v303 = vadd.f32 %v299, %v301
        %v304 = vmul.f32 %v272, 0.114
        %v305 = vmul.f32 %v273, 0.114
        %v306 = vadd.f32 %v302, %v304
        %v307 = vadd.f32 %v303, %v305
        %v308 = vmul.f32 %v272, 0.11
        %v309 = vmul.f32 %v273, 0.11
        %v310 = vadd.f32 %v302, %v308
        %v311 = vadd.f32 %v303, %v309
        %vm312 = vcmask 130048
        %v313 = vsel %vm312, %v306, 0.0
        %v314 = vsel %vm312, %v307, 0.0
        %v315 = vadd.f32 %v313, %v314
        %316 = vadd.xlane.f32.xlu0 %v315
        %v317 = vpop.xlane.xlu0 %316
        %v318 = vrot.slane %v317, 4
        %v319 = vadd.f32 %v317, %v318
        %v320 = vrot.slane %v319, 2
        %v321 = vadd.f32 %v319, %v320
        %v322 = vrot.slane %v321, 1
        %v323 = vadd.f32 %v321, %v322
        %s324 = vtos %v323
        %s325 = smul.f32 %s324, 0.00390625
        %v326 = vmax.f32 %v266, %v269
        %v327 = vmax.f32 %v267, %v270
        %v328 = vmax.f32 %v326, %v272
        %v329 = vmax.f32 %v327, %v273
        %v330 = vmin.f32 %v266, %v269
        %v331 = vmin.f32 %v267, %v270
        %v332 = vmin.f32 %v330, %v272
        %v333 = vmin.f32 %v331, %v273
        %v334 = vsub.f32 %v328, %v332
        %v335 = vsub.f32 %v329, %v333
        %v336 = vadd.f32 %v328, 1e-08
        %v337 = vadd.f32 %v329, 1e-08
        %v338 = vrcp.pop %v336
        %v339 = vmul.f32 %v336, %v338
        %v340 = vsub.f32 1.0, %v339
        %v341 = vmul.f32 %v338, %v340
        %v342 = vadd.f32 %v338, %v341
        %vm343 = vweird.f32 %v336
        %vm344 = vweird.f32 %v338
        %vm345 = vmor %vm343, %vm344
        %v346 = vsel %vm345, %v338, %v342
        %v347 = vand.u32 2147483647, %v336
        %vm348 = vcmp.eq.f32.partialorder %v347, 8.507059e+37
        %v349 = vand.u32 %v336, 2147483648
        %v350 = vor.u32 1.1754944e-38, %v349
        %v351 = vsel %vm348, %v350, %v346
        %v352 = vmul.f32 %v334, %v351
        %v353 = vrcp.pop %v337
        %v354 = vmul.f32 %v337, %v353
        %v355 = vsub.f32 1.0, %v354
        %v356 = vmul.f32 %v353, %v355
        %v357 = vadd.f32 %v353, %v356
        %vm358 = vweird.f32 %v337
        %vm359 = vweird.f32 %v353
        %vm360 = vmor %vm358, %vm359
        %v361 = vsel %vm360, %v353, %v357
        %v362 = vand.u32 2147483647, %v337
        %vm363 = vcmp.eq.f32.partialorder %v362, 8.507059e+37
        %v364 = vand.u32 %v337, 2147483648
        %v365 = vor.u32 1.1754944e-38, %v364
        %v366 = vsel %vm363, %v365, %v361
        %v367 = vmul.f32 %v335, %v366
        %vm368 = vcmp.eq.f32.partialorder %v334, 0.0
        %vm369 = vcmp.eq.f32.partialorder %v335, 0.0
        %v370 = vsel %vm368, 1.0, %v334
        %v371 = vsel %vm369, 1.0, %v335
        %vm372 = vcmp.ge.f32.partialorder %v266, %v269
        %vm373 = vcmp.ge.f32.partialorder %v267, %v270
        %vm374 = vcmp.ge.f32.partialorder %v266, %v272
        %vm375 = vcmp.ge.f32.partialorder %v267, %v273
        %vm376 = vmand %vm372, %vm374
        %vm377 = vmand %vm373, %vm375
        %vm378 = vmxor %vm376, 1
        %vm379 = vmxor %vm377, 1
        %vm380 = vcmp.ge.f32.partialorder %v269, %v272
        %vm381 = vcmp.ge.f32.partialorder %v270, %v273
        %vm382 = vmand %vm378, %vm380
        %vm383 = vmand %vm379, %vm381
        %v384 = vsub.f32 %v269, %v272
        %v385 = vsub.f32 %v270, %v273
        %v386 = vsub.f32 %v272, %v266
        %v387 = vsub.f32 %v273, %v267
        %v388 = vmul.f32 %v334, 2.0
        %v389 = vmul.f32 %v335, 2.0
        %v390 = vadd.f32 %v386, %v388
        %v391 = vadd.f32 %v387, %v389
        %v392 = vsub.f32 %v266, %v269
        %v393 = vsub.f32 %v267, %v270
        %v394 = vmul.f32 %v334, 4.0
        %v395 = vmul.f32 %v335, 4.0
        %v396 = vadd.f32 %v392, %v394
        %v397 = vadd.f32 %v393, %v395
        %v398 = vsel %vm382, %v390, %v396
        %v399 = vsel %vm383, %v391, %v397
        %v400 = vsel %vm376, %v384, %v398
        %v401 = vsel %vm377, %v385, %v399
        %v402 = vrcp.pop %v370
        %v403 = vmul.f32 %v370, %v402
        %v404 = vsub.f32 1.0, %v403
        %v405 = vmul.f32 %v402, %v404
        %v406 = vadd.f32 %v402, %v405
        %vm407 = vweird.f32 %v370
        %vm408 = vweird.f32 %v402
        %vm409 = vmor %vm407, %vm408
        %v410 = vsel %vm409, %v402, %v406
        %v411 = vand.u32 2147483647, %v370
        %vm412 = vcmp.eq.f32.partialorder %v411, 8.507059e+37
        %v413 = vand.u32 %v370, 2147483648
        %v414 = vor.u32 1.1754944e-38, %v413
        %v415 = vsel %vm412, %v414, %v410
        %v416 = vmul.f32 %v400, %v415
        %v417 = vrcp.pop %v371
        %v418 = vmul.f32 %v371, %v417
        %v419 = vsub.f32 1.0, %v418
        %v420 = vmul.f32 %v417, %v419
        %v421 = vadd.f32 %v417, %v420
        %vm422 = vweird.f32 %v371
        %vm423 = vweird.f32 %v417
        %vm424 = vmor %vm422, %vm423
        %v425 = vsel %vm424, %v417, %v421
        %v426 = vand.u32 2147483647, %v371
        %vm427 = vcmp.eq.f32.partialorder %v426, 8.507059e+37
        %v428 = vand.u32 %v371, 2147483648
        %v429 = vor.u32 1.1754944e-38, %v428
        %v430 = vsel %vm427, %v429, %v425
        %v431 = vmul.f32 %v401, %v430
        %v432 = vmul.f32 %v416, 0.16666667
        %v433 = vmul.f32 %v431, 0.16666667
        %v434 = vfloor.f32 %v432
        %v435 = vfloor.f32 %v433
        %v436 = vsub.f32 %v432, %v434
        %v437 = vsub.f32 %v433, %v435
        %v438 = vstv %s286
        %v439 = vadd.f32 %v436, %v438
        %v440 = vadd.f32 %v437, %v438
        %v441 = vfloor.f32 %v439
        %v442 = vfloor.f32 %v440
        %v443 = vsub.f32 %v439, %v441
        %v444 = vsub.f32 %v440, %v442
        %v445 = vmul.f32 %v443, 6.0
        %v446 = vmul.f32 %v444, 6.0
        %v447 = vfloor.f32 %v445
        %v448 = vfloor.f32 %v446
        %v449 = vmin.f32 %v447, 5.0
        %v450 = vmin.f32 %v448, 5.0
        %v451 = vsub.f32 %v445, %v447
        %v452 = vsub.f32 %v446, %v448
        %v453 = vsub.f32 1.0, %v352
        %v454 = vsub.f32 1.0, %v367
        %v455 = vmul.f32 %v328, %v453
        %v456 = vmul.f32 %v329, %v454
        %v457 = vmul.f32 %v451, %v352
        %v458 = vmul.f32 %v452, %v367
        %v459 = vsub.f32 1.0, %v457
        %v460 = vsub.f32 1.0, %v458
        %v461 = vmul.f32 %v328, %v459
        %v462 = vmul.f32 %v329, %v460
        %v463 = vsub.f32 1.0, %v451
        %v464 = vsub.f32 1.0, %v452
        %v465 = vmul.f32 %v463, %v352
        %v466 = vmul.f32 %v464, %v367
        %v467 = vsub.f32 1.0, %v465
        %v468 = vsub.f32 1.0, %v466
        %v469 = vmul.f32 %v328, %v467
        %v470 = vmul.f32 %v329, %v468
        %vm471 = vcmp.eq.f32.partialorder %v449, 0.0
        %vm472 = vcmp.eq.f32.partialorder %v450, 0.0
        %vm473 = vcmp.eq.f32.partialorder %v449, 1.0
        %vm474 = vcmp.eq.f32.partialorder %v450, 1.0
        %vm475 = vcmp.eq.f32.partialorder %v449, 2.0
        %vm476 = vcmp.eq.f32.partialorder %v450, 2.0
        %vm477 = vcmp.eq.f32.partialorder %v449, 3.0
        %vm478 = vcmp.eq.f32.partialorder %v450, 3.0
        %vm479 = vcmp.eq.f32.partialorder %v449, 4.0
        %vm480 = vcmp.eq.f32.partialorder %v450, 4.0
        %v481 = vsel %vm479, %v469, %v328
        %v482 = vsel %vm480, %v470, %v329
        %v483 = vsel %vm477, %v455, %v481
        %v484 = vsel %vm478, %v456, %v482
        %v485 = vsel %vm475, %v455, %v483
        %v486 = vsel %vm476, %v456, %v484
        %v487 = vsel %vm473, %v461, %v485
        %v488 = vsel %vm474, %v462, %v486
        %v489 = vsel %vm471, %v328, %v487
        %v490 = vsel %vm472, %v329, %v488
        %v491 = vsel %vm477, %v461, %v455
        %v492 = vsel %vm478, %v462, %v456
        %v493 = vsel %vm475, %v328, %v491
        %v494 = vsel %vm476, %v329, %v492
        %v495 = vsel %vm473, %v328, %v493
        %v496 = vsel %vm474, %v329, %v494
        %v497 = vsel %vm471, %v469, %v495
        %v498 = vsel %vm472, %v470, %v496
        %v499 = vsel %vm479, %v328, %v461
        %v500 = vsel %vm480, %v329, %v462
        %v501 = vsel %vm477, %v328, %v499
        %v502 = vsel %vm478, %v329, %v500
        %v503 = vsel %vm475, %v469, %v501
        %v504 = vsel %vm476, %v470, %v502
        %v505 = vsel %vm473, %v455, %v503
        %v506 = vsel %vm474, %v456, %v504
        %v507 = vsel %vm471, %v455, %v505
        %v508 = vsel %vm472, %v456, %v506
        %v509 = vstv %s284
        %v510 = vmul.f32 %v266, %v509
        %v511 = vmul.f32 %v267, %v509
        %v512 = vmax.f32 %v510, 0.0
        %v513 = vmax.f32 %v511, 0.0
        %v514 = vmin.f32 %v512, 1.0
        %v515 = vmin.f32 %v513, 1.0
        %v516 = vstv %s285
        %v517 = vmul.f32 %v266, %v516
        %v518 = vmul.f32 %v267, %v516
        %s519 = ssub.f32 1.0, %s285
        %s520 = smul.f32 %s325, %s519
        %v521 = vstv %s520
        %v522 = vadd.f32 %v517, %v521
        %v523 = vadd.f32 %v518, %v521
        %v524 = vmax.f32 %v522, 0.0
        %v525 = vmax.f32 %v523, 0.0
        %v526 = vmin.f32 %v524, 1.0
        %v527 = vmin.f32 %v525, 1.0
        %v528 = vmax.f32 %v489, 0.0
        %v529 = vmax.f32 %v490, 0.0
        %v530 = vmin.f32 %v528, 1.0
        %v531 = vmin.f32 %v529, 1.0
        %v532 = vstv %s287
        %v533 = vmul.f32 %v266, %v532
        %v534 = vmul.f32 %v267, %v532
        %s535 = ssub.f32 1.0, %s287
        %v536 = vstv %s535
        %v537 = vmul.f32 %v306, %v536
        %v538 = vmul.f32 %v307, %v536
        %v539 = vadd.f32 %v533, %v537
        %v540 = vadd.f32 %v534, %v538
        %v541 = vmax.f32 %v539, 0.0
        %v542 = vmax.f32 %v540, 0.0
        %v543 = vmin.f32 %v541, 1.0
        %v544 = vmin.f32 %v542, 1.0
        %v545 = vstv %s288
        %vm546 = vcmp.lt.f32.partialorder %v266, %v545
        %vm547 = vcmp.lt.f32.partialorder %v267, %v545
        %v548 = vsub.f32 1.0, %v266
        %v549 = vsub.f32 1.0, %v267
        %v550 = vsel %vm546, %v266, %v548
        %v551 = vsel %vm547, %v267, %v549
        %v552 = vmax.f32 %v550, 0.0
        %v553 = vmax.f32 %v551, 0.0
        %v554 = vmin.f32 %v552, 1.0
        %v555 = vmin.f32 %v553, 1.0
        %v557 = vsel %vm312, %v266, 0
        %v560 = vsel %vm312, %v267, 0
        %562 = vmatpush.msra.mxu0 0.0
        %563 = vmatpush.msra.mxu0 0.0
        %564 = vmatpush.msra.mxu0 0.0
        %565 = vmatpush.msra.mxu0 0.0
        %566 = vmatpush.msra.mxu0 0.0
        %567 = vmatpush.msra.mxu0 0.0
        %568 = vmatpush.msra.mxu0 0.0
        %569 = vmatpush.msra.mxu0 0.0
        %570 = vmatpush.msra.mxu0 0.0
        %571 = vmatpush.msra.mxu0 0.0
        %572 = vmatpush.msra.mxu0 0.0
        %573 = vmatpush.msra.mxu0 0.0
        %574 = vmatpush.msra.mxu0 0.0
        %575 = vmatpush.msra.mxu0 0.0
        %576 = vmatpush.msra.mxu0 %v293
        %577 = vmatpush.msra.mxu0 %v292
        %578 = vmatmul.f32.gmra.mxu0 %v557
        %v579 = vpop.f32.mrf.mxu0
        %v580 = vadd.f32 0.0, %v579
        %581 = vmatmul.f32.gmra.mxu0 %v560
        %v582 = vpop.f32.mrf.mxu0
        %v583 = vadd.f32 0.0, %v582
        %584 = vdwg.mxu0
        %v586 = vsel %vm312, %v290, 0
        %v589 = vsel %vm312, %v291, 0
        %591 = vmatpush.msra.mxu0 0.0
        %592 = vmatpush.msra.mxu0 0.0
        %593 = vmatpush.msra.mxu0 0.0
        %594 = vmatpush.msra.mxu0 0.0
        %595 = vmatpush.msra.mxu0 0.0
        %596 = vmatpush.msra.mxu0 0.0
        %597 = vmatpush.msra.mxu0 0.0
        %598 = vmatpush.msra.mxu0 0.0
        %599 = vmatpush.msra.mxu0 0.0
        %600 = vmatpush.msra.mxu0 0.0
        %601 = vmatpush.msra.mxu0 0.0
        %602 = vmatpush.msra.mxu0 0.0
        %603 = vmatpush.msra.mxu0 0.0
        %604 = vmatpush.msra.mxu0 0.0
        %605 = vmatpush.msra.mxu0 %v583
        %606 = vmatpush.msra.mxu0 %v580
        %607 = vmatmul.f32.gmra.mxu0 %v586
        %v608 = vpop.f32.mrf.mxu0
        %v609 = vadd.f32 0.0, %v608
        %610 = vmatmul.f32.gmra.mxu0 %v589
        %v611 = vpop.f32.mrf.mxu0
        %v612 = vadd.f32 0.0, %v611
        %613 = vdwg.mxu0
        %v614 = vmax.f32 %v609, 0.0
        %v615 = vmax.f32 %v612, 0.0
        %v616 = vmin.f32 %v614, 1.0
        %v617 = vmin.f32 %v615, 1.0
        %v618 = vmul.f32 %v266, 255.0
        %v619 = vmul.f32 %v267, 255.0
        %v620 = vfloor.f32 %v618
        %v621 = vfloor.f32 %v619
        %v622 = vmul.f32 %v620, 0.003921569
        %v623 = vmul.f32 %v621, 0.003921569
        %v624 = vmax.f32 %v622, 0.0
        %v625 = vmax.f32 %v623, 0.0
        %v626 = vmin.f32 %v624, 1.0
        %v627 = vmin.f32 %v625, 1.0
        %628 = vmatpush.msra.mxu0 0.0
        %629 = vmatpush.msra.mxu0 0.0
        %630 = vmatpush.msra.mxu0 0.0
        %631 = vmatpush.msra.mxu0 0.0
        %632 = vmatpush.msra.mxu0 0.0
        %633 = vmatpush.msra.mxu0 0.0
        %634 = vmatpush.msra.mxu0 0.0
        %635 = vmatpush.msra.mxu0 0.0
        %636 = vmatpush.msra.mxu0 0.0
        %637 = vmatpush.msra.mxu0 0.0
        %638 = vmatpush.msra.mxu0 0.0
        %639 = vmatpush.msra.mxu0 0.0
        %640 = vmatpush.msra.mxu0 0.0
        %641 = vmatpush.msra.mxu0 0.0
        %642 = vmatpush.msra.mxu0 %v297
        %643 = vmatpush.msra.mxu0 %v296
        %644 = vmatmul.f32.gmra.mxu0 %v557
        %v645 = vpop.f32.mrf.mxu0
        %v646 = vadd.f32 0.0, %v645
        %647 = vmatmul.f32.gmra.mxu0 %v560
        %v648 = vpop.f32.mrf.mxu0
        %v649 = vadd.f32 0.0, %v648
        %650 = vdwg.mxu0
        %v651 = vmul.f32 %v266, 4.0
        %v652 = vmul.f32 %v267, 4.0
        %v654 = vsel %vm312, %v294, 0
        %v657 = vsel %vm312, %v295, 0
        %659 = vmatpush.msra.mxu0 0.0
        %660 = vmatpush.msra.mxu0 0.0
        %661 = vmatpush.msra.mxu0 0.0
        %662 = vmatpush.msra.mxu0 0.0
        %663 = vmatpush.msra.mxu0 0.0
        %664 = vmatpush.msra.mxu0 0.0
        %665 = vmatpush.msra.mxu0 0.0
        %666 = vmatpush.msra.mxu0 0.0
        %667 = vmatpush.msra.mxu0 0.0
        %668 = vmatpush.msra.mxu0 0.0
        %669 = vmatpush.msra.mxu0 0.0
        %670 = vmatpush.msra.mxu0 0.0
        %671 = vmatpush.msra.mxu0 0.0
        %672 = vmatpush.msra.mxu0 0.0
        %673 = vmatpush.msra.mxu0 %v649
        %674 = vmatpush.msra.mxu0 %v646
        %675 = vmatmul.f32.gmra.mxu0 %v654
        %v676 = vpop.f32.mrf.mxu0
        %v677 = vadd.f32 %v651, %v676
        %678 = vmatmul.f32.gmra.mxu0 %v657
        %v679 = vpop.f32.mrf.mxu0
        %v680 = vadd.f32 %v652, %v679
        %681 = vdwg.mxu0
        %v682 = vmul.f32 %v677, 0.07692308
        %v683 = vmul.f32 %v680, 0.07692308
        %s684 = ssub.f32 1.0, %s289
        %v685 = vsub.f32 %v266, %v682
        %v686 = vsub.f32 %v267, %v683
        %v687 = vstv %s684
        %v688 = vmul.f32 %v687, %v685
        %v689 = vmul.f32 %v687, %v686
        %v690 = vadd.f32 %v682, %v688
        %v691 = vadd.f32 %v683, %v689
        %v692 = vmax.f32 %v690, 0.0
        %v693 = vmax.f32 %v691, 0.0
        %v694 = vmin.f32 %v692, 1.0
        %v695 = vmin.f32 %v693, 1.0
        %v696 = vstv %s274
        %v697 = vmul.f32 %v696, %v266
        %v698 = vmul.f32 %v696, %v267
        %v699 = vstv %s275
        %v700 = vmul.f32 %v699, %v514
        %v701 = vmul.f32 %v699, %v515
        %v702 = vadd.f32 %v697, %v700
        %v703 = vadd.f32 %v698, %v701
        %v704 = vstv %s276
        %v705 = vmul.f32 %v704, %v526
        %v706 = vmul.f32 %v704, %v527
        %v707 = vadd.f32 %v702, %v705
        %v708 = vadd.f32 %v703, %v706
        %v709 = vstv %s277
        %v710 = vmul.f32 %v709, %v530
        %v711 = vmul.f32 %v709, %v531
        %v712 = vadd.f32 %v707, %v710
        %v713 = vadd.f32 %v708, %v711
        %v714 = vstv %s278
        %v715 = vmul.f32 %v714, %v543
        %v716 = vmul.f32 %v714, %v544
        %v717 = vadd.f32 %v712, %v715
        %v718 = vadd.f32 %v713, %v716
        %v719 = vstv %s279
        %v720 = vmul.f32 %v719, %v554
        %v721 = vmul.f32 %v719, %v555
        %v722 = vadd.f32 %v717, %v720
        %v723 = vadd.f32 %v718, %v721
        %v724 = vstv %s280
        %v725 = vmul.f32 %v724, %v616
        %v726 = vmul.f32 %v724, %v617
        %v727 = vadd.f32 %v722, %v725
        %v728 = vadd.f32 %v723, %v726
        %v729 = vstv %s281
        %v730 = vmul.f32 %v729, %v626
        %v731 = vmul.f32 %v729, %v627
        %v732 = vadd.f32 %v727, %v730
        %v733 = vadd.f32 %v728, %v731
        %v734 = vstv %s282
        %v735 = vmul.f32 %v734, %v310
        %v736 = vmul.f32 %v734, %v311
        %v737 = vadd.f32 %v732, %v735
        %v738 = vadd.f32 %v733, %v736
        %v739 = vstv %s283
        %v740 = vmul.f32 %v739, %v694
        %v741 = vmul.f32 %v739, %v695
        %v742 = vadd.f32 %v737, %v740
        %v743 = vadd.f32 %v738, %v741
        %vm744 = vcmp.eq.f32.partialorder %v742, %v742
        %vm745 = vcmp.eq.f32.partialorder %v743, %v743
        %v746 = vand.u32 2147483647, %v742
        %v747 = vand.u32 2147483647, %v743
        %vm748 = vcmp.le.f32.partialorder %v746, 3.4028235e+38
        %vm749 = vcmp.le.f32.partialorder %v747, 3.4028235e+38
        %vm750 = vmand %vm744, %vm748
        %vm751 = vmand %vm745, %vm749
        %v752 = vsel %vm750, %v742, 0.0
        %v753 = vsel %vm751, %v743, 0.0
        %v754 = vmax.f32 %v752, 0.0
        %v755 = vmax.f32 %v753, 0.0
        %v756 = vmin.f32 %v754, 1.0
        %v757 = vmin.f32 %v755, 1.0
        %758 = vst.msk [vmem:[%s265] sm:$0xff] %vm312, %v756
        %759 = vst.msk [vmem:[%s265 + $0x8] sm:$0xff] %vm312, %v757
        %v760 = vmul.f32 %v269, %v509
        %v761 = vmul.f32 %v270, %v509
        %v762 = vmax.f32 %v760, 0.0
        %v763 = vmax.f32 %v761, 0.0
        %v764 = vmin.f32 %v762, 1.0
        %v765 = vmin.f32 %v763, 1.0
        %v766 = vmul.f32 %v269, %v516
        %v767 = vmul.f32 %v270, %v516
        %v768 = vadd.f32 %v766, %v521
        %v769 = vadd.f32 %v767, %v521
        %v770 = vmax.f32 %v768, 0.0
        %v771 = vmax.f32 %v769, 0.0
        %v772 = vmin.f32 %v770, 1.0
        %v773 = vmin.f32 %v771, 1.0
        %v774 = vmax.f32 %v497, 0.0
        %v775 = vmax.f32 %v498, 0.0
        %v776 = vmin.f32 %v774, 1.0
        %v777 = vmin.f32 %v775, 1.0
        %v778 = vmul.f32 %v269, %v532
        %v779 = vmul.f32 %v270, %v532
        %v780 = vadd.f32 %v778, %v537
        %v781 = vadd.f32 %v779, %v538
        %v782 = vmax.f32 %v780, 0.0
        %v783 = vmax.f32 %v781, 0.0
        %v784 = vmin.f32 %v782, 1.0
        %v785 = vmin.f32 %v783, 1.0
        %vm786 = vcmp.lt.f32.partialorder %v269, %v545
        %vm787 = vcmp.lt.f32.partialorder %v270, %v545
        %v788 = vsub.f32 1.0, %v269
        %v789 = vsub.f32 1.0, %v270
        %v790 = vsel %vm786, %v269, %v788
        %v791 = vsel %vm787, %v270, %v789
        %v792 = vmax.f32 %v790, 0.0
        %v793 = vmax.f32 %v791, 0.0
        %v794 = vmin.f32 %v792, 1.0
        %v795 = vmin.f32 %v793, 1.0
        %v797 = vsel %vm312, %v269, 0
        %v800 = vsel %vm312, %v270, 0
        %802 = vmatpush.msra.mxu0 0.0
        %803 = vmatpush.msra.mxu0 0.0
        %804 = vmatpush.msra.mxu0 0.0
        %805 = vmatpush.msra.mxu0 0.0
        %806 = vmatpush.msra.mxu0 0.0
        %807 = vmatpush.msra.mxu0 0.0
        %808 = vmatpush.msra.mxu0 0.0
        %809 = vmatpush.msra.mxu0 0.0
        %810 = vmatpush.msra.mxu0 0.0
        %811 = vmatpush.msra.mxu0 0.0
        %812 = vmatpush.msra.mxu0 0.0
        %813 = vmatpush.msra.mxu0 0.0
        %814 = vmatpush.msra.mxu0 0.0
        %815 = vmatpush.msra.mxu0 0.0
        %816 = vmatpush.msra.mxu0 %v293
        %817 = vmatpush.msra.mxu0 %v292
        %818 = vmatmul.f32.gmra.mxu0 %v797
        %v819 = vpop.f32.mrf.mxu0
        %v820 = vadd.f32 0.0, %v819
        %821 = vmatmul.f32.gmra.mxu0 %v800
        %v822 = vpop.f32.mrf.mxu0
        %v823 = vadd.f32 0.0, %v822
        %824 = vdwg.mxu0
        %825 = vmatpush.msra.mxu0 0.0
        %826 = vmatpush.msra.mxu0 0.0
        %827 = vmatpush.msra.mxu0 0.0
        %828 = vmatpush.msra.mxu0 0.0
        %829 = vmatpush.msra.mxu0 0.0
        %830 = vmatpush.msra.mxu0 0.0
        %831 = vmatpush.msra.mxu0 0.0
        %832 = vmatpush.msra.mxu0 0.0
        %833 = vmatpush.msra.mxu0 0.0
        %834 = vmatpush.msra.mxu0 0.0
        %835 = vmatpush.msra.mxu0 0.0
        %836 = vmatpush.msra.mxu0 0.0
        %837 = vmatpush.msra.mxu0 0.0
        %838 = vmatpush.msra.mxu0 0.0
        %839 = vmatpush.msra.mxu0 %v823
        %840 = vmatpush.msra.mxu0 %v820
        %841 = vmatmul.f32.gmra.mxu0 %v586
        %v842 = vpop.f32.mrf.mxu0
        %v843 = vadd.f32 0.0, %v842
        %844 = vmatmul.f32.gmra.mxu0 %v589
        %v845 = vpop.f32.mrf.mxu0
        %v846 = vadd.f32 0.0, %v845
        %847 = vdwg.mxu0
        %v848 = vmax.f32 %v843, 0.0
        %v849 = vmax.f32 %v846, 0.0
        %v850 = vmin.f32 %v848, 1.0
        %v851 = vmin.f32 %v849, 1.0
        %v852 = vmul.f32 %v269, 255.0
        %v853 = vmul.f32 %v270, 255.0
        %v854 = vfloor.f32 %v852
        %v855 = vfloor.f32 %v853
        %v856 = vmul.f32 %v854, 0.003921569
        %v857 = vmul.f32 %v855, 0.003921569
        %v858 = vmax.f32 %v856, 0.0
        %v859 = vmax.f32 %v857, 0.0
        %v860 = vmin.f32 %v858, 1.0
        %v861 = vmin.f32 %v859, 1.0
        %862 = vmatpush.msra.mxu0 0.0
        %863 = vmatpush.msra.mxu0 0.0
        %864 = vmatpush.msra.mxu0 0.0
        %865 = vmatpush.msra.mxu0 0.0
        %866 = vmatpush.msra.mxu0 0.0
        %867 = vmatpush.msra.mxu0 0.0
        %868 = vmatpush.msra.mxu0 0.0
        %869 = vmatpush.msra.mxu0 0.0
        %870 = vmatpush.msra.mxu0 0.0
        %871 = vmatpush.msra.mxu0 0.0
        %872 = vmatpush.msra.mxu0 0.0
        %873 = vmatpush.msra.mxu0 0.0
        %874 = vmatpush.msra.mxu0 0.0
        %875 = vmatpush.msra.mxu0 0.0
        %876 = vmatpush.msra.mxu0 %v297
        %877 = vmatpush.msra.mxu0 %v296
        %878 = vmatmul.f32.gmra.mxu0 %v797
        %v879 = vpop.f32.mrf.mxu0
        %v880 = vadd.f32 0.0, %v879
        %881 = vmatmul.f32.gmra.mxu0 %v800
        %v882 = vpop.f32.mrf.mxu0
        %v883 = vadd.f32 0.0, %v882
        %884 = vdwg.mxu0
        %v885 = vmul.f32 %v269, 4.0
        %v886 = vmul.f32 %v270, 4.0
        %887 = vmatpush.msra.mxu0 0.0
        %888 = vmatpush.msra.mxu0 0.0
        %889 = vmatpush.msra.mxu0 0.0
        %890 = vmatpush.msra.mxu0 0.0
        %891 = vmatpush.msra.mxu0 0.0
        %892 = vmatpush.msra.mxu0 0.0
        %893 = vmatpush.msra.mxu0 0.0
        %894 = vmatpush.msra.mxu0 0.0
        %895 = vmatpush.msra.mxu0 0.0
        %896 = vmatpush.msra.mxu0 0.0
        %897 = vmatpush.msra.mxu0 0.0
        %898 = vmatpush.msra.mxu0 0.0
        %899 = vmatpush.msra.mxu0 0.0
        %900 = vmatpush.msra.mxu0 0.0
        %901 = vmatpush.msra.mxu0 %v883
        %902 = vmatpush.msra.mxu0 %v880
        %903 = vmatmul.f32.gmra.mxu0 %v654
        %v904 = vpop.f32.mrf.mxu0
        %v905 = vadd.f32 %v885, %v904
        %906 = vmatmul.f32.gmra.mxu0 %v657
        %v907 = vpop.f32.mrf.mxu0
        %v908 = vadd.f32 %v886, %v907
        %909 = vdwg.mxu0
        %v910 = vmul.f32 %v905, 0.07692308
        %v911 = vmul.f32 %v908, 0.07692308
        %v912 = vsub.f32 %v269, %v910
        %v913 = vsub.f32 %v270, %v911
        %v914 = vmul.f32 %v687, %v912
        %v915 = vmul.f32 %v687, %v913
        %v916 = vadd.f32 %v910, %v914
        %v917 = vadd.f32 %v911, %v915
        %v918 = vmax.f32 %v916, 0.0
        %v919 = vmax.f32 %v917, 0.0
        %v920 = vmin.f32 %v918, 1.0
        %v921 = vmin.f32 %v919, 1.0
        %v922 = vmul.f32 %v696, %v269
        %v923 = vmul.f32 %v696, %v270
        %v924 = vmul.f32 %v699, %v764
        %v925 = vmul.f32 %v699, %v765
        %v926 = vadd.f32 %v922, %v924
        %v927 = vadd.f32 %v923, %v925
        %v928 = vmul.f32 %v704, %v772
        %v929 = vmul.f32 %v704, %v773
        %v930 = vadd.f32 %v926, %v928
        %v931 = vadd.f32 %v927, %v929
        %v932 = vmul.f32 %v709, %v776
        %v933 = vmul.f32 %v709, %v777
        %v934 = vadd.f32 %v930, %v932
        %v935 = vadd.f32 %v931, %v933
        %v936 = vmul.f32 %v714, %v784
        %v937 = vmul.f32 %v714, %v785
        %v938 = vadd.f32 %v934, %v936
        %v939 = vadd.f32 %v935, %v937
        %v940 = vmul.f32 %v719, %v794
        %v941 = vmul.f32 %v719, %v795
        %v942 = vadd.f32 %v938, %v940
        %v943 = vadd.f32 %v939, %v941
        %v944 = vmul.f32 %v724, %v850
        %v945 = vmul.f32 %v724, %v851
        %v946 = vadd.f32 %v942, %v944
        %v947 = vadd.f32 %v943, %v945
        %v948 = vmul.f32 %v729, %v860
        %v949 = vmul.f32 %v729, %v861
        %v950 = vadd.f32 %v946, %v948
        %v951 = vadd.f32 %v947, %v949
        %v952 = vadd.f32 %v950, %v735
        %v953 = vadd.f32 %v951, %v736
        %v954 = vmul.f32 %v739, %v920
        %v955 = vmul.f32 %v739, %v921
        %v956 = vadd.f32 %v952, %v954
        %v957 = vadd.f32 %v953, %v955
        %vm958 = vcmp.eq.f32.partialorder %v956, %v956
        %vm959 = vcmp.eq.f32.partialorder %v957, %v957
        %v960 = vand.u32 2147483647, %v956
        %v961 = vand.u32 2147483647, %v957
        %vm962 = vcmp.le.f32.partialorder %v960, 3.4028235e+38
        %vm963 = vcmp.le.f32.partialorder %v961, 3.4028235e+38
        %vm964 = vmand %vm958, %vm962
        %vm965 = vmand %vm959, %vm963
        %v966 = vsel %vm964, %v956, 0.0
        %v967 = vsel %vm965, %v957, 0.0
        %v968 = vmax.f32 %v966, 0.0
        %v969 = vmax.f32 %v967, 0.0
        %v970 = vmin.f32 %v968, 1.0
        %v971 = vmin.f32 %v969, 1.0
        %s972 = scalar_lea.vmem %s265, 16
        %973 = vst.msk [vmem:[%s972] sm:$0xff] %vm312, %v970
        %974 = vst.msk [vmem:[%s972 + $0x8] sm:$0xff] %vm312, %v971
        %v975 = vmul.f32 %v272, %v509
        %v976 = vmul.f32 %v273, %v509
        %v977 = vmax.f32 %v975, 0.0
        %v978 = vmax.f32 %v976, 0.0
        %v979 = vmin.f32 %v977, 1.0
        %v980 = vmin.f32 %v978, 1.0
        %v981 = vmul.f32 %v272, %v516
        %v982 = vmul.f32 %v273, %v516
        %v983 = vadd.f32 %v981, %v521
        %v984 = vadd.f32 %v982, %v521
        %v985 = vmax.f32 %v983, 0.0
        %v986 = vmax.f32 %v984, 0.0
        %v987 = vmin.f32 %v985, 1.0
        %v988 = vmin.f32 %v986, 1.0
        %v989 = vmax.f32 %v507, 0.0
        %v990 = vmax.f32 %v508, 0.0
        %v991 = vmin.f32 %v989, 1.0
        %v992 = vmin.f32 %v990, 1.0
        %v993 = vmul.f32 %v272, %v532
        %v994 = vmul.f32 %v273, %v532
        %v995 = vadd.f32 %v993, %v537
        %v996 = vadd.f32 %v994, %v538
        %v997 = vmax.f32 %v995, 0.0
        %v998 = vmax.f32 %v996, 0.0
        %v999 = vmin.f32 %v997, 1.0
        %v1000 = vmin.f32 %v998, 1.0
        %vm1001 = vcmp.lt.f32.partialorder %v272, %v545
        %vm1002 = vcmp.lt.f32.partialorder %v273, %v545
        %v1003 = vsub.f32 1.0, %v272
        %v1004 = vsub.f32 1.0, %v273
        %v1005 = vsel %vm1001, %v272, %v1003
        %v1006 = vsel %vm1002, %v273, %v1004
        %v1007 = vmax.f32 %v1005, 0.0
        %v1008 = vmax.f32 %v1006, 0.0
        %v1009 = vmin.f32 %v1007, 1.0
        %v1010 = vmin.f32 %v1008, 1.0
        %v1012 = vsel %vm312, %v272, 0
        %v1015 = vsel %vm312, %v273, 0
        %1017 = vmatpush.msra.mxu0 0.0
        %1018 = vmatpush.msra.mxu0 0.0
        %1019 = vmatpush.msra.mxu0 0.0
        %1020 = vmatpush.msra.mxu0 0.0
        %1021 = vmatpush.msra.mxu0 0.0
        %1022 = vmatpush.msra.mxu0 0.0
        %1023 = vmatpush.msra.mxu0 0.0
        %1024 = vmatpush.msra.mxu0 0.0
        %1025 = vmatpush.msra.mxu0 0.0
        %1026 = vmatpush.msra.mxu0 0.0
        %1027 = vmatpush.msra.mxu0 0.0
        %1028 = vmatpush.msra.mxu0 0.0
        %1029 = vmatpush.msra.mxu0 0.0
        %1030 = vmatpush.msra.mxu0 0.0
        %1031 = vmatpush.msra.mxu0 %v293
        %1032 = vmatpush.msra.mxu0 %v292
        %1033 = vmatmul.f32.gmra.mxu0 %v1012
        %v1034 = vpop.f32.mrf.mxu0
        %v1035 = vadd.f32 0.0, %v1034
        %1036 = vmatmul.f32.gmra.mxu0 %v1015
        %v1037 = vpop.f32.mrf.mxu0
        %v1038 = vadd.f32 0.0, %v1037
        %1039 = vdwg.mxu0
        %1040 = vmatpush.msra.mxu0 0.0
        %1041 = vmatpush.msra.mxu0 0.0
        %1042 = vmatpush.msra.mxu0 0.0
        %1043 = vmatpush.msra.mxu0 0.0
        %1044 = vmatpush.msra.mxu0 0.0
        %1045 = vmatpush.msra.mxu0 0.0
        %1046 = vmatpush.msra.mxu0 0.0
        %1047 = vmatpush.msra.mxu0 0.0
        %1048 = vmatpush.msra.mxu0 0.0
        %1049 = vmatpush.msra.mxu0 0.0
        %1050 = vmatpush.msra.mxu0 0.0
        %1051 = vmatpush.msra.mxu0 0.0
        %1052 = vmatpush.msra.mxu0 0.0
        %1053 = vmatpush.msra.mxu0 0.0
        %1054 = vmatpush.msra.mxu0 %v1038
        %1055 = vmatpush.msra.mxu0 %v1035
        %1056 = vmatmul.f32.gmra.mxu0 %v586
        %v1057 = vpop.f32.mrf.mxu0
        %v1058 = vadd.f32 0.0, %v1057
        %1059 = vmatmul.f32.gmra.mxu0 %v589
        %v1060 = vpop.f32.mrf.mxu0
        %v1061 = vadd.f32 0.0, %v1060
        %1062 = vdwg.mxu0
        %v1063 = vmax.f32 %v1058, 0.0
        %v1064 = vmax.f32 %v1061, 0.0
        %v1065 = vmin.f32 %v1063, 1.0
        %v1066 = vmin.f32 %v1064, 1.0
        %v1067 = vmul.f32 %v272, 255.0
        %v1068 = vmul.f32 %v273, 255.0
        %v1069 = vfloor.f32 %v1067
        %v1070 = vfloor.f32 %v1068
        %v1071 = vmul.f32 %v1069, 0.003921569
        %v1072 = vmul.f32 %v1070, 0.003921569
        %v1073 = vmax.f32 %v1071, 0.0
        %v1074 = vmax.f32 %v1072, 0.0
        %v1075 = vmin.f32 %v1073, 1.0
        %v1076 = vmin.f32 %v1074, 1.0
        %1077 = vmatpush.msra.mxu0 0.0
        %1078 = vmatpush.msra.mxu0 0.0
        %1079 = vmatpush.msra.mxu0 0.0
        %1080 = vmatpush.msra.mxu0 0.0
        %1081 = vmatpush.msra.mxu0 0.0
        %1082 = vmatpush.msra.mxu0 0.0
        %1083 = vmatpush.msra.mxu0 0.0
        %1084 = vmatpush.msra.mxu0 0.0
        %1085 = vmatpush.msra.mxu0 0.0
        %1086 = vmatpush.msra.mxu0 0.0
        %1087 = vmatpush.msra.mxu0 0.0
        %1088 = vmatpush.msra.mxu0 0.0
        %1089 = vmatpush.msra.mxu0 0.0
        %1090 = vmatpush.msra.mxu0 0.0
        %1091 = vmatpush.msra.mxu0 %v297
        %1092 = vmatpush.msra.mxu0 %v296
        %1093 = vmatmul.f32.gmra.mxu0 %v1012
        %v1094 = vpop.f32.mrf.mxu0
        %v1095 = vadd.f32 0.0, %v1094
        %1096 = vmatmul.f32.gmra.mxu0 %v1015
        %v1097 = vpop.f32.mrf.mxu0
        %v1098 = vadd.f32 0.0, %v1097
        %1099 = vdwg.mxu0
        %v1100 = vmul.f32 %v272, 4.0
        %v1101 = vmul.f32 %v273, 4.0
        %1102 = vmatpush.msra.mxu0 0.0
        %1103 = vmatpush.msra.mxu0 0.0
        %1104 = vmatpush.msra.mxu0 0.0
        %1105 = vmatpush.msra.mxu0 0.0
        %1106 = vmatpush.msra.mxu0 0.0
        %1107 = vmatpush.msra.mxu0 0.0
        %1108 = vmatpush.msra.mxu0 0.0
        %1109 = vmatpush.msra.mxu0 0.0
        %1110 = vmatpush.msra.mxu0 0.0
        %1111 = vmatpush.msra.mxu0 0.0
        %1112 = vmatpush.msra.mxu0 0.0
        %1113 = vmatpush.msra.mxu0 0.0
        %1114 = vmatpush.msra.mxu0 0.0
        %1115 = vmatpush.msra.mxu0 0.0
        %1116 = vmatpush.msra.mxu0 %v1098
        %1117 = vmatpush.msra.mxu0 %v1095
        %1118 = vmatmul.f32.gmra.mxu0 %v654
        %v1119 = vpop.f32.mrf.mxu0
        %v1120 = vadd.f32 %v1100, %v1119
        %1121 = vmatmul.f32.gmra.mxu0 %v657
        %v1122 = vpop.f32.mrf.mxu0
        %v1123 = vadd.f32 %v1101, %v1122
        %1124 = vdwg.mxu0
        %v1125 = vmul.f32 %v1120, 0.07692308
        %v1126 = vmul.f32 %v1123, 0.07692308
        %v1127 = vsub.f32 %v272, %v1125
        %v1128 = vsub.f32 %v273, %v1126
        %v1129 = vmul.f32 %v687, %v1127
        %v1130 = vmul.f32 %v687, %v1128
        %v1131 = vadd.f32 %v1125, %v1129
        %v1132 = vadd.f32 %v1126, %v1130
        %v1133 = vmax.f32 %v1131, 0.0
        %v1134 = vmax.f32 %v1132, 0.0
        %v1135 = vmin.f32 %v1133, 1.0
        %v1136 = vmin.f32 %v1134, 1.0
        %v1137 = vmul.f32 %v696, %v272
        %v1138 = vmul.f32 %v696, %v273
        %v1139 = vmul.f32 %v699, %v979
        %v1140 = vmul.f32 %v699, %v980
        %v1141 = vadd.f32 %v1137, %v1139
        %v1142 = vadd.f32 %v1138, %v1140
        %v1143 = vmul.f32 %v704, %v987
        %v1144 = vmul.f32 %v704, %v988
        %v1145 = vadd.f32 %v1141, %v1143
        %v1146 = vadd.f32 %v1142, %v1144
        %v1147 = vmul.f32 %v709, %v991
        %v1148 = vmul.f32 %v709, %v992
        %v1149 = vadd.f32 %v1145, %v1147
        %v1150 = vadd.f32 %v1146, %v1148
        %v1151 = vmul.f32 %v714, %v999
        %v1152 = vmul.f32 %v714, %v1000
        %v1153 = vadd.f32 %v1149, %v1151
        %v1154 = vadd.f32 %v1150, %v1152
        %v1155 = vmul.f32 %v719, %v1009
        %v1156 = vmul.f32 %v719, %v1010
        %v1157 = vadd.f32 %v1153, %v1155
        %v1158 = vadd.f32 %v1154, %v1156
        %v1159 = vmul.f32 %v724, %v1065
        %v1160 = vmul.f32 %v724, %v1066
        %v1161 = vadd.f32 %v1157, %v1159
        %v1162 = vadd.f32 %v1158, %v1160
        %v1163 = vmul.f32 %v729, %v1075
        %v1164 = vmul.f32 %v729, %v1076
        %v1165 = vadd.f32 %v1161, %v1163
        %v1166 = vadd.f32 %v1162, %v1164
        %v1167 = vadd.f32 %v1165, %v735
        %v1168 = vadd.f32 %v1166, %v736
        %v1169 = vmul.f32 %v739, %v1135
        %v1170 = vmul.f32 %v739, %v1136
        %v1171 = vadd.f32 %v1167, %v1169
        %v1172 = vadd.f32 %v1168, %v1170
        %vm1173 = vcmp.eq.f32.partialorder %v1171, %v1171
        %vm1174 = vcmp.eq.f32.partialorder %v1172, %v1172
        %v1175 = vand.u32 2147483647, %v1171
        %v1176 = vand.u32 2147483647, %v1172
        %vm1177 = vcmp.le.f32.partialorder %v1175, 3.4028235e+38
        %vm1178 = vcmp.le.f32.partialorder %v1176, 3.4028235e+38
        %vm1179 = vmand %vm1173, %vm1177
        %vm1180 = vmand %vm1174, %vm1178
        %v1181 = vsel %vm1179, %v1171, 0.0
        %v1182 = vsel %vm1180, %v1172, 0.0
        %v1183 = vmax.f32 %v1181, 0.0
        %v1184 = vmax.f32 %v1182, 0.0
        %v1185 = vmin.f32 %v1183, 1.0
        %v1186 = vmin.f32 %v1184, 1.0
        %s1187 = scalar_lea.vmem %s265, 32
        %1188 = vst.msk [vmem:[%s1187] sm:$0xff] %vm312, %v1185
        %1189 = vst.msk [vmem:[%s1187 + $0x8] sm:$0xff] %vm312, %v1186
        %p1190 = scmp.lt.s32.totalorder %s18, 1
        %s1191 = scalar_select %p1190, %s18, 1
        %s1192 = smul.addr %s1191, 6
        %s1193 = smul.addr %s1192, 8
        %s1194 = scalar_lea.vmem %s6, %s1193
        // Predicated region
        $region49: #{aug_policy_forward.2} parent=43 // pred_check
          %p1195 = pneg %p167
        $region50: #{aug_policy_forward.2} parent=43 // pred_check_branch
          %1197 = sbr.rel (%p1195) target = $region52
        $region51: #{aug_policy_forward.2} parent=43 // pred_region
          _
        $region52: #{aug_policy_forward.2} parent=43 // pred_fallthru
          _
      $region44: #{aug_policy_forward.2} parent=5 // pred_fallthru
        _
      %p1198 = scmp.le.s32.totalorder 2, %s13
      // Predicated region
      $region53: #{aug_policy_forward.2} parent=5 // pred_check
        %p1199 = pneg %p1198
      $region54: #{aug_policy_forward.2} parent=5 // pred_check_branch
        %1201 = sbr.rel (%p1199) target = $region56
      $region55: #{aug_policy_forward.2} parent=5 // pred_region
        %s1202 = ssub.s32 %s13, 2
        // Predicated region
        $region57: #{aug_policy_forward.2} parent=55 // pred_check
          %p1203 = pneg %p173
        $region58: #{aug_policy_forward.2} parent=55 // pred_check_branch
          %1205 = sbr.rel (%p1203) target = $region60
        $region59: #{aug_policy_forward.2} parent=55 // pred_region
          %p1206 = scmp.lt.s32.totalorder %s19, 1
          %s1207 = scalar_select %p1206, %s19, 1
          %s1208 = smul.addr %s1207, 6
          %s1209 = smul.addr %s1208, 8
          %s1210 = scalar_lea.vmem %s6, %s1209
        $region60: #{aug_policy_forward.2} parent=55 // pred_fallthru
          _
      $region56: #{aug_policy_forward.2} parent=5 // pred_fallthru
        _
    $region6: #{aug_policy_forward.2} parent=1 // loop_footer
      %s17 = sadd.s32 1, %s13
    $region7: #{aug_policy_forward.2} parent=1 // loop_footer_branch
      %12 = sbr.rel target = $region3
    $region8: #{aug_policy_forward.2} parent=1 // loop_exit
      _
    %1211 = vsyncpa [#allocation3], 1
    %s1212 = scalar_lea.sflag [#allocation3], 1
    %1213 = vsyncpa %s1212, 1

// kernel: aug_policy_forward.3
$region0: #{aug_policy_forward.3}
  #allocation0 [shape = 'u32[]', space=smem, size = 0x4, offset = 0x4, fixed_abs, tag = 'smem constant byte address 0x4 - core index']
  #allocation1 [shape = 'u32[72,128]{1,0:T(1,128)}', space=vmem, size = 0x9000, scoped, tag = 'internal scratch']
  %s0 = inlined_call_operand.vmem [shape: f32[1,16], index: 0, kind: input, shape index: {}]
  %s1 = inlined_call_operand.vmem [shape: f32[2,3,16,16], index: 1, kind: input, shape index: {}]
  %s2 = inlined_call_operand.vmem [shape: f32[16,16], index: 2, kind: input, shape index: {}]
  %s3 = inlined_call_operand.vmem [shape: f32[16,16], index: 3, kind: input, shape index: {}]
  %s4 = inlined_call_operand.vmem [shape: f32[16,16], index: 4, kind: input, shape index: {}]
  %s5 = inlined_call_operand.vmem [shape: f32[16,16], index: 5, kind: input, shape index: {}]
  %s6 = inlined_call_operand.hbm [shape: f32[2,3,16,16], index: 6, kind: output, shape index: {}]
  %s7 = sld [smem:[#allocation0]]
  $region61: #{aug_policy_forward.3} parent=0
    _
  %s9 = ssub.s32 1, %s7
  %s10 = scalar_select 0, %s9, %s7
  $region1: #{aug_policy_forward.3} parent=0
    #allocation2 [shape = 'u8[512]{0}', space=smem, size = 0x200, scoped, tag = 'input window, operand 0, single buffered']
    #allocation3 [shape = 's32[2]{0}', space=sflag, size = 0x8, scoped, tag = 'scoped memory for aug_policy_forward.3']
    #allocation4 [shape = 's32[2]{0}', space=sflag, size = 0x8, scoped, tag = 'scoped memory for aug_policy_forward.3']
    #allocation5 [shape = 'u8[49152]{0}', space=vmem, size = 0xc000, scoped, tag = 'output window, operand 0']
    %11 = vsyncpa [#allocation4], 0
    %12 = vsyncpa [#allocation3], 0
    %s13 = scalar_lea.sflag [#allocation3], 1
    %14 = vsyncpa %s13, 0
    loop: start=0, step=1, limit=4
    $region2: #{aug_policy_forward.3} parent=1 // loop_pre_header
      _
    $region3: #{aug_policy_forward.3} parent=1 // loop_header
      %s16 = sphi 0, %s20
      %p17 = scmp.ge.s32.totalorder %s16, 4
      %s24 = sphi 0, %s24
      %s26 = sphi 0, %s24
      %s27 = sphi 0, %s26
      %s41 = sphi 0, %s27
      %s47 = sphi 0, %s49
      %s50 = sphi 0, %s47
      %s51 = sphi 0, %s50
      %s67 = sphi 0, %s51
      %s71 = sphi 0, %s71
      %s73 = sphi 0, %s71
      %s74 = sphi 0, %s73
      %s88 = sphi 0, %s74
      %s92 = sphi 0, %s92
      %s94 = sphi 0, %s92
      %s95 = sphi 0, %s94
      %s109 = sphi 0, %s95
      %s113 = sphi 0, %s113
      %s115 = sphi 0, %s113
      %s116 = sphi 0, %s115
      %s130 = sphi 0, %s116
      %s134 = sphi 0, %s134
      %s136 = sphi 0, %s134
      %s137 = sphi 0, %s136
      %s151 = sphi 0, %s137
      %s157 = sphi 0, %s159
      %s160 = sphi 0, %s157
      %s161 = sphi 0, %s160
      %s177 = sphi 0, %s161
    $region4: #{aug_policy_forward.3} parent=1 // loop_header_branch
      %19 = sbr.rel (%p17) target = $region8
    $region5: #{aug_policy_forward.3} parent=1 // loop_body
      %s21 = ssub.s32 %s16, 1
      %s22 = ssub.s32 %s16, 2
      %s23 = sadd.s32 %s16, 1
      %s25 = sadd.s32 %s24, 1
      %p28 = scmp.eq.s32.totalorder %s16, 1
      %p29 = scmp.ne.s32.totalorder %s24, %s26
      %p30 = scmp.eq.s32.totalorder %s16, 0
      %p31 = por %p29, %p30
      %p32 = scmp.ne.s32.totalorder %s24, %s26
      %p33 = scmp.eq.s32.totalorder %s21, 1
      %p34 = por %p32, %p33
      %p35 = scmp.ne.s32.totalorder %s26, %s27
      %p36 = scmp.eq.s32.totalorder %s21, 0
      %p37 = por %p35, %p36
      %p38 = scmp.ne.s32.totalorder %s26, %s27
      %p39 = scmp.eq.s32.totalorder %s22, 1
      %p40 = por %p38, %p39
      %p42 = scmp.ne.s32.totalorder %s27, %s41
      %p43 = scmp.eq.s32.totalorder %s22, 0
      %p44 = por %p42, %p43
      %s45 = ssub.s32 %s16, %s23
      %p46 = scmp.eq.s32.totalorder %s45, 0
      %s48 = sadd.s32 %s47, 1
      %s49 = scalar_select %p46, %s47, %s48
      %p52 = pneg %p46
      %p53 = scmp.eq.s32.totalorder %s16, 1
      %p54 = por %p52, %p53
      %p55 = scmp.ne.s32.totalorder %s47, %s50
      %p56 = scmp.eq.s32.totalorder %s16, 0
      %p57 = por %p55, %p56
      %p58 = scmp.ne.s32.totalorder %s47, %s50
      %p59 = scmp.eq.s32.totalorder %s21, 1
      %p60 = por %p58, %p59
      %p61 = scmp.ne.s32.totalorder %s50, %s51
      %p62 = scmp.eq.s32.totalorder %s21, 0
      %p63 = por %p61, %p62
      %p64 = scmp.ne.s32.totalorder %s50, %s51
      %p65 = scmp.eq.s32.totalorder %s22, 1
      %p66 = por %p64, %p65
      %p68 = scmp.ne.s32.totalorder %s51, %s67
      %p69 = scmp.eq.s32.totalorder %s22, 0
      %p70 = por %p68, %p69
      %s72 = sadd.s32 %s71, 1
      %p75 = scmp.eq.s32.totalorder %s16, 1
      %p76 = scmp.ne.s32.totalorder %s71, %s73
      %p77 = scmp.eq.s32.totalorder %s16, 0
      %p78 = por %p76, %p77
      %p79 = scmp.ne.s32.totalorder %s71, %s73
      %p80 = scmp.eq.s32.totalorder %s21, 1
      %p81 = por %p79, %p80
      %p82 = scmp.ne.s32.totalorder %s73, %s74
      %p83 = scmp.eq.s32.totalorder %s21, 0
      %p84 = por %p82, %p83
      %p85 = scmp.ne.s32.totalorder %s73, %s74
      %p86 = scmp.eq.s32.totalorder %s22, 1
      %p87 = por %p85, %p86
      %p89 = scmp.ne.s32.totalorder %s74, %s88
      %p90 = scmp.eq.s32.totalorder %s22, 0
      %p91 = por %p89, %p90
      %s93 = sadd.s32 %s92, 1
      %p96 = scmp.eq.s32.totalorder %s16, 1
      %p97 = scmp.ne.s32.totalorder %s92, %s94
      %p98 = scmp.eq.s32.totalorder %s16, 0
      %p99 = por %p97, %p98
      %p100 = scmp.ne.s32.totalorder %s92, %s94
      %p101 = scmp.eq.s32.totalorder %s21, 1
      %p102 = por %p100, %p101
      %p103 = scmp.ne.s32.totalorder %s94, %s95
      %p104 = scmp.eq.s32.totalorder %s21, 0
      %p105 = por %p103, %p104
      %p106 = scmp.ne.s32.totalorder %s94, %s95
      %p107 = scmp.eq.s32.totalorder %s22, 1
      %p108 = por %p106, %p107
      %p110 = scmp.ne.s32.totalorder %s95, %s109
      %p111 = scmp.eq.s32.totalorder %s22, 0
      %p112 = por %p110, %p111
      %s114 = sadd.s32 %s113, 1
      %p117 = scmp.eq.s32.totalorder %s16, 1
      %p118 = scmp.ne.s32.totalorder %s113, %s115
      %p119 = scmp.eq.s32.totalorder %s16, 0
      %p120 = por %p118, %p119
      %p121 = scmp.ne.s32.totalorder %s113, %s115
      %p122 = scmp.eq.s32.totalorder %s21, 1
      %p123 = por %p121, %p122
      %p124 = scmp.ne.s32.totalorder %s115, %s116
      %p125 = scmp.eq.s32.totalorder %s21, 0
      %p126 = por %p124, %p125
      %p127 = scmp.ne.s32.totalorder %s115, %s116
      %p128 = scmp.eq.s32.totalorder %s22, 1
      %p129 = por %p127, %p128
      %p131 = scmp.ne.s32.totalorder %s116, %s130
      %p132 = scmp.eq.s32.totalorder %s22, 0
      %p133 = por %p131, %p132
      %s135 = sadd.s32 %s134, 1
      %p138 = scmp.eq.s32.totalorder %s16, 1
      %p139 = scmp.ne.s32.totalorder %s134, %s136
      %p140 = scmp.eq.s32.totalorder %s16, 0
      %p141 = por %p139, %p140
      %p142 = scmp.ne.s32.totalorder %s134, %s136
      %p143 = scmp.eq.s32.totalorder %s21, 1
      %p144 = por %p142, %p143
      %p145 = scmp.ne.s32.totalorder %s136, %s137
      %p146 = scmp.eq.s32.totalorder %s21, 0
      %p147 = por %p145, %p146
      %p148 = scmp.ne.s32.totalorder %s136, %s137
      %p149 = scmp.eq.s32.totalorder %s22, 1
      %p150 = por %p148, %p149
      %p152 = scmp.ne.s32.totalorder %s137, %s151
      %p153 = scmp.eq.s32.totalorder %s22, 0
      %p154 = por %p152, %p153
      %s155 = ssub.s32 %s16, %s23
      %p156 = scmp.eq.s32.totalorder %s155, 0
      %s158 = sadd.s32 %s157, 1
      %s159 = scalar_select %p156, %s157, %s158
      %p162 = pneg %p156
      %p163 = scmp.eq.s32.totalorder %s16, 1
      %p164 = por %p162, %p163
      %p165 = scmp.ne.s32.totalorder %s157, %s160
      %p166 = scmp.eq.s32.totalorder %s16, 0
      %p167 = por %p165, %p166
      %p168 = scmp.ne.s32.totalorder %s157, %s160
      %p169 = scmp.eq.s32.totalorder %s21, 1
      %p170 = por %p168, %p169
      %p171 = scmp.ne.s32.totalorder %s160, %s161
      %p172 = scmp.eq.s32.totalorder %s21, 0
      %p173 = por %p171, %p172
      %p174 = scmp.ne.s32.totalorder %s160, %s161
      %p175 = scmp.eq.s32.totalorder %s22, 1
      %p176 = por %p174, %p175
      %p178 = scmp.ne.s32.totalorder %s161, %s177
      %p179 = scmp.eq.s32.totalorder %s22, 0
      %p180 = por %p178, %p179
      %p181 = scmp.le.s32.totalorder 1, %s16
      %p182 = scmp.lt.s32.totalorder %s16, 3
      %p183 = pnand %p181, %p182
      %p184 = pneg %p183
      // Predicated region
      $region9: #{aug_policy_forward.3} parent=5 // pred_check
        _
      $region10: #{aug_policy_forward.3} parent=5 // pred_check_branch
        %186 = sbr.rel (%p183) target = $region12
      $region11: #{aug_policy_forward.3} parent=5 // pred_region
        %s187 = ssub.s32 %s16, 1
        // Predicated region
        $region13: #{aug_policy_forward.3} parent=11 // pred_check
          %p188 = pneg %p37
        $region14: #{aug_policy_forward.3} parent=11 // pred_check_branch
          %190 = sbr.rel (%p188) target = $region16
        $region15: #{aug_policy_forward.3} parent=11 // pred_region
          %192 = vsyncadd [#allocation4], 0
          %s194 = sshll.u32 %s0, 4
          %s195 = int_to_ptr.vmem [resolvable:$true] %s194
          %197 = dma.vmem_to_smem %s195, 16, [#allocation2], [#allocation4]
        $region16: #{aug_policy_forward.3} parent=11 // pred_fallthru
          _
        // Predicated region
        $region17: #{aug_policy_forward.3} parent=11 // pred_check
          %p198 = pneg %p84
        $region18: #{aug_policy_forward.3} parent=11 // pred_check_branch
          %200 = sbr.rel (%p198) target = $region20
        $region19: #{aug_policy_forward.3} parent=11 // pred_region
          _
        $region20: #{aug_policy_forward.3} parent=11 // pred_fallthru
          _
        // Predicated region
        $region21: #{aug_policy_forward.3} parent=11 // pred_check
          %p201 = pneg %p105
        $region22: #{aug_policy_forward.3} parent=11 // pred_check_branch
          %203 = sbr.rel (%p201) target = $region24
        $region23: #{aug_policy_forward.3} parent=11 // pred_region
          _
        $region24: #{aug_policy_forward.3} parent=11 // pred_fallthru
          _
        // Predicated region
        $region25: #{aug_policy_forward.3} parent=11 // pred_check
          %p204 = pneg %p126
        $region26: #{aug_policy_forward.3} parent=11 // pred_check_branch
          %206 = sbr.rel (%p204) target = $region28
        $region27: #{aug_policy_forward.3} parent=11 // pred_region
          _
        $region28: #{aug_policy_forward.3} parent=11 // pred_fallthru
          _
        // Predicated region
        $region29: #{aug_policy_forward.3} parent=11 // pred_check
          %p207 = pneg %p147
        $region30: #{aug_policy_forward.3} parent=11 // pred_check_branch
          %209 = sbr.rel (%p207) target = $region32
        $region31: #{aug_policy_forward.3} parent=11 // pred_region
          _
        $region32: #{aug_policy_forward.3} parent=11 // pred_fallthru
          _
      $region12: #{aug_policy_forward.3} parent=5 // pred_fallthru
        _
      %p210 = scmp.lt.s32.totalorder %s16, 2
      // Predicated region
      $region33: #{aug_policy_forward.3} parent=5 // pred_check
        %p211 = pneg %p210
      $region34: #{aug_policy_forward.3} parent=5 // pred_check_branch
        %213 = sbr.rel (%p211) target = $region36
      $region35: #{aug_policy_forward.3} parent=5 // pred_region
        // Predicated region
        $region37: #{aug_policy_forward.3} parent=35 // pred_check
          %p214 = pneg %p57
        $region38: #{aug_policy_forward.3} parent=35 // pred_check_branch
          %216 = sbr.rel (%p214) target = $region40
        $region39: #{aug_policy_forward.3} parent=35 // pred_region
          %p217 = scmp.lt.s32.totalorder %s16, 1
          %s218 = scalar_select %p217, %s16, 1
          %s219 = smul.addr %s218, 6
          %s220 = smul.addr %s219, 8
          %s221 = scalar_lea.vmem %s1, %s220
        $region40: #{aug_policy_forward.3} parent=35 // pred_fallthru
          _
      $region36: #{aug_policy_forward.3} parent=5 // pred_fallthru
        _
      %p222 = scmp.le.s32.totalorder 1, %s16
      %p223 = scmp.lt.s32.totalorder %s16, 3
      %p224 = pnand %p222, %p223
      %p225 = pneg %p224
      // Predicated region
      $region41: #{aug_policy_forward.3} parent=5 // pred_check
        _
      $region42: #{aug_policy_forward.3} parent=5 // pred_check_branch
        %227 = sbr.rel (%p224) target = $region44
      $region43: #{aug_policy_forward.3} parent=5 // pred_region
        %s228 = ssub.s32 %s16, 1
        // Predicated region
        $region45: #{aug_policy_forward.3} parent=43 // pred_check
          %p229 = pneg %p37
        $region46: #{aug_policy_forward.3} parent=43 // pred_check_branch
          %231 = sbr.rel (%p229) target = $region48
        $region47: #{aug_policy_forward.3} parent=43 // pred_region
          %233 = dma.done [#allocation4], 16
        $region48: #{aug_policy_forward.3} parent=43 // pred_fallthru
          _
        %234 = sfence
        %p235 = pneg %p37
        %p236 = pneg %p34
        %p237 = scmp.lt.s32.totalorder %s21, 1
        %s238 = scalar_select %p237, %s21, 1
        %s239 = smul.addr %s238, 6
        %s240 = smul.addr %s239, 8
        %s241 = scalar_lea.vmem %s1, %s240
        %p242 = pneg %p63
        %p243 = pneg %p60
        %p244 = pneg %p84
        %p245 = pneg %p81
        %p246 = pneg %p105
        %p247 = pneg %p102
        %p248 = pneg %p126
        %p249 = pneg %p123
        %p250 = pneg %p147
        %p251 = pneg %p144
        %p252 = pneg %p173
        %p253 = pneg %p170
        %s254 = sand.u32 %s160, 1
        %s255 = scalar_lea.sflag [#allocation3], %s254
        %s256 = sand.u32 %s160, 1
        %s257 = smul.addr %s256, 48
        %s258 = scalar_lea.vmem [#allocation5], %s257
        %p259 = scmp.lt.s32.totalorder %s21, 1
        %s260 = scalar_select %p259, %s21, 1
        %s261 = smul.addr %s260, 6
        %s262 = smul.addr %s261, 8
        %s263 = scalar_lea.vmem %s1, %s262
        %v264 = vld [vmem:[%s263] sm:$0xff]
        %v265 = vld [vmem:[%s263 + $0x8] sm:$0xff]
        %s266 = scalar_lea.vmem %s263, 16
        %v267 = vld [vmem:[%s266] sm:$0xff]
        %v268 = vld [vmem:[%s266 + $0x8] sm:$0xff]
        %s269 = scalar_lea.vmem %s263, 32
        %v270 = vld [vmem:[%s269] sm:$0xff]
        %v271 = vld [vmem:[%s269 + $0x8] sm:$0xff]
        %s272 = sld [smem:[#allocation2]]
        %s273 = sld [smem:[#allocation2 + $0x1]]
        %s274 = sld [smem:[#allocation2 + $0x2]]
        %s275 = sld [smem:[#allocation2 + $0x3]]
        %s276 = sld [smem:[#allocation2 + $0x4]]
        %s277 = sld [smem:[#allocation2 + $0x5]]
        %s278 = sld [smem:[#allocation2 + $0x6]]
        %s279 = sld [smem:[#allocation2 + $0x7]]
        %s280 = sld [smem:[#allocation2 + $0x8]]
        %s281 = sld [smem:[#allocation2 + $0x9]]
        %s282 = sld [smem:[#allocation2 + $0xa]]
        %s283 = sld [smem:[#allocation2 + $0xb]]
        %s284 = sld [smem:[#allocation2 + $0xc]]
        %s285 = sld [smem:[#allocation2 + $0xd]]
        %s286 = sld [smem:[#allocation2 + $0xe]]
        %s287 = sld [smem:[#allocation2 + $0xf]]
        %v288 = vld [vmem:[%s2] sm:$0xff]
        %v289 = vld [vmem:[%s2 + $0x8] sm:$0xff]
        %v290 = vld [vmem:[%s3] sm:$0xff]
        %v291 = vld [vmem:[%s3 + $0x8] sm:$0xff]
        %v292 = vld [vmem:[%s4] sm:$0xff]
        %v293 = vld [vmem:[%s4 + $0x8] sm:$0xff]
        %v294 = vld [vmem:[%s5] sm:$0xff]
        %v295 = vld [vmem:[%s5 + $0x8] sm:$0xff]
        %v296 = vmul.f32 %v264, 0.299
        %v297 = vmul.f32 %v265, 0.299
        %v298 = vmul.f32 %v267, 0.587
        %v299 = vmul.f32 %v268, 0.587
        %v300 = vadd.f32 %v296, %v298
        %v301 = vadd.f32 %v297, %v299
        %v302 = vmul.f32 %v270, 0.114
        %v303 = vmul.f32 %v271, 0.114
        %v304 = vadd.f32 %v300, %v302
        %v305 = vadd.f32 %v301, %v303
        %v306 = vmul.f32 %v270, 0.11
        %v307 = vmul.f32 %v271, 0.11
        %v308 = vadd.f32 %v300, %v306
        %v309 = vadd.f32 %v301, %v307
        %vm310 = vcmask 130048
        %v311 = vsel %vm310, %v304, 0.0
        %v312 = vsel %vm310, %v305, 0.0
        %v313 = vadd.f32 %v311, %v312
        %314 = vadd.xlane.f32.xlu0 %v313
        %v315 = vpop.xlane.xlu0 %314
        %v316 = vrot.slane %v315, 4
        %v317 = vadd.f32 %v315, %v316
        %v318 = vrot.slane %v317, 2
        %v319 = vadd.f32 %v317, %v318
        %v320 = vrot.slane %v319, 1
        %v321 = vadd.f32 %v319, %v320
        %s322 = vtos %v321
        %s323 = smul.f32 %s322, 0.00390625
        %v324 = vmax.f32 %v264, %v267
        %v325 = vmax.f32 %v265, %v268
        %v326 = vmax.f32 %v324, %v270
        %v327 = vmax.f32 %v325, %v271
        %v328 = vmin.f32 %v264, %v267
        %v329 = vmin.f32 %v265, %v268
        %v330 = vmin.f32 %v328, %v270
        %v331 = vmin.f32 %v329, %v271
        %v332 = vsub.f32 %v326, %v330
        %v333 = vsub.f32 %v327, %v331
        %v334 = vadd.f32 %v326, 1e-08
        %v335 = vadd.f32 %v327, 1e-08
        %v336 = vrcp.pop %v334
        %v337 = vmul.f32 %v334, %v336
        %v338 = vsub.f32 1.0, %v337
        %v339 = vmul.f32 %v336, %v338
        %v340 = vadd.f32 %v336, %v339
        %vm341 = vweird.f32 %v334
        %vm342 = vweird.f32 %v336
        %vm343 = vmor %vm341, %vm342
        %v344 = vsel %vm343, %v336, %v340
        %v345 = vand.u32 2147483647, %v334
        %vm346 = vcmp.eq.f32.partialorder %v345, 8.507059e+37
        %v347 = vand.u32 %v334, 2147483648
        %v348 = vor.u32 1.1754944e-38, %v347
        %v349 = vsel %vm346, %v348, %v344
        %v350 = vmul.f32 %v332, %v349
        %v351 = vrcp.pop %v335
        %v352 = vmul.f32 %v335, %v351
        %v353 = vsub.f32 1.0, %v352
        %v354 = vmul.f32 %v351, %v353
        %v355 = vadd.f32 %v351, %v354
        %vm356 = vweird.f32 %v335
        %vm357 = vweird.f32 %v351
        %vm358 = vmor %vm356, %vm357
        %v359 = vsel %vm358, %v351, %v355
        %v360 = vand.u32 2147483647, %v335
        %vm361 = vcmp.eq.f32.partialorder %v360, 8.507059e+37
        %v362 = vand.u32 %v335, 2147483648
        %v363 = vor.u32 1.1754944e-38, %v362
        %v364 = vsel %vm361, %v363, %v359
        %v365 = vmul.f32 %v333, %v364
        %vm366 = vcmp.eq.f32.partialorder %v332, 0.0
        %vm367 = vcmp.eq.f32.partialorder %v333, 0.0
        %v368 = vsel %vm366, 1.0, %v332
        %v369 = vsel %vm367, 1.0, %v333
        %vm370 = vcmp.ge.f32.partialorder %v264, %v267
        %vm371 = vcmp.ge.f32.partialorder %v265, %v268
        %vm372 = vcmp.ge.f32.partialorder %v264, %v270
        %vm373 = vcmp.ge.f32.partialorder %v265, %v271
        %vm374 = vmand %vm370, %vm372
        %vm375 = vmand %vm371, %vm373
        %vm376 = vmxor %vm374, 1
        %vm377 = vmxor %vm375, 1
        %vm378 = vcmp.ge.f32.partialorder %v267, %v270
        %vm379 = vcmp.ge.f32.partialorder %v268, %v271
        %vm380 = vmand %vm376, %vm378
        %vm381 = vmand %vm377, %vm379
        %v382 = vsub.f32 %v267, %v270
        %v383 = vsub.f32 %v268, %v271
        %v384 = vsub.f32 %v270, %v264
        %v385 = vsub.f32 %v271, %v265
        %v386 = vmul.f32 %v332, 2.0
        %v387 = vmul.f32 %v333, 2.0
        %v388 = vadd.f32 %v384, %v386
        %v389 = vadd.f32 %v385, %v387
        %v390 = vsub.f32 %v264, %v267
        %v391 = vsub.f32 %v265, %v268
        %v392 = vmul.f32 %v332, 4.0
        %v393 = vmul.f32 %v333, 4.0
        %v394 = vadd.f32 %v390, %v392
        %v395 = vadd.f32 %v391, %v393
        %v396 = vsel %vm380, %v388, %v394
        %v397 = vsel %vm381, %v389, %v395
        %v398 = vsel %vm374, %v382, %v396
        %v399 = vsel %vm375, %v383, %v397
        %v400 = vrcp.pop %v368
        %v401 = vmul.f32 %v368, %v400
        %v402 = vsub.f32 1.0, %v401
        %v403 = vmul.f32 %v400, %v402
        %v404 = vadd.f32 %v400, %v403
        %vm405 = vweird.f32 %v368
        %vm406 = vweird.f32 %v400
        %vm407 = vmor %vm405, %vm406
        %v408 = vsel %vm407, %v400, %v404
        %v409 = vand.u32 2147483647, %v368
        %vm410 = vcmp.eq.f32.partialorder %v409, 8.507059e+37
        %v411 = vand.u32 %v368, 2147483648
        %v412 = vor.u32 1.1754944e-38, %v411
        %v413 = vsel %vm410, %v412, %v408
        %v414 = vmul.f32 %v398, %v413
        %v415 = vrcp.pop %v369
        %v416 = vmul.f32 %v369, %v415
        %v417 = vsub.f32 1.0, %v416
        %v418 = vmul.f32 %v415, %v417
        %v419 = vadd.f32 %v415, %v418
        %vm420 = vweird.f32 %v369
        %vm421 = vweird.f32 %v415
        %vm422 = vmor %vm420, %vm421
        %v423 = vsel %vm422, %v415, %v419
        %v424 = vand.u32 2147483647, %v369
        %vm425 = vcmp.eq.f32.partialorder %v424, 8.507059e+37
        %v426 = vand.u32 %v369, 2147483648
        %v427 = vor.u32 1.1754944e-38, %v426
        %v428 = vsel %vm425, %v427, %v423
        %v429 = vmul.f32 %v399, %v428
        %v430 = vmul.f32 %v414, 0.16666667
        %v431 = vmul.f32 %v429, 0.16666667
        %v432 = vfloor.f32 %v430
        %v433 = vfloor.f32 %v431
        %v434 = vsub.f32 %v430, %v432
        %v435 = vsub.f32 %v431, %v433
        %v436 = vstv %s284
        %v437 = vadd.f32 %v434, %v436
        %v438 = vadd.f32 %v435, %v436
        %v439 = vfloor.f32 %v437
        %v440 = vfloor.f32 %v438
        %v441 = vsub.f32 %v437, %v439
        %v442 = vsub.f32 %v438, %v440
        %v443 = vmul.f32 %v441, 6.0
        %v444 = vmul.f32 %v442, 6.0
        %v445 = vfloor.f32 %v443
        %v446 = vfloor.f32 %v444
        %v447 = vmin.f32 %v445, 5.0
        %v448 = vmin.f32 %v446, 5.0
        %v449 = vsub.f32 %v443, %v445
        %v450 = vsub.f32 %v444, %v446
        %v451 = vsub.f32 1.0, %v350
        %v452 = vsub.f32 1.0, %v365
        %v453 = vmul.f32 %v326, %v451
        %v454 = vmul.f32 %v327, %v452
        %v455 = vmul.f32 %v449, %v350
        %v456 = vmul.f32 %v450, %v365
        %v457 = vsub.f32 1.0, %v455
        %v458 = vsub.f32 1.0, %v456
        %v459 = vmul.f32 %v326, %v457
        %v460 = vmul.f32 %v327, %v458
        %v461 = vsub.f32 1.0, %v449
        %v462 = vsub.f32 1.0, %v450
        %v463 = vmul.f32 %v461, %v350
        %v464 = vmul.f32 %v462, %v365
        %v465 = vsub.f32 1.0, %v463
        %v466 = vsub.f32 1.0, %v464
        %v467 = vmul.f32 %v326, %v465
        %v468 = vmul.f32 %v327, %v466
        %vm469 = vcmp.eq.f32.partialorder %v447, 0.0
        %vm470 = vcmp.eq.f32.partialorder %v448, 0.0
        %vm471 = vcmp.eq.f32.partialorder %v447, 1.0
        %vm472 = vcmp.eq.f32.partialorder %v448, 1.0
        %vm473 = vcmp.eq.f32.partialorder %v447, 2.0
        %vm474 = vcmp.eq.f32.partialorder %v448, 2.0
        %vm475 = vcmp.eq.f32.partialorder %v447, 3.0
        %vm476 = vcmp.eq.f32.partialorder %v448, 3.0
        %vm477 = vcmp.eq.f32.partialorder %v447, 4.0
        %vm478 = vcmp.eq.f32.partialorder %v448, 4.0
        %v479 = vsel %vm477, %v467, %v326
        %v480 = vsel %vm478, %v468, %v327
        %v481 = vsel %vm475, %v453, %v479
        %v482 = vsel %vm476, %v454, %v480
        %v483 = vsel %vm473, %v453, %v481
        %v484 = vsel %vm474, %v454, %v482
        %v485 = vsel %vm471, %v459, %v483
        %v486 = vsel %vm472, %v460, %v484
        %v487 = vsel %vm469, %v326, %v485
        %v488 = vsel %vm470, %v327, %v486
        %v489 = vsel %vm475, %v459, %v453
        %v490 = vsel %vm476, %v460, %v454
        %v491 = vsel %vm473, %v326, %v489
        %v492 = vsel %vm474, %v327, %v490
        %v493 = vsel %vm471, %v326, %v491
        %v494 = vsel %vm472, %v327, %v492
        %v495 = vsel %vm469, %v467, %v493
        %v496 = vsel %vm470, %v468, %v494
        %v497 = vsel %vm477, %v326, %v459
        %v498 = vsel %vm478, %v327, %v460
        %v499 = vsel %vm475, %v326, %v497
        %v500 = vsel %vm476, %v327, %v498
        %v501 = vsel %vm473, %v467, %v499
        %v502 = vsel %vm474, %v468, %v500
        %v503 = vsel %vm471, %v453, %v501
        %v504 = vsel %vm472, %v454, %v502
        %v505 = vsel %vm469, %v453, %v503
        %v506 = vsel %vm470, %v454, %v504
        %v507 = vstv %s282
        %v508 = vmul.f32 %v264, %v507
        %v509 = vmul.f32 %v265, %v507
        %v510 = vmax.f32 %v508, 0.0
        %v511 = vmax.f32 %v509, 0.0
        %v512 = vmin.f32 %v510, 1.0
        %v513 = vmin.f32 %v511, 1.0
        %v514 = vstv %s283
        %v515 = vmul.f32 %v264, %v514
        %v516 = vmul.f32 %v265, %v514
        %s517 = ssub.f32 1.0, %s283
        %s518 = smul.f32 %s323, %s517
        %v519 = vstv %s518
        %v520 = vadd.f32 %v515, %v519
        %v521 = vadd.f32 %v516, %v519
        %v522 = vmax.f32 %v520, 0.0
        %v523 = vmax.f32 %v521, 0.0
        %v524 = vmin.f32 %v522, 1.0
        %v525 = vmin.f32 %v523, 1.0
        %v526 = vmax.f32 %v487, 0.0
        %v527 = vmax.f32 %v488, 0.0
        %v528 = vmin.f32 %v526, 1.0
        %v529 = vmin.f32 %v527, 1.0
        %v530 = vstv %s285
        %v531 = vmul.f32 %v264, %v530
        %v532 = vmul.f32 %v265, %v530
        %s533 = ssub.f32 1.0, %s285
        %v534 = vstv %s533
        %v535 = vmul.f32 %v304, %v534
        %v536 = vmul.f32 %v305, %v534
        %v537 = vadd.f32 %v531, %v535
        %v538 = vadd.f32 %v532, %v536
        %v539 = vmax.f32 %v537, 0.0
        %v540 = vmax.f32 %v538, 0.0
        %v541 = vmin.f32 %v539, 1.0
        %v542 = vmin.f32 %v540, 1.0
        %v543 = vstv %s286
        %vm544 = vcmp.lt.f32.partialorder %v264, %v543
        %vm545 = vcmp.lt.f32.partialorder %v265, %v543
        %v546 = vsub.f32 1.0, %v264
        %v547 = vsub.f32 1.0, %v265
        %v548 = vsel %vm544, %v264, %v546
        %v549 = vsel %vm545, %v265, %v547
        %v550 = vmax.f32 %v548, 0.0
        %v551 = vmax.f32 %v549, 0.0
        %v552 = vmin.f32 %v550, 1.0
        %v553 = vmin.f32 %v551, 1.0
        %v555 = vsel %vm310, %v264, 0
        %v558 = vsel %vm310, %v265, 0
        %560 = vmatpush.msra.mxu0 0.0
        %561 = vmatpush.msra.mxu0 0.0
        %562 = vmatpush.msra.mxu0 0.0
        %563 = vmatpush.msra.mxu0 0.0
        %564 = vmatpush.msra.mxu0 0.0
        %565 = vmatpush.msra.mxu0 0.0
        %566 = vmatpush.msra.mxu0 0.0
        %567 = vmatpush.msra.mxu0 0.0
        %568 = vmatpush.msra.mxu0 0.0
        %569 = vmatpush.msra.mxu0 0.0
        %570 = vmatpush.msra.mxu0 0.0
        %571 = vmatpush.msra.mxu0 0.0
        %572 = vmatpush.msra.mxu0 0.0
        %573 = vmatpush.msra.mxu0 0.0
        %574 = vmatpush.msra.mxu0 %v291
        %575 = vmatpush.msra.mxu0 %v290
        %576 = vmatmul.f32.gmra.mxu0 %v555
        %v577 = vpop.f32.mrf.mxu0
        %v578 = vadd.f32 0.0, %v577
        %579 = vmatmul.f32.gmra.mxu0 %v558
        %v580 = vpop.f32.mrf.mxu0
        %v581 = vadd.f32 0.0, %v580
        %582 = vdwg.mxu0
        %v584 = vsel %vm310, %v288, 0
        %v587 = vsel %vm310, %v289, 0
        %589 = vmatpush.msra.mxu0 0.0
        %590 = vmatpush.msra.mxu0 0.0
        %591 = vmatpush.msra.mxu0 0.0
        %592 = vmatpush.msra.mxu0 0.0
        %593 = vmatpush.msra.mxu0 0.0
        %594 = vmatpush.msra.mxu0 0.0
        %595 = vmatpush.msra.mxu0 0.0
        %596 = vmatpush.msra.mxu0 0.0
        %597 = vmatpush.msra.mxu0 0.0
        %598 = vmatpush.msra.mxu0 0.0
        %599 = vmatpush.msra.mxu0 0.0
        %600 = vmatpush.msra.mxu0 0.0
        %601 = vmatpush.msra.mxu0 0.0
        %602 = vmatpush.msra.mxu0 0.0
        %603 = vmatpush.msra.mxu0 %v581
        %604 = vmatpush.msra.mxu0 %v578
        %605 = vmatmul.f32.gmra.mxu0 %v584
        %v606 = vpop.f32.mrf.mxu0
        %v607 = vadd.f32 0.0, %v606
        %608 = vmatmul.f32.gmra.mxu0 %v587
        %v609 = vpop.f32.mrf.mxu0
        %v610 = vadd.f32 0.0, %v609
        %611 = vdwg.mxu0
        %v612 = vmax.f32 %v607, 0.0
        %v613 = vmax.f32 %v610, 0.0
        %v614 = vmin.f32 %v612, 1.0
        %v615 = vmin.f32 %v613, 1.0
        %v616 = vmul.f32 %v264, 255.0
        %v617 = vmul.f32 %v265, 255.0
        %v618 = vfloor.f32 %v616
        %v619 = vfloor.f32 %v617
        %v620 = vmul.f32 %v618, 0.003921569
        %v621 = vmul.f32 %v619, 0.003921569
        %v622 = vmax.f32 %v620, 0.0
        %v623 = vmax.f32 %v621, 0.0
        %v624 = vmin.f32 %v622, 1.0
        %v625 = vmin.f32 %v623, 1.0
        %626 = vmatpush.msra.mxu0 0.0
        %627 = vmatpush.msra.mxu0 0.0
        %628 = vmatpush.msra.mxu0 0.0
        %629 = vmatpush.msra.mxu0 0.0
        %630 = vmatpush.msra.mxu0 0.0
        %631 = vmatpush.msra.mxu0 0.0
        %632 = vmatpush.msra.mxu0 0.0
        %633 = vmatpush.msra.mxu0 0.0
        %634 = vmatpush.msra.mxu0 0.0
        %635 = vmatpush.msra.mxu0 0.0
        %636 = vmatpush.msra.mxu0 0.0
        %637 = vmatpush.msra.mxu0 0.0
        %638 = vmatpush.msra.mxu0 0.0
        %639 = vmatpush.msra.mxu0 0.0
        %640 = vmatpush.msra.mxu0 %v295
        %641 = vmatpush.msra.mxu0 %v294
        %642 = vmatmul.f32.gmra.mxu0 %v555
        %v643 = vpop.f32.mrf.mxu0
        %v644 = vadd.f32 0.0, %v643
        %645 = vmatmul.f32.gmra.mxu0 %v558
        %v646 = vpop.f32.mrf.mxu0
        %v647 = vadd.f32 0.0, %v646
        %648 = vdwg.mxu0
        %v649 = vmul.f32 %v264, 4.0
        %v650 = vmul.f32 %v265, 4.0
        %v652 = vsel %vm310, %v292, 0
        %v655 = vsel %vm310, %v293, 0
        %657 = vmatpush.msra.mxu0 0.0
        %658 = vmatpush.msra.mxu0 0.0
        %659 = vmatpush.msra.mxu0 0.0
        %660 = vmatpush.msra.mxu0 0.0
        %661 = vmatpush.msra.mxu0 0.0
        %662 = vmatpush.msra.mxu0 0.0
        %663 = vmatpush.msra.mxu0 0.0
        %664 = vmatpush.msra.mxu0 0.0
        %665 = vmatpush.msra.mxu0 0.0
        %666 = vmatpush.msra.mxu0 0.0
        %667 = vmatpush.msra.mxu0 0.0
        %668 = vmatpush.msra.mxu0 0.0
        %669 = vmatpush.msra.mxu0 0.0
        %670 = vmatpush.msra.mxu0 0.0
        %671 = vmatpush.msra.mxu0 %v647
        %672 = vmatpush.msra.mxu0 %v644
        %673 = vmatmul.f32.gmra.mxu0 %v652
        %v674 = vpop.f32.mrf.mxu0
        %v675 = vadd.f32 %v649, %v674
        %676 = vmatmul.f32.gmra.mxu0 %v655
        %v677 = vpop.f32.mrf.mxu0
        %v678 = vadd.f32 %v650, %v677
        %679 = vdwg.mxu0
        %v680 = vmul.f32 %v675, 0.07692308
        %v681 = vmul.f32 %v678, 0.07692308
        %s682 = ssub.f32 1.0, %s287
        %v683 = vsub.f32 %v264, %v680
        %v684 = vsub.f32 %v265, %v681
        %v685 = vstv %s682
        %v686 = vmul.f32 %v685, %v683
        %v687 = vmul.f32 %v685, %v684
        %v688 = vadd.f32 %v680, %v686
        %v689 = vadd.f32 %v681, %v687
        %v690 = vmax.f32 %v688, 0.0
        %v691 = vmax.f32 %v689, 0.0
        %v692 = vmin.f32 %v690, 1.0
        %v693 = vmin.f32 %v691, 1.0
        %v694 = vstv %s272
        %v695 = vmul.f32 %v694, %v264
        %v696 = vmul.f32 %v694, %v265
        %v697 = vstv %s273
        %v698 = vmul.f32 %v697, %v512
        %v699 = vmul.f32 %v697, %v513
        %v700 = vadd.f32 %v695, %v698
        %v701 = vadd.f32 %v696, %v699
        %v702 = vstv %s274
        %v703 = vmul.f32 %v702, %v524
        %v704 = vmul.f32 %v702, %v525
        %v705 = vadd.f32 %v700, %v703
        %v706 = vadd.f32 %v701, %v704
        %v707 = vstv %s275
        %v708 = vmul.f32 %v707, %v528
        %v709 = vmul.f32 %v707, %v529
        %v710 = vadd.f32 %v705, %v708
        %v711 = vadd.f32 %v706, %v709
        %v712 = vstv %s276
        %v713 = vmul.f32 %v712, %v541
        %v714 = vmul.f32 %v712, %v542
        %v715 = vadd.f32 %v710, %v713
        %v716 = vadd.f32 %v711, %v714
        %v717 = vstv %s277
        %v718 = vmul.f32 %v717, %v552
        %v719 = vmul.f32 %v717, %v553
        %v720 = vadd.f32 %v715, %v718
        %v721 = vadd.f32 %v716, %v719
        %v722 = vstv %s278
        %v723 = vmul.f32 %v722, %v614
        %v724 = vmul.f32 %v722, %v615
        %v725 = vadd.f32 %v720, %v723
        %v726 = vadd.f32 %v721, %v724
        %v727 = vstv %s279
        %v728 = vmul.f32 %v727, %v624
        %v729 = vmul.f32 %v727, %v625
        %v730 = vadd.f32 %v725, %v728
        %v731 = vadd.f32 %v726, %v729
        %v732 = vstv %s280
        %v733 = vmul.f32 %v732, %v308
        %v734 = vmul.f32 %v732, %v309
        %v735 = vadd.f32 %v730, %v733
        %v736 = vadd.f32 %v731, %v734
        %v737 = vstv %s281
        %v738 = vmul.f32 %v737, %v692
        %v739 = vmul.f32 %v737, %v693
        %v740 = vadd.f32 %v735, %v738
        %v741 = vadd.f32 %v736, %v739
        %vm742 = vcmp.eq.f32.partialorder %v740, %v740
        %vm743 = vcmp.eq.f32.partialorder %v741, %v741
        %v744 = vand.u32 2147483647, %v740
        %v745 = vand.u32 2147483647, %v741
        %vm746 = vcmp.le.f32.partialorder %v744, 3.4028235e+38
        %vm747 = vcmp.le.f32.partialorder %v745, 3.4028235e+38
        %vm748 = vmand %vm742, %vm746
        %vm749 = vmand %vm743, %vm747
        %v750 = vsel %vm748, %v740, 0.0
        %v751 = vsel %vm749, %v741, 0.0
        %v752 = vmax.f32 %v750, 0.0
        %v753 = vmax.f32 %v751, 0.0
        %v754 = vmin.f32 %v752, 1.0
        %v755 = vmin.f32 %v753, 1.0
        %756 = vst.msk [vmem:[%s258] sm:$0xff] %vm310, %v754
        %757 = vst.msk [vmem:[%s258 + $0x8] sm:$0xff] %vm310, %v755
        %v758 = vmul.f32 %v267, %v507
        %v759 = vmul.f32 %v268, %v507
        %v760 = vmax.f32 %v758, 0.0
        %v761 = vmax.f32 %v759, 0.0
        %v762 = vmin.f32 %v760, 1.0
        %v763 = vmin.f32 %v761, 1.0
        %v764 = vmul.f32 %v267, %v514
        %v765 = vmul.f32 %v268, %v514
        %v766 = vadd.f32 %v764, %v519
        %v767 = vadd.f32 %v765, %v519
        %v768 = vmax.f32 %v766, 0.0
        %v769 = vmax.f32 %v767, 0.0
        %v770 = vmin.f32 %v768, 1.0
        %v771 = vmin.f32 %v769, 1.0
        %v772 = vmax.f32 %v495, 0.0
        %v773 = vmax.f32 %v496, 0.0
        %v774 = vmin.f32 %v772, 1.0
        %v775 = vmin.f32 %v773, 1.0
        %v776 = vmul.f32 %v267, %v530
        %v777 = vmul.f32 %v268, %v530
        %v778 = vadd.f32 %v776, %v535
        %v779 = vadd.f32 %v777, %v536
        %v780 = vmax.f32 %v778, 0.0
        %v781 = vmax.f32 %v779, 0.0
        %v782 = vmin.f32 %v780, 1.0
        %v783 = vmin.f32 %v781, 1.0
        %vm784 = vcmp.lt.f32.partialorder %v267, %v543
        %vm785 = vcmp.lt.f32.partialorder %v268, %v543
        %v786 = vsub.f32 1.0, %v267
        %v787 = vsub.f32 1.0, %v268
        %v788 = vsel %vm784, %v267, %v786
        %v789 = vsel %vm785, %v268, %v787
        %v790 = vmax.f32 %v788, 0.0
        %v791 = vmax.f32 %v789, 0.0
        %v792 = vmin.f32 %v790, 1.0
        %v793 = vmin.f32 %v791, 1.0
        %v795 = vsel %vm310, %v267, 0
        %v798 = vsel %vm310, %v268, 0
        %800 = vmatpush.msra.mxu0 0.0
        %801 = vmatpush.msra.mxu0 0.0
        %802 = vmatpush.msra.mxu0 0.0
        %803 = vmatpush.msra.mxu0 0.0
        %804 = vmatpush.msra.mxu0 0.0
        %805 = vmatpush.msra.mxu0 0.0
        %806 = vmatpush.msra.mxu0 0.0
        %807 = vmatpush.msra.mxu0 0.0
        %808 = vmatpush.msra.mxu0 0.0
        %809 = vmatpush.msra.mxu0 0.0
        %810 = vmatpush.msra.mxu0 0.0
        %811 = vmatpush.msra.mxu0 0.0
        %812 = vmatpush.msra.mxu0 0.0
        %813 = vmatpush.msra.mxu0 0.0
        %814 = vmatpush.msra.mxu0 %v291
        %815 = vmatpush.msra.mxu0 %v290
        %816 = vmatmul.f32.gmra.mxu0 %v795
        %v817 = vpop.f32.mrf.mxu0
        %v818 = vadd.f32 0.0, %v817
        %819 = vmatmul.f32.gmra.mxu0 %v798
        %v820 = vpop.f32.mrf.mxu0
        %v821 = vadd.f32 0.0, %v820
        %822 = vdwg.mxu0
        %823 = vmatpush.msra.mxu0 0.0
        %824 = vmatpush.msra.mxu0 0.0
        %825 = vmatpush.msra.mxu0 0.0
        %826 = vmatpush.msra.mxu0 0.0
        %827 = vmatpush.msra.mxu0 0.0
        %828 = vmatpush.msra.mxu0 0.0
        %829 = vmatpush.msra.mxu0 0.0
        %830 = vmatpush.msra.mxu0 0.0
        %831 = vmatpush.msra.mxu0 0.0
        %832 = vmatpush.msra.mxu0 0.0
        %833 = vmatpush.msra.mxu0 0.0
        %834 = vmatpush.msra.mxu0 0.0
        %835 = vmatpush.msra.mxu0 0.0
        %836 = vmatpush.msra.mxu0 0.0
        %837 = vmatpush.msra.mxu0 %v821
        %838 = vmatpush.msra.mxu0 %v818
        %839 = vmatmul.f32.gmra.mxu0 %v584
        %v840 = vpop.f32.mrf.mxu0
        %v841 = vadd.f32 0.0, %v840
        %842 = vmatmul.f32.gmra.mxu0 %v587
        %v843 = vpop.f32.mrf.mxu0
        %v844 = vadd.f32 0.0, %v843
        %845 = vdwg.mxu0
        %v846 = vmax.f32 %v841, 0.0
        %v847 = vmax.f32 %v844, 0.0
        %v848 = vmin.f32 %v846, 1.0
        %v849 = vmin.f32 %v847, 1.0
        %v850 = vmul.f32 %v267, 255.0
        %v851 = vmul.f32 %v268, 255.0
        %v852 = vfloor.f32 %v850
        %v853 = vfloor.f32 %v851
        %v854 = vmul.f32 %v852, 0.003921569
        %v855 = vmul.f32 %v853, 0.003921569
        %v856 = vmax.f32 %v854, 0.0
        %v857 = vmax.f32 %v855, 0.0
        %v858 = vmin.f32 %v856, 1.0
        %v859 = vmin.f32 %v857, 1.0
        %860 = vmatpush.msra.mxu0 0.0
        %861 = vmatpush.msra.mxu0 0.0
        %862 = vmatpush.msra.mxu0 0.0
        %863 = vmatpush.msra.mxu0 0.0
        %864 = vmatpush.msra.mxu0 0.0
        %865 = vmatpush.msra.mxu0 0.0
        %866 = vmatpush.msra.mxu0 0.0
        %867 = vmatpush.msra.mxu0 0.0
        %868 = vmatpush.msra.mxu0 0.0
        %869 = vmatpush.msra.mxu0 0.0
        %870 = vmatpush.msra.mxu0 0.0
        %871 = vmatpush.msra.mxu0 0.0
        %872 = vmatpush.msra.mxu0 0.0
        %873 = vmatpush.msra.mxu0 0.0
        %874 = vmatpush.msra.mxu0 %v295
        %875 = vmatpush.msra.mxu0 %v294
        %876 = vmatmul.f32.gmra.mxu0 %v795
        %v877 = vpop.f32.mrf.mxu0
        %v878 = vadd.f32 0.0, %v877
        %879 = vmatmul.f32.gmra.mxu0 %v798
        %v880 = vpop.f32.mrf.mxu0
        %v881 = vadd.f32 0.0, %v880
        %882 = vdwg.mxu0
        %v883 = vmul.f32 %v267, 4.0
        %v884 = vmul.f32 %v268, 4.0
        %885 = vmatpush.msra.mxu0 0.0
        %886 = vmatpush.msra.mxu0 0.0
        %887 = vmatpush.msra.mxu0 0.0
        %888 = vmatpush.msra.mxu0 0.0
        %889 = vmatpush.msra.mxu0 0.0
        %890 = vmatpush.msra.mxu0 0.0
        %891 = vmatpush.msra.mxu0 0.0
        %892 = vmatpush.msra.mxu0 0.0
        %893 = vmatpush.msra.mxu0 0.0
        %894 = vmatpush.msra.mxu0 0.0
        %895 = vmatpush.msra.mxu0 0.0
        %896 = vmatpush.msra.mxu0 0.0
        %897 = vmatpush.msra.mxu0 0.0
        %898 = vmatpush.msra.mxu0 0.0
        %899 = vmatpush.msra.mxu0 %v881
        %900 = vmatpush.msra.mxu0 %v878
        %901 = vmatmul.f32.gmra.mxu0 %v652
        %v902 = vpop.f32.mrf.mxu0
        %v903 = vadd.f32 %v883, %v902
        %904 = vmatmul.f32.gmra.mxu0 %v655
        %v905 = vpop.f32.mrf.mxu0
        %v906 = vadd.f32 %v884, %v905
        %907 = vdwg.mxu0
        %v908 = vmul.f32 %v903, 0.07692308
        %v909 = vmul.f32 %v906, 0.07692308
        %v910 = vsub.f32 %v267, %v908
        %v911 = vsub.f32 %v268, %v909
        %v912 = vmul.f32 %v685, %v910
        %v913 = vmul.f32 %v685, %v911
        %v914 = vadd.f32 %v908, %v912
        %v915 = vadd.f32 %v909, %v913
        %v916 = vmax.f32 %v914, 0.0
        %v917 = vmax.f32 %v915, 0.0
        %v918 = vmin.f32 %v916, 1.0
        %v919 = vmin.f32 %v917, 1.0
        %v920 = vmul.f32 %v694, %v267
        %v921 = vmul.f32 %v694, %v268
        %v922 = vmul.f32 %v697, %v762
        %v923 = vmul.f32 %v697, %v763
        %v924 = vadd.f32 %v920, %v922
        %v925 = vadd.f32 %v921, %v923
        %v926 = vmul.f32 %v702, %v770
        %v927 = vmul.f32 %v702, %v771
        %v928 = vadd.f32 %v924, %v926
        %v929 = vadd.f32 %v925, %v927
        %v930 = vmul.f32 %v707, %v774
        %v931 = vmul.f32 %v707, %v775
        %v932 = vadd.f32 %v928, %v930
        %v933 = vadd.f32 %v929, %v931
        %v934 = vmul.f32 %v712, %v782
        %v935 = vmul.f32 %v712, %v783
        %v936 = vadd.f32 %v932, %v934
        %v937 = vadd.f32 %v933, %v935
        %v938 = vmul.f32 %v717, %v792
        %v939 = vmul.f32 %v717, %v793
        %v940 = vadd.f32 %v936, %v938
        %v941 = vadd.f32 %v937, %v939
        %v942 = vmul.f32 %v722, %v848
        %v943 = vmul.f32 %v722, %v849
        %v944 = vadd.f32 %v940, %v942
        %v945 = vadd.f32 %v941, %v943
        %v946 = vmul.f32 %v727, %v858
        %v947 = vmul.f32 %v727, %v859
        %v948 = vadd.f32 %v944, %v946
        %v949 = vadd.f32 %v945, %v947
        %v950 = vadd.f32 %v948, %v733
        %v951 = vadd.f32 %v949, %v734
        %v952 = vmul.f32 %v737, %v918
        %v953 = vmul.f32 %v737, %v919
        %v954 = vadd.f32 %v950, %v952
        %v955 = vadd.f32 %v951, %v953
        %vm956 = vcmp.eq.f32.partialorder %v954, %v954
        %vm957 = vcmp.eq.f32.partialorder %v955, %v955
        %v958 = vand.u32 2147483647, %v954
        %v959 = vand.u32 2147483647, %v955
        %vm960 = vcmp.le.f32.partialorder %v958, 3.4028235e+38
        %vm961 = vcmp.le.f32.partialorder %v959, 3.4028235e+38
        %vm962 = vmand %vm956, %vm960
        %vm963 = vmand %vm957, %vm961
        %v964 = vsel %vm962, %v954, 0.0
        %v965 = vsel %vm963, %v955, 0.0
        %v966 = vmax.f32 %v964, 0.0
        %v967 = vmax.f32 %v965, 0.0
        %v968 = vmin.f32 %v966, 1.0
        %v969 = vmin.f32 %v967, 1.0
        %s970 = scalar_lea.vmem %s258, 16 [#allocation5]
        %971 = vst.msk [vmem:[%s970] sm:$0xff] %vm310, %v968
        %972 = vst.msk [vmem:[%s970 + $0x8] sm:$0xff] %vm310, %v969
        %v973 = vmul.f32 %v270, %v507
        %v974 = vmul.f32 %v271, %v507
        %v975 = vmax.f32 %v973, 0.0
        %v976 = vmax.f32 %v974, 0.0
        %v977 = vmin.f32 %v975, 1.0
        %v978 = vmin.f32 %v976, 1.0
        %v979 = vmul.f32 %v270, %v514
        %v980 = vmul.f32 %v271, %v514
        %v981 = vadd.f32 %v979, %v519
        %v982 = vadd.f32 %v980, %v519
        %v983 = vmax.f32 %v981, 0.0
        %v984 = vmax.f32 %v982, 0.0
        %v985 = vmin.f32 %v983, 1.0
        %v986 = vmin.f32 %v984, 1.0
        %v987 = vmax.f32 %v505, 0.0
        %v988 = vmax.f32 %v506, 0.0
        %v989 = vmin.f32 %v987, 1.0
        %v990 = vmin.f32 %v988, 1.0
        %v991 = vmul.f32 %v270, %v530
        %v992 = vmul.f32 %v271, %v530
        %v993 = vadd.f32 %v991, %v535
        %v994 = vadd.f32 %v992, %v536
        %v995 = vmax.f32 %v993, 0.0
        %v996 = vmax.f32 %v994, 0.0
        %v997 = vmin.f32 %v995, 1.0
        %v998 = vmin.f32 %v996, 1.0
        %vm999 = vcmp.lt.f32.partialorder %v270, %v543
        %vm1000 = vcmp.lt.f32.partialorder %v271, %v543
        %v1001 = vsub.f32 1.0, %v270
        %v1002 = vsub.f32 1.0, %v271
        %v1003 = vsel %vm999, %v270, %v1001
        %v1004 = vsel %vm1000, %v271, %v1002
        %v1005 = vmax.f32 %v1003, 0.0
        %v1006 = vmax.f32 %v1004, 0.0
        %v1007 = vmin.f32 %v1005, 1.0
        %v1008 = vmin.f32 %v1006, 1.0
        %v1010 = vsel %vm310, %v270, 0
        %v1013 = vsel %vm310, %v271, 0
        %1015 = vmatpush.msra.mxu0 0.0
        %1016 = vmatpush.msra.mxu0 0.0
        %1017 = vmatpush.msra.mxu0 0.0
        %1018 = vmatpush.msra.mxu0 0.0
        %1019 = vmatpush.msra.mxu0 0.0
        %1020 = vmatpush.msra.mxu0 0.0
        %1021 = vmatpush.msra.mxu0 0.0
        %1022 = vmatpush.msra.mxu0 0.0
        %1023 = vmatpush.msra.mxu0 0.0
        %1024 = vmatpush.msra.mxu0 0.0
        %1025 = vmatpush.msra.mxu0 0.0
        %1026 = vmatpush.msra.mxu0 0.0
        %1027 = vmatpush.msra.mxu0 0.0
        %1028 = vmatpush.msra.mxu0 0.0
        %1029 = vmatpush.msra.mxu0 %v291
        %1030 = vmatpush.msra.mxu0 %v290
        %1031 = vmatmul.f32.gmra.mxu0 %v1010
        %v1032 = vpop.f32.mrf.mxu0
        %v1033 = vadd.f32 0.0, %v1032
        %1034 = vmatmul.f32.gmra.mxu0 %v1013
        %v1035 = vpop.f32.mrf.mxu0
        %v1036 = vadd.f32 0.0, %v1035
        %1037 = vdwg.mxu0
        %1038 = vmatpush.msra.mxu0 0.0
        %1039 = vmatpush.msra.mxu0 0.0
        %1040 = vmatpush.msra.mxu0 0.0
        %1041 = vmatpush.msra.mxu0 0.0
        %1042 = vmatpush.msra.mxu0 0.0
        %1043 = vmatpush.msra.mxu0 0.0
        %1044 = vmatpush.msra.mxu0 0.0
        %1045 = vmatpush.msra.mxu0 0.0
        %1046 = vmatpush.msra.mxu0 0.0
        %1047 = vmatpush.msra.mxu0 0.0
        %1048 = vmatpush.msra.mxu0 0.0
        %1049 = vmatpush.msra.mxu0 0.0
        %1050 = vmatpush.msra.mxu0 0.0
        %1051 = vmatpush.msra.mxu0 0.0
        %1052 = vmatpush.msra.mxu0 %v1036
        %1053 = vmatpush.msra.mxu0 %v1033
        %1054 = vmatmul.f32.gmra.mxu0 %v584
        %v1055 = vpop.f32.mrf.mxu0
        %v1056 = vadd.f32 0.0, %v1055
        %1057 = vmatmul.f32.gmra.mxu0 %v587
        %v1058 = vpop.f32.mrf.mxu0
        %v1059 = vadd.f32 0.0, %v1058
        %1060 = vdwg.mxu0
        %v1061 = vmax.f32 %v1056, 0.0
        %v1062 = vmax.f32 %v1059, 0.0
        %v1063 = vmin.f32 %v1061, 1.0
        %v1064 = vmin.f32 %v1062, 1.0
        %v1065 = vmul.f32 %v270, 255.0
        %v1066 = vmul.f32 %v271, 255.0
        %v1067 = vfloor.f32 %v1065
        %v1068 = vfloor.f32 %v1066
        %v1069 = vmul.f32 %v1067, 0.003921569
        %v1070 = vmul.f32 %v1068, 0.003921569
        %v1071 = vmax.f32 %v1069, 0.0
        %v1072 = vmax.f32 %v1070, 0.0
        %v1073 = vmin.f32 %v1071, 1.0
        %v1074 = vmin.f32 %v1072, 1.0
        %1075 = vmatpush.msra.mxu0 0.0
        %1076 = vmatpush.msra.mxu0 0.0
        %1077 = vmatpush.msra.mxu0 0.0
        %1078 = vmatpush.msra.mxu0 0.0
        %1079 = vmatpush.msra.mxu0 0.0
        %1080 = vmatpush.msra.mxu0 0.0
        %1081 = vmatpush.msra.mxu0 0.0
        %1082 = vmatpush.msra.mxu0 0.0
        %1083 = vmatpush.msra.mxu0 0.0
        %1084 = vmatpush.msra.mxu0 0.0
        %1085 = vmatpush.msra.mxu0 0.0
        %1086 = vmatpush.msra.mxu0 0.0
        %1087 = vmatpush.msra.mxu0 0.0
        %1088 = vmatpush.msra.mxu0 0.0
        %1089 = vmatpush.msra.mxu0 %v295
        %1090 = vmatpush.msra.mxu0 %v294
        %1091 = vmatmul.f32.gmra.mxu0 %v1010
        %v1092 = vpop.f32.mrf.mxu0
        %v1093 = vadd.f32 0.0, %v1092
        %1094 = vmatmul.f32.gmra.mxu0 %v1013
        %v1095 = vpop.f32.mrf.mxu0
        %v1096 = vadd.f32 0.0, %v1095
        %1097 = vdwg.mxu0
        %v1098 = vmul.f32 %v270, 4.0
        %v1099 = vmul.f32 %v271, 4.0
        %1100 = vmatpush.msra.mxu0 0.0
        %1101 = vmatpush.msra.mxu0 0.0
        %1102 = vmatpush.msra.mxu0 0.0
        %1103 = vmatpush.msra.mxu0 0.0
        %1104 = vmatpush.msra.mxu0 0.0
        %1105 = vmatpush.msra.mxu0 0.0
        %1106 = vmatpush.msra.mxu0 0.0
        %1107 = vmatpush.msra.mxu0 0.0
        %1108 = vmatpush.msra.mxu0 0.0
        %1109 = vmatpush.msra.mxu0 0.0
        %1110 = vmatpush.msra.mxu0 0.0
        %1111 = vmatpush.msra.mxu0 0.0
        %1112 = vmatpush.msra.mxu0 0.0
        %1113 = vmatpush.msra.mxu0 0.0
        %1114 = vmatpush.msra.mxu0 %v1096
        %1115 = vmatpush.msra.mxu0 %v1093
        %1116 = vmatmul.f32.gmra.mxu0 %v652
        %v1117 = vpop.f32.mrf.mxu0
        %v1118 = vadd.f32 %v1098, %v1117
        %1119 = vmatmul.f32.gmra.mxu0 %v655
        %v1120 = vpop.f32.mrf.mxu0
        %v1121 = vadd.f32 %v1099, %v1120
        %1122 = vdwg.mxu0
        %v1123 = vmul.f32 %v1118, 0.07692308
        %v1124 = vmul.f32 %v1121, 0.07692308
        %v1125 = vsub.f32 %v270, %v1123
        %v1126 = vsub.f32 %v271, %v1124
        %v1127 = vmul.f32 %v685, %v1125
        %v1128 = vmul.f32 %v685, %v1126
        %v1129 = vadd.f32 %v1123, %v1127
        %v1130 = vadd.f32 %v1124, %v1128
        %v1131 = vmax.f32 %v1129, 0.0
        %v1132 = vmax.f32 %v1130, 0.0
        %v1133 = vmin.f32 %v1131, 1.0
        %v1134 = vmin.f32 %v1132, 1.0
        %v1135 = vmul.f32 %v694, %v270
        %v1136 = vmul.f32 %v694, %v271
        %v1137 = vmul.f32 %v697, %v977
        %v1138 = vmul.f32 %v697, %v978
        %v1139 = vadd.f32 %v1135, %v1137
        %v1140 = vadd.f32 %v1136, %v1138
        %v1141 = vmul.f32 %v702, %v985
        %v1142 = vmul.f32 %v702, %v986
        %v1143 = vadd.f32 %v1139, %v1141
        %v1144 = vadd.f32 %v1140, %v1142
        %v1145 = vmul.f32 %v707, %v989
        %v1146 = vmul.f32 %v707, %v990
        %v1147 = vadd.f32 %v1143, %v1145
        %v1148 = vadd.f32 %v1144, %v1146
        %v1149 = vmul.f32 %v712, %v997
        %v1150 = vmul.f32 %v712, %v998
        %v1151 = vadd.f32 %v1147, %v1149
        %v1152 = vadd.f32 %v1148, %v1150
        %v1153 = vmul.f32 %v717, %v1007
        %v1154 = vmul.f32 %v717, %v1008
        %v1155 = vadd.f32 %v1151, %v1153
        %v1156 = vadd.f32 %v1152, %v1154
        %v1157 = vmul.f32 %v722, %v1063
        %v1158 = vmul.f32 %v722, %v1064
        %v1159 = vadd.f32 %v1155, %v1157
        %v1160 = vadd.f32 %v1156, %v1158
        %v1161 = vmul.f32 %v727, %v1073
        %v1162 = vmul.f32 %v727, %v1074
        %v1163 = vadd.f32 %v1159, %v1161
        %v1164 = vadd.f32 %v1160, %v1162
        %v1165 = vadd.f32 %v1163, %v733
        %v1166 = vadd.f32 %v1164, %v734
        %v1167 = vmul.f32 %v737, %v1133
        %v1168 = vmul.f32 %v737, %v1134
        %v1169 = vadd.f32 %v1165, %v1167
        %v1170 = vadd.f32 %v1166, %v1168
        %vm1171 = vcmp.eq.f32.partialorder %v1169, %v1169
        %vm1172 = vcmp.eq.f32.partialorder %v1170, %v1170
        %v1173 = vand.u32 2147483647, %v1169
        %v1174 = vand.u32 2147483647, %v1170
        %vm1175 = vcmp.le.f32.partialorder %v1173, 3.4028235e+38
        %vm1176 = vcmp.le.f32.partialorder %v1174, 3.4028235e+38
        %vm1177 = vmand %vm1171, %vm1175
        %vm1178 = vmand %vm1172, %vm1176
        %v1179 = vsel %vm1177, %v1169, 0.0
        %v1180 = vsel %vm1178, %v1170, 0.0
        %v1181 = vmax.f32 %v1179, 0.0
        %v1182 = vmax.f32 %v1180, 0.0
        %v1183 = vmin.f32 %v1181, 1.0
        %v1184 = vmin.f32 %v1182, 1.0
        %s1185 = scalar_lea.vmem %s258, 32 [#allocation5]
        %1186 = vst.msk [vmem:[%s1185] sm:$0xff] %vm310, %v1183
        %1187 = vst.msk [vmem:[%s1185 + $0x8] sm:$0xff] %vm310, %v1184
        %s1188 = sand.u32 %s160, 1
        %s1189 = scalar_lea.sflag [#allocation3], %s1188
        %s1190 = sand.u32 %s160, 1
        %s1191 = smul.addr %s1190, 48
        %s1192 = scalar_lea.vmem [#allocation5], %s1191
        // Predicated region
        $region49: #{aug_policy_forward.3} parent=43 // pred_check
          %p1193 = pneg %p170
        $region50: #{aug_policy_forward.3} parent=43 // pred_check_branch
          %1195 = sbr.rel (%p1193) target = $region52
        $region51: #{aug_policy_forward.3} parent=43 // pred_region
          %1197 = vsyncadd %s1189, 0
          %s1198 = smul.addr %s21, 6
          %s1199 = smul.addr %s1198, 8
          %s1200 = scalar_lea.hbm %s6, %s1199
          %s1201 = sshll.u32 %s1192, 4
          %s1202 = int_to_ptr.vmem [resolvable:$true] %s1201
          %s1203 = sshll.u32 %s1200, 4
          %s1204 = int_to_ptr.hbm [resolvable:$true] %s1203
          %1209 = dma.vmem_to_hbm [thread:$0]  %s1202, 768, %s1204, %s1189, 128, 128, 8
        $region52: #{aug_policy_forward.3} parent=43 // pred_fallthru
          _
      $region44: #{aug_policy_forward.3} parent=5 // pred_fallthru
        _
      %p1210 = scmp.le.s32.totalorder 2, %s16
      // Predicated region
      $region53: #{aug_policy_forward.3} parent=5 // pred_check
        %p1211 = pneg %p1210
      $region54: #{aug_policy_forward.3} parent=5 // pred_check_branch
        %1213 = sbr.rel (%p1211) target = $region56
      $region55: #{aug_policy_forward.3} parent=5 // pred_region
        %s1214 = ssub.s32 %s16, 2
        // Predicated region
        $region57: #{aug_policy_forward.3} parent=55 // pred_check
          %p1215 = pneg %p176
        $region58: #{aug_policy_forward.3} parent=55 // pred_check_branch
          %1217 = sbr.rel (%p1215) target = $region60
        $region59: #{aug_policy_forward.3} parent=55 // pred_region
          %s1218 = sand.u32 %s161, 1
          %s1219 = scalar_lea.sflag [#allocation3], %s1218
          %s1220 = sand.u32 %s161, 1
          %s1221 = smul.addr %s1220, 48
          %s1222 = scalar_lea.vmem [#allocation5], %s1221
          %1224 = dma.done %s1219, 768
        $region60: #{aug_policy_forward.3} parent=55 // pred_fallthru
          _
      $region56: #{aug_policy_forward.3} parent=5 // pred_fallthru
        _
    $region6: #{aug_policy_forward.3} parent=1 // loop_footer
      %s20 = sadd.s32 1, %s16
    $region7: #{aug_policy_forward.3} parent=1 // loop_footer_branch
      %15 = sbr.rel target = $region3
    $region8: #{aug_policy_forward.3} parent=1 // loop_exit
      _
    %1225 = vsyncpa [#allocation3], 1
    %s1226 = scalar_lea.sflag [#allocation3], 1
    %1227 = vsyncpa %s1226, 1
    %1228 = vsyncpa [#allocation4], 1
    %s1229 = scalar_lea.sflag [#allocation4], 1
    %1230 = vsyncpa %s1229, 1

</llo_original>
